<compile_context>
chip_gen: v6e
topology: v6e:2x2x1
jax: 0.10.0
libtpu: 0.0.40
codegen_flags: <defaults>
</compile_context>

<pallas_src>
import functools
from typing import NamedTuple

import jax
import jax.numpy as jnp
import numpy as np
from jax import lax
from jax.experimental import pallas as pl
from jax.experimental.pallas import tpu as pltpu

KW = 4            # Conv2d kernel size used throughout the module
PAD = 2           # int(np.ceil((KW - 1) / 2))
NEG_SLOPE = 0.2   # LeakyReLU negative slope


class LayerGeom(NamedTuple):
    Hi: int      # input spatial height (unpadded)
    Wi: int      # input spatial width  (unpadded)
    Ci: int      # input channels
    Co: int      # output channels
    Hp: int      # padded input height  (Hi + 2*PAD)
    Wp: int      # padded input width   (Wi + 2*PAD)
    Hf: int      # stride-1 output rows (Hp - KW + 1)
    Ho: int      # output height
    Wo: int      # output width
    stride: int
    act: bool    # apply LeakyReLU(0.2)


# ---------------------------------------------------------------------------
# Fused kernel: entire network for one batch sample, everything in VMEM.
# ---------------------------------------------------------------------------
def _discriminator_kernel(*refs, geom):
    n = len(geom)
    x_ref = refs[0]
    w_refs = [refs[1 + 2 * i] for i in range(n)]   # (KW, Wp*Ci, Wo*Co)  bf16
    b_refs = [refs[2 + 2 * i] for i in range(n)]   # (1, Wo*Co)          f32
    o_ref = refs[1 + 2 * n]                        # (Ho_last, Wo_last*Co_last)
    a_refs = list(refs[2 + 2 * n:])                # padded activation scratch

    # Zero the padded activation buffers (the padding ring must be 0).
    for a in a_refs:
        a[...] = jnp.zeros_like(a)

    # Place the input image in the interior of layer 0's padded buffer.
    g0 = geom[0]
    a_refs[0][pl.ds(PAD, g0.Hi), pl.ds(PAD * g0.Ci, g0.Wi * g0.Ci)] = (
        x_ref[...].astype(a_refs[0].dtype))

    for i, g in enumerate(geom):
        xp = a_refs[i]

        # Stride-1 conv over rows = KW dense MXU matmuls against block-Toeplitz
        # weights (W-offsets, W-stride and BN scale already folded into columns).
        acc = None
        for dh in range(KW):
            rows = xp[pl.ds(dh, g.Hf), :]          # (Hf, Wp*Ci), contiguous
            part = jnp.dot(rows, w_refs[i][dh],
                           preferred_element_type=jnp.float32)
            acc = part if acc is None else acc + part

        # H-stride: keep every stride-th row via a tiny constant 0/1 matmul
        # (stays on the MXU; avoids strided slicing of packed bf16 sublanes).
        if g.stride != 1:
            r = lax.broadcasted_iota(jnp.int32, (g.Ho, g.Hf), 0)
            c = lax.broadcasted_iota(jnp.int32, (g.Ho, g.Hf), 1)
            sel = jnp.where(c == g.stride * r, 1.0, 0.0).astype(jnp.float32)
            acc = jnp.dot(sel, acc, preferred_element_type=jnp.float32)

        # f32 epilogue: folded conv-bias / BatchNorm shift (+ LeakyReLU).
        y = acc + b_refs[i][...]
        if g.act:
            y = jnp.where(y >= 0, y, NEG_SLOPE * y)

        if i + 1 < n:
            gn = geom[i + 1]
            a_refs[i + 1][pl.ds(PAD, g.Ho), pl.ds(PAD * gn.Ci, g.Wo * gn.Ci)] = (
                y.astype(a_refs[i + 1].dtype))
        else:
            o_ref[...] = y.astype(o_ref.dtype)


# ---------------------------------------------------------------------------
# Parameter construction (mirrors NLayerDiscriminator.__init__ defaults).
# ---------------------------------------------------------------------------
def _layer_configs(input_nc, ndf, n_layers):
    cfgs = [(input_nc, ndf, 2, False, True)]       # (cin, cout, stride, bn, act)
    nf = ndf
    for _ in range(1, n_layers):
        nf_prev, nf = nf, min(nf * 2, 512)
        cfgs.append((nf_prev, nf, 2, True, True))
    nf_prev, nf = nf, min(nf * 2, 512)
    cfgs.append((nf_prev, nf, 1, True, True))
    cfgs.append((nf, 1, 1, False, False))          # final conv, no norm / act
    return cfgs


def init_params(key, input_nc=3, ndf=8, n_layers=3):
    """PyTorch-default Conv2d init + eval-mode BatchNorm (default stats) folding."""
    eps = 1e-5
    params = []
    for (cin, cout, stride, has_bn, has_act) in _layer_configs(input_nc, ndf, n_layers):
        key, k1, k2 = jax.random.split(key, 3)
        fan_in = cin * KW * KW
        bound = 1.0 / np.sqrt(fan_in)
        w = jax.random.uniform(k1, (KW, KW, cin, cout), jnp.float32, -bound, bound)
        b = jax.random.uniform(k2, (cout,), jnp.float32, -bound, bound)
        if has_bn:
            gamma = jnp.ones((cout,), jnp.float32)
            beta = jnp.zeros((cout,), jnp.float32)
            rmean = jnp.zeros((cout,), jnp.float32)
            rvar = jnp.ones((cout,), jnp.float32)
            scale = gamma / jnp.sqrt(rvar + eps)
            shift = beta + scale * (b - rmean)
        else:
            scale = jnp.ones((cout,), jnp.float32)
            shift = b
        params.append(dict(w=w, scale=scale, shift=shift, stride=stride, act=has_act))
    return params


def pack_params(params, input_hw):
    """Repack conv weights into block-Toeplitz matrices (W-stride + BN scale
    folded in), per-layer shift rows, and static per-layer geometry."""
    Hi, Wi = input_hw
    geom, w_mats, shift_rows = [], [], []
    for layer in params:
        w = np.asarray(layer["w"], np.float32)                  # (KW, KW, Ci, Co)
        scale = np.asarray(layer["scale"], np.float32).reshape(-1)
        shift = np.asarray(layer["shift"], np.float32).reshape(-1)
        s = int(layer["stride"])
        _, _, Ci, Co = w.shape
        Hp, Wp = Hi + 2 * PAD, Wi + 2 * PAD
        Ho = (Hi + 2 * PAD - KW) // s + 1
        Wo = (Wi + 2 * PAD - KW) // s + 1
        Hf = Hp - KW + 1

        ws = w * scale[None, None, None, :]                     # fold BN/bias scale
        wt = np.zeros((KW, Wp * Ci, Wo * Co), np.float32)       # block-Toeplitz
        for dh in range(KW):
            for dw in range(KW):
                for wo in range(Wo):
                    c0 = (s * wo + dw) * Ci
                    wt[dh, c0:c0 + Ci, wo * Co:(wo + 1) * Co] = ws[dh, dw]

        w_mats.append(jnp.asarray(wt, jnp.bfloat16))
        shift_rows.append(jnp.asarray(np.tile(shift, Wo)[None, :], jnp.float32))
        geom.append(LayerGeom(Hi, Wi, Ci, Co, Hp, Wp, Hf, Ho, Wo, s,
                              bool(layer["act"])))
        Hi, Wi = Ho, Wo
    return tuple(geom), tuple(w_mats), tuple(shift_rows)


# ---------------------------------------------------------------------------
# Forward pass (single pallas_call).
# ---------------------------------------------------------------------------
@functools.partial(jax.jit, static_argnames=("geom",))
def _forward(x_nchw, w_mats, shift_rows, *, geom):
    n = x_nchw.shape[0]
    g0, gl = geom[0], geom[-1]

    # NCHW -> NHWC -> (N, H, W*C): channels minor on the flattened lane axis.
    x = jnp.transpose(x_nchw, (0, 2, 3, 1)).reshape(n, g0.Hi, g0.Wi * g0.Ci)
    x = x.astype(jnp.bfloat16)

    in_specs = [pl.BlockSpec((None, g0.Hi, g0.Wi * g0.Ci), lambda b: (b, 0, 0))]
    args = [x]
    for wm, sr in zip(w_mats, shift_rows):
        in_specs.append(pl.BlockSpec(wm.shape, lambda b: (0, 0, 0)))
        in_specs.append(pl.BlockSpec(sr.shape, lambda b: (0, 0)))
        args.extend([wm, sr])

    out = pl.pallas_call(
        functools.partial(_discriminator_kernel, geom=geom),
        out_shape=jax.ShapeDtypeStruct((n, gl.Ho, gl.Wo * gl.Co), jnp.float32),
        grid_spec=pltpu.PrefetchScalarGridSpec(
            num_scalar_prefetch=0,
            grid=(n,),
            in_specs=in_specs,
            out_specs=pl.BlockSpec((None, gl.Ho, gl.Wo * gl.Co),
                                   lambda b: (b, 0, 0)),
            scratch_shapes=[pltpu.VMEM((g.Hp, g.Wp * g.Ci), jnp.bfloat16)
                            for g in geom],
        ),
        compiler_params=pltpu.CompilerParams(
            dimension_semantics=("parallel",),
            vmem_limit_bytes=32 * 1024 * 1024,
        ),
    )(*args)

    # (N, Ho, Wo*Co) -> NCHW
    return jnp.transpose(out.reshape(n, gl.Ho, gl.Wo, gl.Co), (0, 3, 1, 2))


def nlayer_discriminator_forward(x_nchw, packed):
    geom, w_mats, shift_rows = packed
    return _forward(x_nchw, w_mats, shift_rows, geom=geom)


# ---------------------------------------------------------------------------
# Pure-JAX reference (f32) for a correctness check.
# ---------------------------------------------------------------------------
def _reference_forward(x_nchw, params):
    x = jnp.transpose(x_nchw, (0, 2, 3, 1))
    for layer in params:
        s = int(layer["stride"])
        y = lax.conv_general_dilated(
            x, layer["w"], window_strides=(s, s),
            padding=[(PAD, PAD), (PAD, PAD)],
            dimension_numbers=("NHWC", "HWIO", "NHWC"))
        y = y * layer["scale"] + layer["shift"]
        if layer["act"]:
            y = jnp.where(y >= 0, y, NEG_SLOPE * y)
        x = y
    return jnp.transpose(x, (0, 3, 1, 2))


if __name__ == "__main__":
    key = jax.random.PRNGKey(0)
    kp, kx = jax.random.split(key)

    # Small but consistent shapes: batch=2, input_nc=3, 16x16 spatial, ndf=8.
    params = init_params(kp, input_nc=3, ndf=8, n_layers=3)
    x = jax.random.normal(kx, (2, 3, 16, 16), dtype=jnp.float32)

    packed = pack_params(params, (16, 16))
    out = nlayer_discriminator_forward(x, packed)
    out = jax.block_until_ready(out)

    # Expected PatchGAN output: (2, 1, 5, 5) for 16x16 input, n_layers=3.
    assert out.shape == (2, 1, 5, 5), out.shape
    assert bool(jnp.all(jnp.isfinite(out)))

    # Check against the f32 pure-JAX reference (bf16 MXU inputs -> loose tol).
    ref = jax.block_until_ready(_reference_forward(x, params))
    np.testing.assert_allclose(np.asarray(out), np.asarray(ref),
                               rtol=5e-2, atol=5e-2)
    print("KERNEL_OK")
</pallas_src>

<mosaic_0001>
module attributes {stable_mosaic.version = 11 : i64} {
  func.func @_discriminator_kernel(%arg0: i32, %arg1: memref<1x16x48xbf16, #tpu.memory_space<vmem>>, %arg2: memref<4x60x72xbf16, #tpu.memory_space<vmem>>, %arg3: memref<1x72xf32, #tpu.memory_space<vmem>>, %arg4: memref<4x104x80xbf16, #tpu.memory_space<vmem>>, %arg5: memref<1x80xf32, #tpu.memory_space<vmem>>, %arg6: memref<4x144x96xbf16, #tpu.memory_space<vmem>>, %arg7: memref<1x96xf32, #tpu.memory_space<vmem>>, %arg8: memref<4x224x256xbf16, #tpu.memory_space<vmem>>, %arg9: memref<1x256xf32, #tpu.memory_space<vmem>>, %arg10: memref<4x512x5xbf16, #tpu.memory_space<vmem>>, %arg11: memref<1x5xf32, #tpu.memory_space<vmem>>, %arg12: memref<1x5x5xf32, #tpu.memory_space<vmem>>, %arg13: memref<20x60xbf16, #tpu.memory_space<vmem>>, %arg14: memref<13x104xbf16, #tpu.memory_space<vmem>>, %arg15: memref<9x144xbf16, #tpu.memory_space<vmem>>, %arg16: memref<7x224xbf16, #tpu.memory_space<vmem>>, %arg17: memref<8x512xbf16, #tpu.memory_space<vmem>>) attributes {dimension_semantics = [#tpu.dimension_semantics<parallel>], iteration_bounds = array<i64: 2>, scalar_prefetch = 0 : i64, scratch_operands = 5 : i64, tpu.core_type = #tpu.core_type<tc>, window_params = [{transform_indices = @transform_0, window_bounds = array<i64: 1, 16, 48>}, {pipeline_mode = #tpu.pipeline_mode<synchronous>, transform_indices = @transform_1, window_bounds = array<i64: 4, 60, 72>}, {pipeline_mode = #tpu.pipeline_mode<synchronous>, transform_indices = @transform_2, window_bounds = array<i64: 1, 72>}, {pipeline_mode = #tpu.pipeline_mode<synchronous>, transform_indices = @transform_3, window_bounds = array<i64: 4, 104, 80>}, {pipeline_mode = #tpu.pipeline_mode<synchronous>, transform_indices = @transform_4, window_bounds = array<i64: 1, 80>}, {pipeline_mode = #tpu.pipeline_mode<synchronous>, transform_indices = @transform_5, window_bounds = array<i64: 4, 144, 96>}, {pipeline_mode = #tpu.pipeline_mode<synchronous>, transform_indices = @transform_6, window_bounds = array<i64: 1, 96>}, {pipeline_mode = #tpu.pipeline_mode<synchronous>, transform_indices = @transform_7, window_bounds = array<i64: 4, 224, 256>}, {pipeline_mode = #tpu.pipeline_mode<synchronous>, transform_indices = @transform_8, window_bounds = array<i64: 1, 256>}, {pipeline_mode = #tpu.pipeline_mode<synchronous>, transform_indices = @transform_9, window_bounds = array<i64: 4, 512, 5>}, {pipeline_mode = #tpu.pipeline_mode<synchronous>, transform_indices = @transform_10, window_bounds = array<i64: 1, 5>}, {transform_indices = @transform_11, window_bounds = array<i64: 1, 5, 5>}]} {
    %cst = arith.constant 0.000000e+00 : bf16
    %0 = vector.broadcast %cst : bf16 to vector<20x60xbf16>
    %c0 = arith.constant 0 : index
    %c0_0 = arith.constant 0 : index
    %1 = vector.load %arg13[%c0, %c0_0] : memref<20x60xbf16, #tpu.memory_space<vmem>>, vector<20x60xbf16>
    tpu.vector_store %arg13[%c0, %c0_0], %0 {strides = array<i32>} : memref<20x60xbf16, #tpu.memory_space<vmem>>, vector<20x60xbf16>,
    %cst_1 = arith.constant 0.000000e+00 : bf16
    %2 = vector.broadcast %cst_1 : bf16 to vector<13x104xbf16>
    %c0_2 = arith.constant 0 : index
    %c0_3 = arith.constant 0 : index
    %3 = vector.load %arg14[%c0_2, %c0_3] : memref<13x104xbf16, #tpu.memory_space<vmem>>, vector<13x104xbf16>
    tpu.vector_store %arg14[%c0_2, %c0_3], %2 {strides = array<i32>} : memref<13x104xbf16, #tpu.memory_space<vmem>>, vector<13x104xbf16>,
    %cst_4 = arith.constant 0.000000e+00 : bf16
    %4 = vector.broadcast %cst_4 : bf16 to vector<9x144xbf16>
    %c0_5 = arith.constant 0 : index
    %c0_6 = arith.constant 0 : index
    %5 = vector.load %arg15[%c0_5, %c0_6] : memref<9x144xbf16, #tpu.memory_space<vmem>>, vector<9x144xbf16>
    tpu.vector_store %arg15[%c0_5, %c0_6], %4 {strides = array<i32>} : memref<9x144xbf16, #tpu.memory_space<vmem>>, vector<9x144xbf16>,
    %cst_7 = arith.constant 0.000000e+00 : bf16
    %6 = vector.broadcast %cst_7 : bf16 to vector<7x224xbf16>
    %c0_8 = arith.constant 0 : index
    %c0_9 = arith.constant 0 : index
    %7 = vector.load %arg16[%c0_8, %c0_9] : memref<7x224xbf16, #tpu.memory_space<vmem>>, vector<7x224xbf16>
    tpu.vector_store %arg16[%c0_8, %c0_9], %6 {strides = array<i32>} : memref<7x224xbf16, #tpu.memory_space<vmem>>, vector<7x224xbf16>,
    %cst_10 = arith.constant 0.000000e+00 : bf16
    %8 = vector.broadcast %cst_10 : bf16 to vector<8x512xbf16>
    %c0_11 = arith.constant 0 : index
    %c0_12 = arith.constant 0 : index
    %9 = vector.load %arg17[%c0_11, %c0_12] : memref<8x512xbf16, #tpu.memory_space<vmem>>, vector<8x512xbf16>
    tpu.vector_store %arg17[%c0_11, %c0_12], %8 {strides = array<i32>} : memref<8x512xbf16, #tpu.memory_space<vmem>>, vector<8x512xbf16>,
    %c0_13 = arith.constant 0 : index
    %c0_14 = arith.constant 0 : index
    %c0_15 = arith.constant 0 : index
    %10 = vector.load %arg1[%c0_13, %c0_14, %c0_15] : memref<1x16x48xbf16, #tpu.memory_space<vmem>>, vector<1x16x48xbf16>
    %11 = vector.shape_cast %10 : vector<1x16x48xbf16> to vector<16x48xbf16>
    %c2 = arith.constant 2 : index
    %c6 = arith.constant 6 : index
    %12 = vector.load %arg13[%c2, %c6] : memref<20x60xbf16, #tpu.memory_space<vmem>>, vector<16x48xbf16>
    tpu.vector_store %arg13[%c2, %c6], %11 {strides = array<i32>} : memref<20x60xbf16, #tpu.memory_space<vmem>>, vector<16x48xbf16>,
    %c0_16 = arith.constant 0 : index
    %c0_17 = arith.constant 0 : index
    %13 = vector.load %arg13[%c0_16, %c0_17] : memref<20x60xbf16, #tpu.memory_space<vmem>>, vector<17x60xbf16>
    %c0_18 = arith.constant 0 : index
    %c0_19 = arith.constant 0 : index
    %c0_20 = arith.constant 0 : index
    %14 = vector.load %arg2[%c0_18, %c0_19, %c0_20] : memref<4x60x72xbf16, #tpu.memory_space<vmem>>, vector<1x60x72xbf16>
    %15 = vector.shape_cast %14 : vector<1x60x72xbf16> to vector<60x72xbf16>
    %cst_21 = arith.constant dense<0.000000e+00> : vector<17x72xf32>
    %16 = tpu.matmul %13, %15, %cst_21 {dimension_numbers = #tpu.dot_dimension_numbers<[1], [0], [0], [1], [0, 0, 1, 1], [], []>} : vector<17x60xbf16>, vector<60x72xbf16>, vector<17x72xf32> -> vector<17x72xf32>
    %c1 = arith.constant 1 : index
    %c0_22 = arith.constant 0 : index
    %17 = vector.load %arg13[%c1, %c0_22] : memref<20x60xbf16, #tpu.memory_space<vmem>>, vector<17x60xbf16>
    %c1_23 = arith.constant 1 : index
    %c0_24 = arith.constant 0 : index
    %c0_25 = arith.constant 0 : index
    %18 = vector.load %arg2[%c1_23, %c0_24, %c0_25] : memref<4x60x72xbf16, #tpu.memory_space<vmem>>, vector<1x60x72xbf16>
    %19 = vector.shape_cast %18 : vector<1x60x72xbf16> to vector<60x72xbf16>
    %cst_26 = arith.constant dense<0.000000e+00> : vector<17x72xf32>
    %20 = tpu.matmul %17, %19, %cst_26 {dimension_numbers = #tpu.dot_dimension_numbers<[1], [0], [0], [1], [0, 0, 1, 1], [], []>} : vector<17x60xbf16>, vector<60x72xbf16>, vector<17x72xf32> -> vector<17x72xf32>
    %21 = arith.addf %16, %20 : vector<17x72xf32>
    %c2_27 = arith.constant 2 : index
    %c0_28 = arith.constant 0 : index
    %22 = vector.load %arg13[%c2_27, %c0_28] : memref<20x60xbf16, #tpu.memory_space<vmem>>, vector<17x60xbf16>
    %c2_29 = arith.constant 2 : index
    %c0_30 = arith.constant 0 : index
    %c0_31 = arith.constant 0 : index
    %23 = vector.load %arg2[%c2_29, %c0_30, %c0_31] : memref<4x60x72xbf16, #tpu.memory_space<vmem>>, vector<1x60x72xbf16>
    %24 = vector.shape_cast %23 : vector<1x60x72xbf16> to vector<60x72xbf16>
    %cst_32 = arith.constant dense<0.000000e+00> : vector<17x72xf32>
    %25 = tpu.matmul %22, %24, %cst_32 {dimension_numbers = #tpu.dot_dimension_numbers<[1], [0], [0], [1], [0, 0, 1, 1], [], []>} : vector<17x60xbf16>, vector<60x72xbf16>, vector<17x72xf32> -> vector<17x72xf32>
    %26 = arith.addf %21, %25 : vector<17x72xf32>
    %c3 = arith.constant 3 : index
    %c0_33 = arith.constant 0 : index
    %27 = vector.load %arg13[%c3, %c0_33] : memref<20x60xbf16, #tpu.memory_space<vmem>>, vector<17x60xbf16>
    %c3_34 = arith.constant 3 : index
    %c0_35 = arith.constant 0 : index
    %c0_36 = arith.constant 0 : index
    %28 = vector.load %arg2[%c3_34, %c0_35, %c0_36] : memref<4x60x72xbf16, #tpu.memory_space<vmem>>, vector<1x60x72xbf16>
    %29 = vector.shape_cast %28 : vector<1x60x72xbf16> to vector<60x72xbf16>
    %cst_37 = arith.constant dense<0.000000e+00> : vector<17x72xf32>
    %30 = tpu.matmul %27, %29, %cst_37 {dimension_numbers = #tpu.dot_dimension_numbers<[1], [0], [0], [1], [0, 0, 1, 1], [], []>} : vector<17x60xbf16>, vector<60x72xbf16>, vector<17x72xf32> -> vector<17x72xf32>
    %31 = arith.addf %26, %30 : vector<17x72xf32>
    %32 = tpu.iota {dimensions = array<i32: 0>} : vector<9x17xi32>
    %33 = tpu.iota {dimensions = array<i32: 1>} : vector<9x17xi32>
    %c2_i32 = arith.constant 2 : i32
    %34 = vector.broadcast %c2_i32 : i32 to vector<9x17xi32>
    %35 = arith.muli %34, %32 : vector<9x17xi32>
    %36 = arith.cmpi eq, %33, %35 : vector<9x17xi32>
    %cst_38 = arith.constant 1.000000e+00 : f32
    %cst_39 = arith.constant 0.000000e+00 : f32
    %37 = vector.broadcast %cst_38 : f32 to vector<9x17xf32>
    %38 = vector.broadcast %cst_39 : f32 to vector<9x17xf32>
    %39 = arith.select %36, %37, %38 : vector<9x17xi1>, vector<9x17xf32>
    %cst_40 = arith.constant dense<0.000000e+00> : vector<9x72xf32>
    %40 = tpu.matmul %39, %31, %cst_40 {dimension_numbers = #tpu.dot_dimension_numbers<[1], [0], [0], [1], [0, 0, 1, 1], [], []>} : vector<9x17xf32>, vector<17x72xf32>, vector<9x72xf32> -> vector<9x72xf32>
    %c0_41 = arith.constant 0 : index
    %c0_42 = arith.constant 0 : index
    %41 = vector.load %arg3[%c0_41, %c0_42] : memref<1x72xf32, #tpu.memory_space<vmem>>, vector<1x72xf32>
    %42 = vector.broadcast %41 : vector<1x72xf32> to vector<9x72xf32>
    %43 = arith.addf %40, %42 : vector<9x72xf32>
    %cst_43 = arith.constant 0.000000e+00 : f32
    %44 = vector.broadcast %cst_43 : f32 to vector<9x72xf32>
    %45 = arith.cmpf oge, %43, %44 : vector<9x72xf32>
    %cst_44 = arith.constant 2.000000e-01 : f32
    %46 = vector.broadcast %cst_44 : f32 to vector<9x72xf32>
    %47 = arith.mulf %46, %43 : vector<9x72xf32>
    %48 = arith.select %45, %43, %47 : vector<9x72xi1>, vector<9x72xf32>
    %49 = arith.truncf %48 : vector<9x72xf32> to vector<9x72xbf16>
    %c2_45 = arith.constant 2 : index
    %c16 = arith.constant 16 : index
    %50 = vector.load %arg14[%c2_45, %c16] : memref<13x104xbf16, #tpu.memory_space<vmem>>, vector<9x72xbf16>
    tpu.vector_store %arg14[%c2_45, %c16], %49 {strides = array<i32>} : memref<13x104xbf16, #tpu.memory_space<vmem>>, vector<9x72xbf16>,
    %c0_46 = arith.constant 0 : index
    %c0_47 = arith.constant 0 : index
    %51 = vector.load %arg14[%c0_46, %c0_47] : memref<13x104xbf16, #tpu.memory_space<vmem>>, vector<10x104xbf16>
    %c0_48 = arith.constant 0 : index
    %c0_49 = arith.constant 0 : index
    %c0_50 = arith.constant 0 : index
    %52 = vector.load %arg4[%c0_48, %c0_49, %c0_50] : memref<4x104x80xbf16, #tpu.memory_space<vmem>>, vector<1x104x80xbf16>
    %53 = vector.shape_cast %52 : vector<1x104x80xbf16> to vector<104x80xbf16>
    %cst_51 = arith.constant dense<0.000000e+00> : vector<10x80xf32>
    %54 = tpu.matmul %51, %53, %cst_51 {dimension_numbers = #tpu.dot_dimension_numbers<[1], [0], [0], [1], [0, 0, 1, 1], [], []>} : vector<10x104xbf16>, vector<104x80xbf16>, vector<10x80xf32> -> vector<10x80xf32>
    %c1_52 = arith.constant 1 : index
    %c0_53 = arith.constant 0 : index
    %55 = vector.load %arg14[%c1_52, %c0_53] : memref<13x104xbf16, #tpu.memory_space<vmem>>, vector<10x104xbf16>
    %c1_54 = arith.constant 1 : index
    %c0_55 = arith.constant 0 : index
    %c0_56 = arith.constant 0 : index
    %56 = vector.load %arg4[%c1_54, %c0_55, %c0_56] : memref<4x104x80xbf16, #tpu.memory_space<vmem>>, vector<1x104x80xbf16>
    %57 = vector.shape_cast %56 : vector<1x104x80xbf16> to vector<104x80xbf16>
    %cst_57 = arith.constant dense<0.000000e+00> : vector<10x80xf32>
    %58 = tpu.matmul %55, %57, %cst_57 {dimension_numbers = #tpu.dot_dimension_numbers<[1], [0], [0], [1], [0, 0, 1, 1], [], []>} : vector<10x104xbf16>, vector<104x80xbf16>, vector<10x80xf32> -> vector<10x80xf32>
    %59 = arith.addf %54, %58 : vector<10x80xf32>
    %c2_58 = arith.constant 2 : index
    %c0_59 = arith.constant 0 : index
    %60 = vector.load %arg14[%c2_58, %c0_59] : memref<13x104xbf16, #tpu.memory_space<vmem>>, vector<10x104xbf16>
    %c2_60 = arith.constant 2 : index
    %c0_61 = arith.constant 0 : index
    %c0_62 = arith.constant 0 : index
    %61 = vector.load %arg4[%c2_60, %c0_61, %c0_62] : memref<4x104x80xbf16, #tpu.memory_space<vmem>>, vector<1x104x80xbf16>
    %62 = vector.shape_cast %61 : vector<1x104x80xbf16> to vector<104x80xbf16>
    %cst_63 = arith.constant dense<0.000000e+00> : vector<10x80xf32>
    %63 = tpu.matmul %60, %62, %cst_63 {dimension_numbers = #tpu.dot_dimension_numbers<[1], [0], [0], [1], [0, 0, 1, 1], [], []>} : vector<10x104xbf16>, vector<104x80xbf16>, vector<10x80xf32> -> vector<10x80xf32>
    %64 = arith.addf %59, %63 : vector<10x80xf32>
    %c3_64 = arith.constant 3 : index
    %c0_65 = arith.constant 0 : index
    %65 = vector.load %arg14[%c3_64, %c0_65] : memref<13x104xbf16, #tpu.memory_space<vmem>>, vector<10x104xbf16>
    %c3_66 = arith.constant 3 : index
    %c0_67 = arith.constant 0 : index
    %c0_68 = arith.constant 0 : index
    %66 = vector.load %arg4[%c3_66, %c0_67, %c0_68] : memref<4x104x80xbf16, #tpu.memory_space<vmem>>, vector<1x104x80xbf16>
    %67 = vector.shape_cast %66 : vector<1x104x80xbf16> to vector<104x80xbf16>
    %cst_69 = arith.constant dense<0.000000e+00> : vector<10x80xf32>
    %68 = tpu.matmul %65, %67, %cst_69 {dimension_numbers = #tpu.dot_dimension_numbers<[1], [0], [0], [1], [0, 0, 1, 1], [], []>} : vector<10x104xbf16>, vector<104x80xbf16>, vector<10x80xf32> -> vector<10x80xf32>
    %69 = arith.addf %64, %68 : vector<10x80xf32>
    %70 = tpu.iota {dimensions = array<i32: 0>} : vector<5x10xi32>
    %71 = tpu.iota {dimensions = array<i32: 1>} : vector<5x10xi32>
    %c2_i32_70 = arith.constant 2 : i32
    %72 = vector.broadcast %c2_i32_70 : i32 to vector<5x10xi32>
    %73 = arith.muli %72, %70 : vector<5x10xi32>
    %74 = arith.cmpi eq, %71, %73 : vector<5x10xi32>
    %cst_71 = arith.constant 1.000000e+00 : f32
    %cst_72 = arith.constant 0.000000e+00 : f32
    %75 = vector.broadcast %cst_71 : f32 to vector<5x10xf32>
    %76 = vector.broadcast %cst_72 : f32 to vector<5x10xf32>
    %77 = arith.select %74, %75, %76 : vector<5x10xi1>, vector<5x10xf32>
    %cst_73 = arith.constant dense<0.000000e+00> : vector<5x80xf32>
    %78 = tpu.matmul %77, %69, %cst_73 {dimension_numbers = #tpu.dot_dimension_numbers<[1], [0], [0], [1], [0, 0, 1, 1], [], []>} : vector<5x10xf32>, vector<10x80xf32>, vector<5x80xf32> -> vector<5x80xf32>
    %c0_74 = arith.constant 0 : index
    %c0_75 = arith.constant 0 : index
    %79 = vector.load %arg5[%c0_74, %c0_75] : memref<1x80xf32, #tpu.memory_space<vmem>>, vector<1x80xf32>
    %80 = vector.broadcast %79 : vector<1x80xf32> to vector<5x80xf32>
    %81 = arith.addf %78, %80 : vector<5x80xf32>
    %cst_76 = arith.constant 0.000000e+00 : f32
    %82 = vector.broadcast %cst_76 : f32 to vector<5x80xf32>
    %83 = arith.cmpf oge, %81, %82 : vector<5x80xf32>
    %cst_77 = arith.constant 2.000000e-01 : f32
    %84 = vector.broadcast %cst_77 : f32 to vector<5x80xf32>
    %85 = arith.mulf %84, %81 : vector<5x80xf32>
    %86 = arith.select %83, %81, %85 : vector<5x80xi1>, vector<5x80xf32>
    %87 = arith.truncf %86 : vector<5x80xf32> to vector<5x80xbf16>
    %c2_78 = arith.constant 2 : index
    %c32 = arith.constant 32 : index
    %88 = vector.load %arg15[%c2_78, %c32] : memref<9x144xbf16, #tpu.memory_space<vmem>>, vector<5x80xbf16>
    tpu.vector_store %arg15[%c2_78, %c32], %87 {strides = array<i32>} : memref<9x144xbf16, #tpu.memory_space<vmem>>, vector<5x80xbf16>,
    %c0_79 = arith.constant 0 : index
    %c0_80 = arith.constant 0 : index
    %89 = vector.load %arg15[%c0_79, %c0_80] : memref<9x144xbf16, #tpu.memory_space<vmem>>, vector<6x144xbf16>
    %c0_81 = arith.constant 0 : index
    %c0_82 = arith.constant 0 : index
    %c0_83 = arith.constant 0 : index
    %90 = vector.load %arg6[%c0_81, %c0_82, %c0_83] : memref<4x144x96xbf16, #tpu.memory_space<vmem>>, vector<1x144x96xbf16>
    %91 = vector.shape_cast %90 : vector<1x144x96xbf16> to vector<144x96xbf16>
    %cst_84 = arith.constant dense<0.000000e+00> : vector<6x96xf32>
    %92 = tpu.matmul %89, %91, %cst_84 {dimension_numbers = #tpu.dot_dimension_numbers<[1], [0], [0], [1], [0, 0, 1, 1], [], []>} : vector<6x144xbf16>, vector<144x96xbf16>, vector<6x96xf32> -> vector<6x96xf32>
    %c1_85 = arith.constant 1 : index
    %c0_86 = arith.constant 0 : index
    %93 = vector.load %arg15[%c1_85, %c0_86] : memref<9x144xbf16, #tpu.memory_space<vmem>>, vector<6x144xbf16>
    %c1_87 = arith.constant 1 : index
    %c0_88 = arith.constant 0 : index
    %c0_89 = arith.constant 0 : index
    %94 = vector.load %arg6[%c1_87, %c0_88, %c0_89] : memref<4x144x96xbf16, #tpu.memory_space<vmem>>, vector<1x144x96xbf16>
    %95 = vector.shape_cast %94 : vector<1x144x96xbf16> to vector<144x96xbf16>
    %cst_90 = arith.constant dense<0.000000e+00> : vector<6x96xf32>
    %96 = tpu.matmul %93, %95, %cst_90 {dimension_numbers = #tpu.dot_dimension_numbers<[1], [0], [0], [1], [0, 0, 1, 1], [], []>} : vector<6x144xbf16>, vector<144x96xbf16>, vector<6x96xf32> -> vector<6x96xf32>
    %97 = arith.addf %92, %96 : vector<6x96xf32>
    %c2_91 = arith.constant 2 : index
    %c0_92 = arith.constant 0 : index
    %98 = vector.load %arg15[%c2_91, %c0_92] : memref<9x144xbf16, #tpu.memory_space<vmem>>, vector<6x144xbf16>
    %c2_93 = arith.constant 2 : index
    %c0_94 = arith.constant 0 : index
    %c0_95 = arith.constant 0 : index
    %99 = vector.load %arg6[%c2_93, %c0_94, %c0_95] : memref<4x144x96xbf16, #tpu.memory_space<vmem>>, vector<1x144x96xbf16>
    %100 = vector.shape_cast %99 : vector<1x144x96xbf16> to vector<144x96xbf16>
    %cst_96 = arith.constant dense<0.000000e+00> : vector<6x96xf32>
    %101 = tpu.matmul %98, %100, %cst_96 {dimension_numbers = #tpu.dot_dimension_numbers<[1], [0], [0], [1], [0, 0, 1, 1], [], []>} : vector<6x144xbf16>, vector<144x96xbf16>, vector<6x96xf32> -> vector<6x96xf32>
    %102 = arith.addf %97, %101 : vector<6x96xf32>
    %c3_97 = arith.constant 3 : index
    %c0_98 = arith.constant 0 : index
    %103 = vector.load %arg15[%c3_97, %c0_98] : memref<9x144xbf16, #tpu.memory_space<vmem>>, vector<6x144xbf16>
    %c3_99 = arith.constant 3 : index
    %c0_100 = arith.constant 0 : index
    %c0_101 = arith.constant 0 : index
    %104 = vector.load %arg6[%c3_99, %c0_100, %c0_101] : memref<4x144x96xbf16, #tpu.memory_space<vmem>>, vector<1x144x96xbf16>
    %105 = vector.shape_cast %104 : vector<1x144x96xbf16> to vector<144x96xbf16>
    %cst_102 = arith.constant dense<0.000000e+00> : vector<6x96xf32>
    %106 = tpu.matmul %103, %105, %cst_102 {dimension_numbers = #tpu.dot_dimension_numbers<[1], [0], [0], [1], [0, 0, 1, 1], [], []>} : vector<6x144xbf16>, vector<144x96xbf16>, vector<6x96xf32> -> vector<6x96xf32>
    %107 = arith.addf %102, %106 : vector<6x96xf32>
    %108 = tpu.iota {dimensions = array<i32: 0>} : vector<3x6xi32>
    %109 = tpu.iota {dimensions = array<i32: 1>} : vector<3x6xi32>
    %c2_i32_103 = arith.constant 2 : i32
    %110 = vector.broadcast %c2_i32_103 : i32 to vector<3x6xi32>
    %111 = arith.muli %110, %108 : vector<3x6xi32>
    %112 = arith.cmpi eq, %109, %111 : vector<3x6xi32>
    %cst_104 = arith.constant 1.000000e+00 : f32
    %cst_105 = arith.constant 0.000000e+00 : f32
    %113 = vector.broadcast %cst_104 : f32 to vector<3x6xf32>
    %114 = vector.broadcast %cst_105 : f32 to vector<3x6xf32>
    %115 = arith.select %112, %113, %114 : vector<3x6xi1>, vector<3x6xf32>
    %cst_106 = arith.constant dense<0.000000e+00> : vector<3x96xf32>
    %116 = tpu.matmul %115, %107, %cst_106 {dimension_numbers = #tpu.dot_dimension_numbers<[1], [0], [0], [1], [0, 0, 1, 1], [], []>} : vector<3x6xf32>, vector<6x96xf32>, vector<3x96xf32> -> vector<3x96xf32>
    %c0_107 = arith.constant 0 : index
    %c0_108 = arith.constant 0 : index
    %117 = vector.load %arg7[%c0_107, %c0_108] : memref<1x96xf32, #tpu.memory_space<vmem>>, vector<1x96xf32>
    %118 = vector.broadcast %117 : vector<1x96xf32> to vector<3x96xf32>
    %119 = arith.addf %116, %118 : vector<3x96xf32>
    %cst_109 = arith.constant 0.000000e+00 : f32
    %120 = vector.broadcast %cst_109 : f32 to vector<3x96xf32>
    %121 = arith.cmpf oge, %119, %120 : vector<3x96xf32>
    %cst_110 = arith.constant 2.000000e-01 : f32
    %122 = vector.broadcast %cst_110 : f32 to vector<3x96xf32>
    %123 = arith.mulf %122, %119 : vector<3x96xf32>
    %124 = arith.select %121, %119, %123 : vector<3x96xi1>, vector<3x96xf32>
    %125 = arith.truncf %124 : vector<3x96xf32> to vector<3x96xbf16>
    %c2_111 = arith.constant 2 : index
    %c64 = arith.constant 64 : index
    %126 = vector.load %arg16[%c2_111, %c64] : memref<7x224xbf16, #tpu.memory_space<vmem>>, vector<3x96xbf16>
    tpu.vector_store %arg16[%c2_111, %c64], %125 {strides = array<i32>} : memref<7x224xbf16, #tpu.memory_space<vmem>>, vector<3x96xbf16>,
    %c0_112 = arith.constant 0 : index
    %c0_113 = arith.constant 0 : index
    %127 = vector.load %arg16[%c0_112, %c0_113] : memref<7x224xbf16, #tpu.memory_space<vmem>>, vector<4x224xbf16>
    %c0_114 = arith.constant 0 : index
    %c0_115 = arith.constant 0 : index
    %c0_116 = arith.constant 0 : index
    %128 = vector.load %arg8[%c0_114, %c0_115, %c0_116] : memref<4x224x256xbf16, #tpu.memory_space<vmem>>, vector<1x224x256xbf16>
    %129 = vector.shape_cast %128 : vector<1x224x256xbf16> to vector<224x256xbf16>
    %cst_117 = arith.constant dense<0.000000e+00> : vector<4x256xf32>
    %130 = tpu.matmul %127, %129, %cst_117 {dimension_numbers = #tpu.dot_dimension_numbers<[1], [0], [0], [1], [0, 0, 1, 1], [], []>} : vector<4x224xbf16>, vector<224x256xbf16>, vector<4x256xf32> -> vector<4x256xf32>
    %c1_118 = arith.constant 1 : index
    %c0_119 = arith.constant 0 : index
    %131 = vector.load %arg16[%c1_118, %c0_119] : memref<7x224xbf16, #tpu.memory_space<vmem>>, vector<4x224xbf16>
    %c1_120 = arith.constant 1 : index
    %c0_121 = arith.constant 0 : index
    %c0_122 = arith.constant 0 : index
    %132 = vector.load %arg8[%c1_120, %c0_121, %c0_122] : memref<4x224x256xbf16, #tpu.memory_space<vmem>>, vector<1x224x256xbf16>
    %133 = vector.shape_cast %132 : vector<1x224x256xbf16> to vector<224x256xbf16>
    %cst_123 = arith.constant dense<0.000000e+00> : vector<4x256xf32>
    %134 = tpu.matmul %131, %133, %cst_123 {dimension_numbers = #tpu.dot_dimension_numbers<[1], [0], [0], [1], [0, 0, 1, 1], [], []>} : vector<4x224xbf16>, vector<224x256xbf16>, vector<4x256xf32> -> vector<4x256xf32>
    %135 = arith.addf %130, %134 : vector<4x256xf32>
    %c2_124 = arith.constant 2 : index
    %c0_125 = arith.constant 0 : index
    %136 = vector.load %arg16[%c2_124, %c0_125] : memref<7x224xbf16, #tpu.memory_space<vmem>>, vector<4x224xbf16>
    %c2_126 = arith.constant 2 : index
    %c0_127 = arith.constant 0 : index
    %c0_128 = arith.constant 0 : index
    %137 = vector.load %arg8[%c2_126, %c0_127, %c0_128] : memref<4x224x256xbf16, #tpu.memory_space<vmem>>, vector<1x224x256xbf16>
    %138 = vector.shape_cast %137 : vector<1x224x256xbf16> to vector<224x256xbf16>
    %cst_129 = arith.constant dense<0.000000e+00> : vector<4x256xf32>
    %139 = tpu.matmul %136, %138, %cst_129 {dimension_numbers = #tpu.dot_dimension_numbers<[1], [0], [0], [1], [0, 0, 1, 1], [], []>} : vector<4x224xbf16>, vector<224x256xbf16>, vector<4x256xf32> -> vector<4x256xf32>
    %140 = arith.addf %135, %139 : vector<4x256xf32>
    %c3_130 = arith.constant 3 : index
    %c0_131 = arith.constant 0 : index
    %141 = vector.load %arg16[%c3_130, %c0_131] : memref<7x224xbf16, #tpu.memory_space<vmem>>, vector<4x224xbf16>
    %c3_132 = arith.constant 3 : index
    %c0_133 = arith.constant 0 : index
    %c0_134 = arith.constant 0 : index
    %142 = vector.load %arg8[%c3_132, %c0_133, %c0_134] : memref<4x224x256xbf16, #tpu.memory_space<vmem>>, vector<1x224x256xbf16>
    %143 = vector.shape_cast %142 : vector<1x224x256xbf16> to vector<224x256xbf16>
    %cst_135 = arith.constant dense<0.000000e+00> : vector<4x256xf32>
    %144 = tpu.matmul %141, %143, %cst_135 {dimension_numbers = #tpu.dot_dimension_numbers<[1], [0], [0], [1], [0, 0, 1, 1], [], []>} : vector<4x224xbf16>, vector<224x256xbf16>, vector<4x256xf32> -> vector<4x256xf32>
    %145 = arith.addf %140, %144 : vector<4x256xf32>
    %c0_136 = arith.constant 0 : index
    %c0_137 = arith.constant 0 : index
    %146 = vector.load %arg9[%c0_136, %c0_137] : memref<1x256xf32, #tpu.memory_space<vmem>>, vector<1x256xf32>
    %147 = vector.broadcast %146 : vector<1x256xf32> to vector<4x256xf32>
    %148 = arith.addf %145, %147 : vector<4x256xf32>
    %cst_138 = arith.constant 0.000000e+00 : f32
    %149 = vector.broadcast %cst_138 : f32 to vector<4x256xf32>
    %150 = arith.cmpf oge, %148, %149 : vector<4x256xf32>
    %cst_139 = arith.constant 2.000000e-01 : f32
    %151 = vector.broadcast %cst_139 : f32 to vector<4x256xf32>
    %152 = arith.mulf %151, %148 : vector<4x256xf32>
    %153 = arith.select %150, %148, %152 : vector<4x256xi1>, vector<4x256xf32>
    %154 = arith.truncf %153 : vector<4x256xf32> to vector<4x256xbf16>
    %c2_140 = arith.constant 2 : index
    %c128 = arith.constant 128 : index
    %155 = vector.load %arg17[%c2_140, %c128] : memref<8x512xbf16, #tpu.memory_space<vmem>>, vector<4x256xbf16>
    tpu.vector_store %arg17[%c2_140, %c128], %154 {strides = array<i32>} : memref<8x512xbf16, #tpu.memory_space<vmem>>, vector<4x256xbf16>,
    %c0_141 = arith.constant 0 : index
    %c0_142 = arith.constant 0 : index
    %156 = vector.load %arg17[%c0_141, %c0_142] : memref<8x512xbf16, #tpu.memory_space<vmem>>, vector<5x512xbf16>
    %c0_143 = arith.constant 0 : index
    %c0_144 = arith.constant 0 : index
    %c0_145 = arith.constant 0 : index
    %157 = vector.load %arg10[%c0_143, %c0_144, %c0_145] : memref<4x512x5xbf16, #tpu.memory_space<vmem>>, vector<1x512x5xbf16>
    %158 = vector.shape_cast %157 : vector<1x512x5xbf16> to vector<512x5xbf16>
    %cst_146 = arith.constant dense<0.000000e+00> : vector<5x5xf32>
    %159 = tpu.matmul %156, %158, %cst_146 {dimension_numbers = #tpu.dot_dimension_numbers<[1], [0], [0], [1], [0, 0, 1, 1], [], []>} : vector<5x512xbf16>, vector<512x5xbf16>, vector<5x5xf32> -> vector<5x5xf32>
    %c1_147 = arith.constant 1 : index
    %c0_148 = arith.constant 0 : index
    %160 = vector.load %arg17[%c1_147, %c0_148] : memref<8x512xbf16, #tpu.memory_space<vmem>>, vector<5x512xbf16>
    %c1_149 = arith.constant 1 : index
    %c0_150 = arith.constant 0 : index
    %c0_151 = arith.constant 0 : index
    %161 = vector.load %arg10[%c1_149, %c0_150, %c0_151] : memref<4x512x5xbf16, #tpu.memory_space<vmem>>, vector<1x512x5xbf16>
    %162 = vector.shape_cast %161 : vector<1x512x5xbf16> to vector<512x5xbf16>
    %cst_152 = arith.constant dense<0.000000e+00> : vector<5x5xf32>
    %163 = tpu.matmul %160, %162, %cst_152 {dimension_numbers = #tpu.dot_dimension_numbers<[1], [0], [0], [1], [0, 0, 1, 1], [], []>} : vector<5x512xbf16>, vector<512x5xbf16>, vector<5x5xf32> -> vector<5x5xf32>
    %164 = arith.addf %159, %163 : vector<5x5xf32>
    %c2_153 = arith.constant 2 : index
    %c0_154 = arith.constant 0 : index
    %165 = vector.load %arg17[%c2_153, %c0_154] : memref<8x512xbf16, #tpu.memory_space<vmem>>, vector<5x512xbf16>
    %c2_155 = arith.constant 2 : index
    %c0_156 = arith.constant 0 : index
    %c0_157 = arith.constant 0 : index
    %166 = vector.load %arg10[%c2_155, %c0_156, %c0_157] : memref<4x512x5xbf16, #tpu.memory_space<vmem>>, vector<1x512x5xbf16>
    %167 = vector.shape_cast %166 : vector<1x512x5xbf16> to vector<512x5xbf16>
    %cst_158 = arith.constant dense<0.000000e+00> : vector<5x5xf32>
    %168 = tpu.matmul %165, %167, %cst_158 {dimension_numbers = #tpu.dot_dimension_numbers<[1], [0], [0], [1], [0, 0, 1, 1], [], []>} : vector<5x512xbf16>, vector<512x5xbf16>, vector<5x5xf32> -> vector<5x5xf32>
    %169 = arith.addf %164, %168 : vector<5x5xf32>
    %c3_159 = arith.constant 3 : index
    %c0_160 = arith.constant 0 : index
    %170 = vector.load %arg17[%c3_159, %c0_160] : memref<8x512xbf16, #tpu.memory_space<vmem>>, vector<5x512xbf16>
    %c3_161 = arith.constant 3 : index
    %c0_162 = arith.constant 0 : index
    %c0_163 = arith.constant 0 : index
    %171 = vector.load %arg10[%c3_161, %c0_162, %c0_163] : memref<4x512x5xbf16, #tpu.memory_space<vmem>>, vector<1x512x5xbf16>
    %172 = vector.shape_cast %171 : vector<1x512x5xbf16> to vector<512x5xbf16>
    %cst_164 = arith.constant dense<0.000000e+00> : vector<5x5xf32>
    %173 = tpu.matmul %170, %172, %cst_164 {dimension_numbers = #tpu.dot_dimension_numbers<[1], [0], [0], [1], [0, 0, 1, 1], [], []>} : vector<5x512xbf16>, vector<512x5xbf16>, vector<5x5xf32> -> vector<5x5xf32>
    %174 = arith.addf %169, %173 : vector<5x5xf32>
    %c0_165 = arith.constant 0 : index
    %c0_166 = arith.constant 0 : index
    %175 = vector.load %arg11[%c0_165, %c0_166] : memref<1x5xf32, #tpu.memory_space<vmem>>, vector<1x5xf32>
    %176 = vector.broadcast %175 : vector<1x5xf32> to vector<5x5xf32>
    %177 = arith.addf %174, %176 : vector<5x5xf32>
    %c0_167 = arith.constant 0 : index
    %c0_168 = arith.constant 0 : index
    %c0_169 = arith.constant 0 : index
    %178 = vector.load %arg12[%c0_167, %c0_168, %c0_169] : memref<1x5x5xf32, #tpu.memory_space<vmem>>, vector<1x5x5xf32>
    %179 = vector.shape_cast %178 : vector<1x5x5xf32> to vector<5x5xf32>
    %180 = vector.shape_cast %177 : vector<5x5xf32> to vector<1x5x5xf32>
    tpu.vector_store %arg12[%c0_167, %c0_168, %c0_169], %180 {strides = array<i32>} : memref<1x5x5xf32, #tpu.memory_space<vmem>>, vector<1x5x5xf32>,
    return
  }
  func.func @transform_0(%arg0: i32) -> (i32, i32, i32) {
    %c0_i32 = arith.constant 0 : i32
    %c0_i32_0 = arith.constant 0 : i32
    %c0_i32_1 = arith.constant 0 : i32
    return %arg0, %c0_i32, %c0_i32_0 : i32, i32, i32
  }
  func.func @transform_1(%arg0: i32) -> (i32, i32, i32) {
    %c0_i32 = arith.constant 0 : i32
    %c0_i32_0 = arith.constant 0 : i32
    %c0_i32_1 = arith.constant 0 : i32
    %c0_i32_2 = arith.constant 0 : i32
    return %c0_i32, %c0_i32_0, %c0_i32_1 : i32, i32, i32
  }
  func.func @transform_2(%arg0: i32) -> (i32, i32) {
    %c0_i32 = arith.constant 0 : i32
    %c0_i32_0 = arith.constant 0 : i32
    %c0_i32_1 = arith.constant 0 : i32
    return %c0_i32, %c0_i32_0 : i32, i32
  }
  func.func @transform_3(%arg0: i32) -> (i32, i32, i32) {
    %c0_i32 = arith.constant 0 : i32
    %c0_i32_0 = arith.constant 0 : i32
    %c0_i32_1 = arith.constant 0 : i32
    %c0_i32_2 = arith.constant 0 : i32
    return %c0_i32, %c0_i32_0, %c0_i32_1 : i32, i32, i32
  }
  func.func @transform_4(%arg0: i32) -> (i32, i32) {
    %c0_i32 = arith.constant 0 : i32
    %c0_i32_0 = arith.constant 0 : i32
    %c0_i32_1 = arith.constant 0 : i32
    return %c0_i32, %c0_i32_0 : i32, i32
  }
  func.func @transform_5(%arg0: i32) -> (i32, i32, i32) {
    %c0_i32 = arith.constant 0 : i32
    %c0_i32_0 = arith.constant 0 : i32
    %c0_i32_1 = arith.constant 0 : i32
    %c0_i32_2 = arith.constant 0 : i32
    return %c0_i32, %c0_i32_0, %c0_i32_1 : i32, i32, i32
  }
  func.func @transform_6(%arg0: i32) -> (i32, i32) {
    %c0_i32 = arith.constant 0 : i32
    %c0_i32_0 = arith.constant 0 : i32
    %c0_i32_1 = arith.constant 0 : i32
    return %c0_i32, %c0_i32_0 : i32, i32
  }
  func.func @transform_7(%arg0: i32) -> (i32, i32, i32) {
    %c0_i32 = arith.constant 0 : i32
    %c0_i32_0 = arith.constant 0 : i32
    %c0_i32_1 = arith.constant 0 : i32
    %c0_i32_2 = arith.constant 0 : i32
    return %c0_i32, %c0_i32_0, %c0_i32_1 : i32, i32, i32
  }
  func.func @transform_8(%arg0: i32) -> (i32, i32) {
    %c0_i32 = arith.constant 0 : i32
    %c0_i32_0 = arith.constant 0 : i32
    %c0_i32_1 = arith.constant 0 : i32
    return %c0_i32, %c0_i32_0 : i32, i32
  }
  func.func @transform_9(%arg0: i32) -> (i32, i32, i32) {
    %c0_i32 = arith.constant 0 : i32
    %c0_i32_0 = arith.constant 0 : i32
    %c0_i32_1 = arith.constant 0 : i32
    %c0_i32_2 = arith.constant 0 : i32
    return %c0_i32, %c0_i32_0, %c0_i32_1 : i32, i32, i32
  }
  func.func @transform_10(%arg0: i32) -> (i32, i32) {
    %c0_i32 = arith.constant 0 : i32
    %c0_i32_0 = arith.constant 0 : i32
    %c0_i32_1 = arith.constant 0 : i32
    return %c0_i32, %c0_i32_0 : i32, i32
  }
  func.func @transform_11(%arg0: i32) -> (i32, i32, i32) {
    %c0_i32 = arith.constant 0 : i32
    %c0_i32_0 = arith.constant 0 : i32
    %c0_i32_1 = arith.constant 0 : i32
    return %arg0, %c0_i32, %c0_i32_0 : i32, i32, i32
  }
}

</mosaic_0001>

<llo_original>
// kernel: _forward.1
$region0: #{_forward.1}
  #allocation0 [shape = 'u32[]', space=smem, size = 0x4, offset = 0x4, fixed_abs, tag = 'smem constant byte address 0x4 - core index']
  #allocation1 [shape = 'u32[144,128]{1,0:T(1,128)}', space=vmem, size = 0x12000, scoped, tag = 'internal scratch']
  #allocation2 [shape = 'bf16[20,60]{1,0:T(8,128)(2,1)}', space=vmem, size = 0x1800, scoped, tag = 'scratch operand']
  #allocation3 [shape = 'bf16[13,104]{1,0:T(8,128)(2,1)}', space=vmem, size = 0x1000, scoped, tag = 'scratch operand']
  #allocation4 [shape = 'bf16[9,144]{1,0:T(8,128)(2,1)}', space=vmem, size = 0x2000, scoped, tag = 'scratch operand']
  #allocation5 [shape = 'bf16[7,224]{1,0:T(8,128)(2,1)}', space=vmem, size = 0x1000, scoped, tag = 'scratch operand']
  #allocation6 [shape = 'bf16[8,512]{1,0:T(8,128)(2,1)}', space=vmem, size = 0x2000, scoped, tag = 'scratch operand']
  %s0 = inlined_call_operand.vmem [shape: bf16[2,16,48], index: 0, kind: input, shape index: {}]
  %s1 = inlined_call_operand.vmem [shape: bf16[4,60,72], index: 1, kind: input, shape index: {}]
  %s2 = inlined_call_operand.vmem [shape: f32[1,72], index: 2, kind: input, shape index: {}]
  %s3 = inlined_call_operand.vmem [shape: bf16[4,104,80], index: 3, kind: input, shape index: {}]
  %s4 = inlined_call_operand.vmem [shape: f32[1,80], index: 4, kind: input, shape index: {}]
  %s5 = inlined_call_operand.vmem [shape: bf16[4,144,96], index: 5, kind: input, shape index: {}]
  %s6 = inlined_call_operand.vmem [shape: f32[1,96], index: 6, kind: input, shape index: {}]
  %s7 = inlined_call_operand.vmem [shape: bf16[4,224,256], index: 7, kind: input, shape index: {}]
  %s8 = inlined_call_operand.vmem [shape: f32[1,256], index: 8, kind: input, shape index: {}]
  %s9 = inlined_call_operand.vmem [shape: bf16[4,512,5], index: 9, kind: input, shape index: {}]
  %s10 = inlined_call_operand.vmem [shape: f32[1,5], index: 10, kind: input, shape index: {}]
  %s11 = inlined_call_operand.vmem [shape: f32[2,5,5], index: 11, kind: output, shape index: {}]
  %s12 = sld [smem:[#allocation0]]
  $region77: #{_forward.1} parent=0
    _
  %s14 = ssub.s32 1, %s12
  %s15 = scalar_select 0, %s14, %s12
  loop: start=0, step=1, limit=4
  $region2: #{_forward.1} parent=0 // loop_pre_header
    _
  $region3: #{_forward.1} parent=0 // loop_header
    %s17 = sphi 0, %s21
    %p18 = scmp.ge.s32.totalorder %s17, 4
    %s27 = sphi 0, %s29
    %s30 = sphi 0, %s27
    %s31 = sphi 0, %s30
    %s47 = sphi 0, %s31
    %s51 = sphi 0, %s51
    %s53 = sphi 0, %s51
    %s54 = sphi 0, %s53
    %s68 = sphi 0, %s54
    %s72 = sphi 0, %s72
    %s74 = sphi 0, %s72
    %s75 = sphi 0, %s74
    %s89 = sphi 0, %s75
    %s93 = sphi 0, %s93
    %s95 = sphi 0, %s93
    %s96 = sphi 0, %s95
    %s110 = sphi 0, %s96
    %s114 = sphi 0, %s114
    %s116 = sphi 0, %s114
    %s117 = sphi 0, %s116
    %s131 = sphi 0, %s117
    %s135 = sphi 0, %s135
    %s137 = sphi 0, %s135
    %s138 = sphi 0, %s137
    %s152 = sphi 0, %s138
    %s156 = sphi 0, %s156
    %s158 = sphi 0, %s156
    %s159 = sphi 0, %s158
    %s173 = sphi 0, %s159
    %s177 = sphi 0, %s177
    %s179 = sphi 0, %s177
    %s180 = sphi 0, %s179
    %s194 = sphi 0, %s180
    %s198 = sphi 0, %s198
    %s200 = sphi 0, %s198
    %s201 = sphi 0, %s200
    %s215 = sphi 0, %s201
    %s219 = sphi 0, %s219
    %s221 = sphi 0, %s219
    %s222 = sphi 0, %s221
    %s236 = sphi 0, %s222
    %s240 = sphi 0, %s240
    %s242 = sphi 0, %s240
    %s243 = sphi 0, %s242
    %s257 = sphi 0, %s243
    %s263 = sphi 0, %s265
    %s266 = sphi 0, %s263
    %s267 = sphi 0, %s266
    %s283 = sphi 0, %s267
  $region4: #{_forward.1} parent=0 // loop_header_branch
    %20 = sbr.rel (%p18) target = $region8
  $region5: #{_forward.1} parent=0 // loop_body
    %s22 = ssub.s32 %s17, 1
    %s23 = ssub.s32 %s17, 2
    %s24 = sadd.s32 %s17, 1
    %s25 = ssub.s32 %s17, %s24
    %p26 = scmp.eq.s32.totalorder %s25, 0
    %s28 = sadd.s32 %s27, 1
    %s29 = scalar_select %p26, %s27, %s28
    %p32 = pneg %p26
    %p33 = scmp.eq.s32.totalorder %s17, 1
    %p34 = por %p32, %p33
    %p35 = scmp.ne.s32.totalorder %s27, %s30
    %p36 = scmp.eq.s32.totalorder %s17, 0
    %p37 = por %p35, %p36
    %p38 = scmp.ne.s32.totalorder %s27, %s30
    %p39 = scmp.eq.s32.totalorder %s22, 1
    %p40 = por %p38, %p39
    %p41 = scmp.ne.s32.totalorder %s30, %s31
    %p42 = scmp.eq.s32.totalorder %s22, 0
    %p43 = por %p41, %p42
    %p44 = scmp.ne.s32.totalorder %s30, %s31
    %p45 = scmp.eq.s32.totalorder %s23, 1
    %p46 = por %p44, %p45
    %p48 = scmp.ne.s32.totalorder %s31, %s47
    %p49 = scmp.eq.s32.totalorder %s23, 0
    %p50 = por %p48, %p49
    %s52 = sadd.s32 %s51, 1
    %p55 = scmp.eq.s32.totalorder %s17, 1
    %p56 = scmp.ne.s32.totalorder %s51, %s53
    %p57 = scmp.eq.s32.totalorder %s17, 0
    %p58 = por %p56, %p57
    %p59 = scmp.ne.s32.totalorder %s51, %s53
    %p60 = scmp.eq.s32.totalorder %s22, 1
    %p61 = por %p59, %p60
    %p62 = scmp.ne.s32.totalorder %s53, %s54
    %p63 = scmp.eq.s32.totalorder %s22, 0
    %p64 = por %p62, %p63
    %p65 = scmp.ne.s32.totalorder %s53, %s54
    %p66 = scmp.eq.s32.totalorder %s23, 1
    %p67 = por %p65, %p66
    %p69 = scmp.ne.s32.totalorder %s54, %s68
    %p70 = scmp.eq.s32.totalorder %s23, 0
    %p71 = por %p69, %p70
    %s73 = sadd.s32 %s72, 1
    %p76 = scmp.eq.s32.totalorder %s17, 1
    %p77 = scmp.ne.s32.totalorder %s72, %s74
    %p78 = scmp.eq.s32.totalorder %s17, 0
    %p79 = por %p77, %p78
    %p80 = scmp.ne.s32.totalorder %s72, %s74
    %p81 = scmp.eq.s32.totalorder %s22, 1
    %p82 = por %p80, %p81
    %p83 = scmp.ne.s32.totalorder %s74, %s75
    %p84 = scmp.eq.s32.totalorder %s22, 0
    %p85 = por %p83, %p84
    %p86 = scmp.ne.s32.totalorder %s74, %s75
    %p87 = scmp.eq.s32.totalorder %s23, 1
    %p88 = por %p86, %p87
    %p90 = scmp.ne.s32.totalorder %s75, %s89
    %p91 = scmp.eq.s32.totalorder %s23, 0
    %p92 = por %p90, %p91
    %s94 = sadd.s32 %s93, 1
    %p97 = scmp.eq.s32.totalorder %s17, 1
    %p98 = scmp.ne.s32.totalorder %s93, %s95
    %p99 = scmp.eq.s32.totalorder %s17, 0
    %p100 = por %p98, %p99
    %p101 = scmp.ne.s32.totalorder %s93, %s95
    %p102 = scmp.eq.s32.totalorder %s22, 1
    %p103 = por %p101, %p102
    %p104 = scmp.ne.s32.totalorder %s95, %s96
    %p105 = scmp.eq.s32.totalorder %s22, 0
    %p106 = por %p104, %p105
    %p107 = scmp.ne.s32.totalorder %s95, %s96
    %p108 = scmp.eq.s32.totalorder %s23, 1
    %p109 = por %p107, %p108
    %p111 = scmp.ne.s32.totalorder %s96, %s110
    %p112 = scmp.eq.s32.totalorder %s23, 0
    %p113 = por %p111, %p112
    %s115 = sadd.s32 %s114, 1
    %p118 = scmp.eq.s32.totalorder %s17, 1
    %p119 = scmp.ne.s32.totalorder %s114, %s116
    %p120 = scmp.eq.s32.totalorder %s17, 0
    %p121 = por %p119, %p120
    %p122 = scmp.ne.s32.totalorder %s114, %s116
    %p123 = scmp.eq.s32.totalorder %s22, 1
    %p124 = por %p122, %p123
    %p125 = scmp.ne.s32.totalorder %s116, %s117
    %p126 = scmp.eq.s32.totalorder %s22, 0
    %p127 = por %p125, %p126
    %p128 = scmp.ne.s32.totalorder %s116, %s117
    %p129 = scmp.eq.s32.totalorder %s23, 1
    %p130 = por %p128, %p129
    %p132 = scmp.ne.s32.totalorder %s117, %s131
    %p133 = scmp.eq.s32.totalorder %s23, 0
    %p134 = por %p132, %p133
    %s136 = sadd.s32 %s135, 1
    %p139 = scmp.eq.s32.totalorder %s17, 1
    %p140 = scmp.ne.s32.totalorder %s135, %s137
    %p141 = scmp.eq.s32.totalorder %s17, 0
    %p142 = por %p140, %p141
    %p143 = scmp.ne.s32.totalorder %s135, %s137
    %p144 = scmp.eq.s32.totalorder %s22, 1
    %p145 = por %p143, %p144
    %p146 = scmp.ne.s32.totalorder %s137, %s138
    %p147 = scmp.eq.s32.totalorder %s22, 0
    %p148 = por %p146, %p147
    %p149 = scmp.ne.s32.totalorder %s137, %s138
    %p150 = scmp.eq.s32.totalorder %s23, 1
    %p151 = por %p149, %p150
    %p153 = scmp.ne.s32.totalorder %s138, %s152
    %p154 = scmp.eq.s32.totalorder %s23, 0
    %p155 = por %p153, %p154
    %s157 = sadd.s32 %s156, 1
    %p160 = scmp.eq.s32.totalorder %s17, 1
    %p161 = scmp.ne.s32.totalorder %s156, %s158
    %p162 = scmp.eq.s32.totalorder %s17, 0
    %p163 = por %p161, %p162
    %p164 = scmp.ne.s32.totalorder %s156, %s158
    %p165 = scmp.eq.s32.totalorder %s22, 1
    %p166 = por %p164, %p165
    %p167 = scmp.ne.s32.totalorder %s158, %s159
    %p168 = scmp.eq.s32.totalorder %s22, 0
    %p169 = por %p167, %p168
    %p170 = scmp.ne.s32.totalorder %s158, %s159
    %p171 = scmp.eq.s32.totalorder %s23, 1
    %p172 = por %p170, %p171
    %p174 = scmp.ne.s32.totalorder %s159, %s173
    %p175 = scmp.eq.s32.totalorder %s23, 0
    %p176 = por %p174, %p175
    %s178 = sadd.s32 %s177, 1
    %p181 = scmp.eq.s32.totalorder %s17, 1
    %p182 = scmp.ne.s32.totalorder %s177, %s179
    %p183 = scmp.eq.s32.totalorder %s17, 0
    %p184 = por %p182, %p183
    %p185 = scmp.ne.s32.totalorder %s177, %s179
    %p186 = scmp.eq.s32.totalorder %s22, 1
    %p187 = por %p185, %p186
    %p188 = scmp.ne.s32.totalorder %s179, %s180
    %p189 = scmp.eq.s32.totalorder %s22, 0
    %p190 = por %p188, %p189
    %p191 = scmp.ne.s32.totalorder %s179, %s180
    %p192 = scmp.eq.s32.totalorder %s23, 1
    %p193 = por %p191, %p192
    %p195 = scmp.ne.s32.totalorder %s180, %s194
    %p196 = scmp.eq.s32.totalorder %s23, 0
    %p197 = por %p195, %p196
    %s199 = sadd.s32 %s198, 1
    %p202 = scmp.eq.s32.totalorder %s17, 1
    %p203 = scmp.ne.s32.totalorder %s198, %s200
    %p204 = scmp.eq.s32.totalorder %s17, 0
    %p205 = por %p203, %p204
    %p206 = scmp.ne.s32.totalorder %s198, %s200
    %p207 = scmp.eq.s32.totalorder %s22, 1
    %p208 = por %p206, %p207
    %p209 = scmp.ne.s32.totalorder %s200, %s201
    %p210 = scmp.eq.s32.totalorder %s22, 0
    %p211 = por %p209, %p210
    %p212 = scmp.ne.s32.totalorder %s200, %s201
    %p213 = scmp.eq.s32.totalorder %s23, 1
    %p214 = por %p212, %p213
    %p216 = scmp.ne.s32.totalorder %s201, %s215
    %p217 = scmp.eq.s32.totalorder %s23, 0
    %p218 = por %p216, %p217
    %s220 = sadd.s32 %s219, 1
    %p223 = scmp.eq.s32.totalorder %s17, 1
    %p224 = scmp.ne.s32.totalorder %s219, %s221
    %p225 = scmp.eq.s32.totalorder %s17, 0
    %p226 = por %p224, %p225
    %p227 = scmp.ne.s32.totalorder %s219, %s221
    %p228 = scmp.eq.s32.totalorder %s22, 1
    %p229 = por %p227, %p228
    %p230 = scmp.ne.s32.totalorder %s221, %s222
    %p231 = scmp.eq.s32.totalorder %s22, 0
    %p232 = por %p230, %p231
    %p233 = scmp.ne.s32.totalorder %s221, %s222
    %p234 = scmp.eq.s32.totalorder %s23, 1
    %p235 = por %p233, %p234
    %p237 = scmp.ne.s32.totalorder %s222, %s236
    %p238 = scmp.eq.s32.totalorder %s23, 0
    %p239 = por %p237, %p238
    %s241 = sadd.s32 %s240, 1
    %p244 = scmp.eq.s32.totalorder %s17, 1
    %p245 = scmp.ne.s32.totalorder %s240, %s242
    %p246 = scmp.eq.s32.totalorder %s17, 0
    %p247 = por %p245, %p246
    %p248 = scmp.ne.s32.totalorder %s240, %s242
    %p249 = scmp.eq.s32.totalorder %s22, 1
    %p250 = por %p248, %p249
    %p251 = scmp.ne.s32.totalorder %s242, %s243
    %p252 = scmp.eq.s32.totalorder %s22, 0
    %p253 = por %p251, %p252
    %p254 = scmp.ne.s32.totalorder %s242, %s243
    %p255 = scmp.eq.s32.totalorder %s23, 1
    %p256 = por %p254, %p255
    %p258 = scmp.ne.s32.totalorder %s243, %s257
    %p259 = scmp.eq.s32.totalorder %s23, 0
    %p260 = por %p258, %p259
    %s261 = ssub.s32 %s17, %s24
    %p262 = scmp.eq.s32.totalorder %s261, 0
    %s264 = sadd.s32 %s263, 1
    %s265 = scalar_select %p262, %s263, %s264
    %p268 = pneg %p262
    %p269 = scmp.eq.s32.totalorder %s17, 1
    %p270 = por %p268, %p269
    %p271 = scmp.ne.s32.totalorder %s263, %s266
    %p272 = scmp.eq.s32.totalorder %s17, 0
    %p273 = por %p271, %p272
    %p274 = scmp.ne.s32.totalorder %s263, %s266
    %p275 = scmp.eq.s32.totalorder %s22, 1
    %p276 = por %p274, %p275
    %p277 = scmp.ne.s32.totalorder %s266, %s267
    %p278 = scmp.eq.s32.totalorder %s22, 0
    %p279 = por %p277, %p278
    %p280 = scmp.ne.s32.totalorder %s266, %s267
    %p281 = scmp.eq.s32.totalorder %s23, 1
    %p282 = por %p280, %p281
    %p284 = scmp.ne.s32.totalorder %s267, %s283
    %p285 = scmp.eq.s32.totalorder %s23, 0
    %p286 = por %p284, %p285
    %p287 = scmp.le.s32.totalorder 1, %s17
    %p288 = scmp.lt.s32.totalorder %s17, 3
    %p289 = pnand %p287, %p288
    %p290 = pneg %p289
    // Predicated region
    $region9: #{_forward.1} parent=5 // pred_check
      _
    $region10: #{_forward.1} parent=5 // pred_check_branch
      %292 = sbr.rel (%p289) target = $region12
    $region11: #{_forward.1} parent=5 // pred_region
      %s293 = ssub.s32 %s17, 1
      // Predicated region
      $region13: #{_forward.1} parent=11 // pred_check
        %p294 = pneg %p64
      $region14: #{_forward.1} parent=11 // pred_check_branch
        %296 = sbr.rel (%p294) target = $region16
      $region15: #{_forward.1} parent=11 // pred_region
        _
      $region16: #{_forward.1} parent=11 // pred_fallthru
        _
      // Predicated region
      $region17: #{_forward.1} parent=11 // pred_check
        %p297 = pneg %p85
      $region18: #{_forward.1} parent=11 // pred_check_branch
        %299 = sbr.rel (%p297) target = $region20
      $region19: #{_forward.1} parent=11 // pred_region
        _
      $region20: #{_forward.1} parent=11 // pred_fallthru
        _
      // Predicated region
      $region21: #{_forward.1} parent=11 // pred_check
        %p300 = pneg %p106
      $region22: #{_forward.1} parent=11 // pred_check_branch
        %302 = sbr.rel (%p300) target = $region24
      $region23: #{_forward.1} parent=11 // pred_region
        _
      $region24: #{_forward.1} parent=11 // pred_fallthru
        _
      // Predicated region
      $region25: #{_forward.1} parent=11 // pred_check
        %p303 = pneg %p127
      $region26: #{_forward.1} parent=11 // pred_check_branch
        %305 = sbr.rel (%p303) target = $region28
      $region27: #{_forward.1} parent=11 // pred_region
        _
      $region28: #{_forward.1} parent=11 // pred_fallthru
        _
      // Predicated region
      $region29: #{_forward.1} parent=11 // pred_check
        %p306 = pneg %p148
      $region30: #{_forward.1} parent=11 // pred_check_branch
        %308 = sbr.rel (%p306) target = $region32
      $region31: #{_forward.1} parent=11 // pred_region
        _
      $region32: #{_forward.1} parent=11 // pred_fallthru
        _
      // Predicated region
      $region33: #{_forward.1} parent=11 // pred_check
        %p309 = pneg %p169
      $region34: #{_forward.1} parent=11 // pred_check_branch
        %311 = sbr.rel (%p309) target = $region36
      $region35: #{_forward.1} parent=11 // pred_region
        _
      $region36: #{_forward.1} parent=11 // pred_fallthru
        _
      // Predicated region
      $region37: #{_forward.1} parent=11 // pred_check
        %p312 = pneg %p190
      $region38: #{_forward.1} parent=11 // pred_check_branch
        %314 = sbr.rel (%p312) target = $region40
      $region39: #{_forward.1} parent=11 // pred_region
        _
      $region40: #{_forward.1} parent=11 // pred_fallthru
        _
      // Predicated region
      $region41: #{_forward.1} parent=11 // pred_check
        %p315 = pneg %p211
      $region42: #{_forward.1} parent=11 // pred_check_branch
        %317 = sbr.rel (%p315) target = $region44
      $region43: #{_forward.1} parent=11 // pred_region
        _
      $region44: #{_forward.1} parent=11 // pred_fallthru
        _
      // Predicated region
      $region45: #{_forward.1} parent=11 // pred_check
        %p318 = pneg %p232
      $region46: #{_forward.1} parent=11 // pred_check_branch
        %320 = sbr.rel (%p318) target = $region48
      $region47: #{_forward.1} parent=11 // pred_region
        _
      $region48: #{_forward.1} parent=11 // pred_fallthru
        _
      // Predicated region
      $region49: #{_forward.1} parent=11 // pred_check
        %p321 = pneg %p253
      $region50: #{_forward.1} parent=11 // pred_check_branch
        %323 = sbr.rel (%p321) target = $region52
      $region51: #{_forward.1} parent=11 // pred_region
        _
      $region52: #{_forward.1} parent=11 // pred_fallthru
        _
    $region12: #{_forward.1} parent=5 // pred_fallthru
      _
    %p324 = scmp.lt.s32.totalorder %s17, 2
    // Predicated region
    $region53: #{_forward.1} parent=5 // pred_check
      %p325 = pneg %p324
    $region54: #{_forward.1} parent=5 // pred_check_branch
      %327 = sbr.rel (%p325) target = $region56
    $region55: #{_forward.1} parent=5 // pred_region
      // Predicated region
      $region57: #{_forward.1} parent=55 // pred_check
        %p328 = pneg %p37
      $region58: #{_forward.1} parent=55 // pred_check_branch
        %330 = sbr.rel (%p328) target = $region60
      $region59: #{_forward.1} parent=55 // pred_region
        %p331 = scmp.lt.s32.totalorder %s17, 1
        %s332 = scalar_select %p331, %s17, 1
        %s333 = smul.addr %s332, 2
        %s334 = smul.addr %s333, 4
        %s335 = scalar_lea.vmem %s0, %s334
      $region60: #{_forward.1} parent=55 // pred_fallthru
        _
    $region56: #{_forward.1} parent=5 // pred_fallthru
      _
    %p336 = scmp.le.s32.totalorder 1, %s17
    %p337 = scmp.lt.s32.totalorder %s17, 3
    %p338 = pnand %p336, %p337
    %p339 = pneg %p338
    // Predicated region
    $region61: #{_forward.1} parent=5 // pred_check
      _
    $region62: #{_forward.1} parent=5 // pred_check_branch
      %341 = sbr.rel (%p338) target = $region64
    $region63: #{_forward.1} parent=5 // pred_region
      %s342 = ssub.s32 %s17, 1
      %p343 = scmp.lt.s32.totalorder %s22, 1
      %s344 = scalar_select %p343, %s22, 1
      %s345 = smul.addr %s344, 2
      %s346 = smul.addr %s345, 4
      %s347 = scalar_lea.vmem %s0, %s346
      %p348 = pneg %p43
      %p349 = pneg %p40
      %p350 = pneg %p64
      %p351 = pneg %p61
      %p352 = pneg %p85
      %p353 = pneg %p82
      %p354 = pneg %p106
      %p355 = pneg %p103
      %p356 = pneg %p127
      %p357 = pneg %p124
      %p358 = pneg %p148
      %p359 = pneg %p145
      %p360 = pneg %p169
      %p361 = pneg %p166
      %p362 = pneg %p190
      %p363 = pneg %p187
      %p364 = pneg %p211
      %p365 = pneg %p208
      %p366 = pneg %p232
      %p367 = pneg %p229
      %p368 = pneg %p253
      %p369 = pneg %p250
      %p370 = pneg %p279
      %p371 = pneg %p276
      %p372 = scmp.lt.s32.totalorder %s22, 1
      %s373 = scalar_select %p372, %s22, 1
      %s374 = smul.addr %s373, 8
      %s375 = scalar_lea.vmem %s11, %s374
      %p376 = scmp.lt.s32.totalorder %s22, 1
      %s377 = scalar_select %p376, %s22, 1
      %s378 = smul.addr %s377, 2
      %s379 = smul.addr %s378, 4
      %s380 = scalar_lea.vmem %s0, %s379
      %p381 = scmp.lt.s32.totalorder %s22, 1
      %s382 = scalar_select %p381, %s22, 1
      %s383 = smul.addr %s382, 8
      %s384 = scalar_lea.vmem %s11, %s383
      %vm386 = vcmask 486400
      %387 = vst.msk [vmem:[#allocation2] sm:$0xf] %vm386, 0
      %388 = vst.msk [vmem:[#allocation2 + $0x4] sm:$0xf] %vm386, 0
      %vm389 = vcmask 484352
      %390 = vst.msk [vmem:[#allocation2 + $0x8] sm:$0x3] %vm389, 0
      %vm391 = vcmask 846848
      %392 = vst.msk [vmem:[#allocation3] sm:$0xf] %vm391, 0
      %vm393 = vcmask 845824
      %vm394 = vsmask.f32 2304
      %vm395 = vmand %vm393, %vm394
      %v396 = vld [vmem:[#allocation3 + $0x4] sm:$0x7]
      %v397 = vsel %vm395, 0, %v396
      %398 = vst [vmem:[#allocation3 + $0x4] sm:$0x7] %v397
      %vm399 = vcmask 1043456
      %vm400 = vcmask 130052
      %vm401 = vmor %vm400, %vm399
      %402 = vst.msk [vmem:[#allocation4] sm:$0xff] %vm401, 0
      %vm403 = vcmask 1040384
      %vm404 = vsmask.f32 256
      %vm405 = vmand %vm403, %vm404
      %vm406 = vcmask 126980
      %vm407 = vsmask.f32 4352
      %vm408 = vmand %vm406, %vm407
      %vm409 = vmor %vm408, %vm405
      %v410 = vld [vmem:[#allocation4 + $0x8] sm:$0x11]
      %v411 = vsel %vm409, 0, %v410
      %412 = vst [vmem:[#allocation4 + $0x8] sm:$0x11] %v411
      %vm413 = vcmask 1043456
      %vm414 = vsmask.f32 3328
      %vm415 = vmand %vm413, %vm414
      %vm416 = vcmask 785412
      %vm417 = vsmask.f32 7424
      %vm418 = vmand %vm416, %vm417
      %vm419 = vmor %vm418, %vm415
      %v420 = vld [vmem:[#allocation5] sm:$0xff]
      %v421 = vsel %vm419, 0, %v420
      %422 = vst [vmem:[#allocation5] sm:$0xff] %v421
      %423 = vst [vmem:[#allocation6] sm:$0xff] 0
      %424 = vst [vmem:[#allocation6 + $0x8] sm:$0xff] 0
      %v425 = vld [vmem:[%s380] sm:$0xf]
      %v426 = vld [vmem:[%s380 + $0x4] sm:$0xf]
      %vm429 = vcmask 1044484
      %vm430 = vmor %vm403, %vm429
      %v431 = vrot.slane %v425, 7
      %v432 = vrot.slane %v431, 4
      %v433 = vrot.slane %v426, 7
      %v434 = vsel %vm430, %v432, %v433
      %v435 = vrot.slane %v433, 4
      %436 = vrot.lane.b32.xlu0 %v431, 6
      %v437 = vpop.permute.xlu0 %436
      %438 = vrot.lane.b32.xlu0 %v434, 6
      %v439 = vpop.permute.xlu0 %438
      %440 = vrot.lane.b32.xlu0 %v435, 6
      %v441 = vpop.permute.xlu0 %440
      %vm445 = vcmask 437297
      %446 = vst.msk [vmem:[#allocation2] sm:$0xe] %vm445, %v437
      %vm447 = vcmask 437296
      %448 = vst.msk [vmem:[#allocation2 + $0x4] sm:$0xf] %vm447, %v439
      %vm449 = vcmask 434224
      %450 = vst.msk [vmem:[#allocation2 + $0x8] sm:$0x1] %vm449, %v441
      %v451 = vld [vmem:[#allocation2] sm:$0xf]
      %v452 = vld [vmem:[#allocation2 + $0x4] sm:$0xf]
      %v453 = vld [vmem:[#allocation2 + $0x8] sm:$0x1]
      %v454 = vld [vmem:[%s1] sm:$0xf]
      %v455 = vld [vmem:[%s1 + $0x4] sm:$0xf]
      %v456 = vld [vmem:[%s1 + $0x8] sm:$0xf]
      %v457 = vld [vmem:[%s1 + $0xc] sm:$0xf]
      %v458 = vld [vmem:[%s1 + $0x10] sm:$0xf]
      %v459 = vld [vmem:[%s1 + $0x14] sm:$0xf]
      %v460 = vld [vmem:[%s1 + $0x18] sm:$0xf]
      %v461 = vld [vmem:[%s1 + $0x1c] sm:$0x3]
      %s462 = scalar_lea.vmem %s1, 32
      %v463 = vld [vmem:[%s462] sm:$0xf]
      %v464 = vld [vmem:[%s462 + $0x4] sm:$0xf]
      %v465 = vld [vmem:[%s462 + $0x8] sm:$0xf]
      %v466 = vld [vmem:[%s462 + $0xc] sm:$0xf]
      %v467 = vld [vmem:[%s462 + $0x10] sm:$0xf]
      %v468 = vld [vmem:[%s462 + $0x14] sm:$0xf]
      %v469 = vld [vmem:[%s462 + $0x18] sm:$0xf]
      %v470 = vld [vmem:[%s462 + $0x1c] sm:$0x3]
      %v474 = vunpack.c.l.b16 %v451
      %v475 = vunpack.c.l.b16 %v452
      %v476 = vunpack.c.l.b16 %v453
      %v477 = vpack.c.b16 %v475, %v474
      %v478 = vpack.c.b16 %v476, %v476
      %v480 = vshrl.u32 %v477, 16
      %v482 = vshll.u32 %v477, 16
      %v484 = vrot.slane %v482, 1
      %v485 = vor.u32 %v480, %v484
      %v487 = vshll.u32 %v478, 16
      %v489 = vrot.slane %v487, 1
      %v490 = vsel %vm417, %v485, %v489
      %v491 = vshrl.u32 %v478, 16
      %v501 = vunpack.c.l.b16 %v463
      %v502 = vunpack.c.l.b16 %v464
      %v503 = vunpack.c.l.b16 %v465
      %v504 = vunpack.c.l.b16 %v466
      %v505 = vunpack.c.l.b16 %v467
      %v506 = vunpack.c.l.b16 %v468
      %v507 = vunpack.c.l.b16 %v469
      %v508 = vunpack.c.l.b16 %v470
      %v509 = vpack.c.b16 %v502, %v501
      %v510 = vpack.c.b16 %v504, %v503
      %v511 = vpack.c.b16 %v506, %v505
      %v512 = vpack.c.b16 %v508, %v507
      %vm516 = vcmask 490496
      %v518 = vsel %vm516, %v490, 0
      %v521 = vsel %vm516, %v491, 0
      %vm523 = vcmask 1045504
      %v525 = vsel %vm523, %v512, 0
      %527 = vmatprep.subr.bf16.mxu0 0
      %528 = vmatpush1.bf16.msra.mxu0 0
      %529 = vmatprep.subr.bf16.mxu0 0
      %530 = vmatpush1.bf16.msra.mxu0 0
      %531 = vmatprep.subr.bf16.mxu0 0
      %532 = vmatpush1.bf16.msra.mxu0 0
      %533 = vmatprep.subr.bf16.mxu0 0
      %534 = vmatpush1.bf16.msra.mxu0 0
      %535 = vmatprep.subr.bf16.mxu0 0
      %536 = vmatpush1.bf16.msra.mxu0 %v525
      %537 = vmatprep.subr.bf16.mxu0 0
      %538 = vmatpush1.bf16.msra.mxu0 %v511
      %539 = vmatprep.subr.bf16.mxu0 0
      %540 = vmatpush1.bf16.msra.mxu0 %v510
      %541 = vmatprep.subr.bf16.mxu0 0
      %542 = vmatpush1.bf16.msra.mxu0 %v509
      %543 = vmatprep.subr.bf16.mxu0 0
      %544 = vmatpush2.bf16.msra.mxu0 0
      %545 = vmatprep.subr.bf16.mxu0 0
      %546 = vmatpush2.bf16.msra.mxu0 0
      %547 = vmatprep.subr.bf16.mxu0 0
      %548 = vmatpush2.bf16.msra.mxu0 0
      %549 = vmatprep.subr.bf16.mxu0 0
      %550 = vmatpush2.bf16.msra.mxu0 0
      %551 = vmatprep.subr.bf16.mxu0 0
      %552 = vmatpush2.bf16.msra.mxu0 0
      %553 = vmatprep.subr.bf16.mxu0 0
      %554 = vmatpush2.bf16.msra.mxu0 0
      %555 = vmatprep.subr.bf16.mxu0 0
      %556 = vmatpush2.bf16.msra.mxu0 0
      %557 = vmatprep.subr.bf16.mxu0 0
      %558 = vmatpush2.bf16.msra.mxu0 0
      %559 = vmatprep.mubr.bf16.mxu0 0
      %560 = vmatmul.mubr.bf16.gmra.mxu0 %v518
      %v561 = vpop.f32.mrf.mxu0
      %v562 = vadd.f32 0.0, %v561
      %v563 = vpop.f32.mrf.mxu0
      %v564 = vpop.f32.mrf.mxu0
      %v565 = vadd.f32 0.0, %v564
      %v566 = vpop.f32.mrf.mxu0
      %567 = vmatprep.mubr.bf16.mxu0 0
      %568 = vmatmul.mubr.bf16.gmra.mxu0 %v521
      %v569 = vpop.f32.mrf.mxu0
      %v570 = vadd.f32 0.0, %v569
      %v571 = vpop.f32.mrf.mxu0
      %v572 = vpop.f32.mrf.mxu0
      %v573 = vpop.f32.mrf.mxu0
      %574 = vdwg.mxu0
      %v583 = vunpack.c.l.b16 %v454
      %v584 = vunpack.c.l.b16 %v455
      %v585 = vunpack.c.l.b16 %v456
      %v586 = vunpack.c.l.b16 %v457
      %v587 = vunpack.c.l.b16 %v458
      %v588 = vunpack.c.l.b16 %v459
      %v589 = vunpack.c.l.b16 %v460
      %v590 = vunpack.c.l.b16 %v461
      %v591 = vpack.c.b16 %v584, %v583
      %v592 = vpack.c.b16 %v586, %v585
      %v593 = vpack.c.b16 %v588, %v587
      %v594 = vpack.c.b16 %v590, %v589
      %v598 = vsel %vm516, %v477, 0
      %v600 = vsel %vm516, %v478, 0
      %v603 = vsel %vm523, %v594, 0
      %605 = vmatprep.subr.bf16.mxu0 0
      %606 = vmatpush1.bf16.msra.mxu0 0
      %607 = vmatprep.subr.bf16.mxu0 0
      %608 = vmatpush1.bf16.msra.mxu0 0
      %609 = vmatprep.subr.bf16.mxu0 0
      %610 = vmatpush1.bf16.msra.mxu0 0
      %611 = vmatprep.subr.bf16.mxu0 0
      %612 = vmatpush1.bf16.msra.mxu0 0
      %613 = vmatprep.subr.bf16.mxu0 0
      %614 = vmatpush1.bf16.msra.mxu0 %v603
      %615 = vmatprep.subr.bf16.mxu0 0
      %616 = vmatpush1.bf16.msra.mxu0 %v593
      %617 = vmatprep.subr.bf16.mxu0 0
      %618 = vmatpush1.bf16.msra.mxu0 %v592
      %619 = vmatprep.subr.bf16.mxu0 0
      %620 = vmatpush1.bf16.msra.mxu0 %v591
      %621 = vmatprep.subr.bf16.mxu0 0
      %622 = vmatpush2.bf16.msra.mxu0 0
      %623 = vmatprep.subr.bf16.mxu0 0
      %624 = vmatpush2.bf16.msra.mxu0 0
      %625 = vmatprep.subr.bf16.mxu0 0
      %626 = vmatpush2.bf16.msra.mxu0 0
      %627 = vmatprep.subr.bf16.mxu0 0
      %628 = vmatpush2.bf16.msra.mxu0 0
      %629 = vmatprep.subr.bf16.mxu0 0
      %630 = vmatpush2.bf16.msra.mxu0 0
      %631 = vmatprep.subr.bf16.mxu0 0
      %632 = vmatpush2.bf16.msra.mxu0 0
      %633 = vmatprep.subr.bf16.mxu0 0
      %634 = vmatpush2.bf16.msra.mxu0 0
      %635 = vmatprep.subr.bf16.mxu0 0
      %636 = vmatpush2.bf16.msra.mxu0 0
      %637 = vmatprep.mubr.bf16.mxu0 0
      %638 = vmatmul.mubr.bf16.gmra.mxu0 %v598
      %v639 = vpop.f32.mrf.mxu0
      %v640 = vadd.f32 %v562, %v639
      %v641 = vpop.f32.mrf.mxu0
      %v642 = vpop.f32.mrf.mxu0
      %v643 = vadd.f32 %v565, %v642
      %v644 = vpop.f32.mrf.mxu0
      %645 = vmatprep.mubr.bf16.mxu0 0
      %646 = vmatmul.mubr.bf16.gmra.mxu0 %v600
      %v647 = vpop.f32.mrf.mxu0
      %v648 = vadd.f32 %v570, %v647
      %v649 = vpop.f32.mrf.mxu0
      %v650 = vpop.f32.mrf.mxu0
      %v651 = vpop.f32.mrf.mxu0
      %652 = vdwg.mxu0
      %v653 = vld [vmem:[#allocation2] sm:$0xe]
      %v654 = vld [vmem:[#allocation2 + $0x8] sm:$0x3]
      %s655 = scalar_lea.vmem %s1, 64
      %v656 = vld [vmem:[%s655] sm:$0xf]
      %v657 = vld [vmem:[%s655 + $0x4] sm:$0xf]
      %v658 = vld [vmem:[%s655 + $0x8] sm:$0xf]
      %v659 = vld [vmem:[%s655 + $0xc] sm:$0xf]
      %v660 = vld [vmem:[%s655 + $0x10] sm:$0xf]
      %v661 = vld [vmem:[%s655 + $0x14] sm:$0xf]
      %v662 = vld [vmem:[%s655 + $0x18] sm:$0xf]
      %v663 = vld [vmem:[%s655 + $0x1c] sm:$0x3]
      %v666 = vunpack.c.l.b16 %v653
      %v667 = vunpack.c.l.b16 %v654
      %v668 = vpack.c.b16 %v475, %v666
      %v669 = vpack.c.b16 %v667, %v667
      %vm670 = vcmask 1046528
      %v671 = vrot.slane %v668, 1
      %v672 = vrot.slane %v669, 1
      %v673 = vsel %vm670, %v671, %v672
      %v682 = vunpack.c.l.b16 %v656
      %v683 = vunpack.c.l.b16 %v657
      %v684 = vunpack.c.l.b16 %v658
      %v685 = vunpack.c.l.b16 %v659
      %v686 = vunpack.c.l.b16 %v660
      %v687 = vunpack.c.l.b16 %v661
      %v688 = vunpack.c.l.b16 %v662
      %v689 = vunpack.c.l.b16 %v663
      %v690 = vpack.c.b16 %v683, %v682
      %v691 = vpack.c.b16 %v685, %v684
      %v692 = vpack.c.b16 %v687, %v686
      %v693 = vpack.c.b16 %v689, %v688
      %v698 = vsel %vm516, %v673, 0
      %v701 = vsel %vm516, %v672, 0
      %v704 = vsel %vm523, %v693, 0
      %706 = vmatprep.subr.bf16.mxu0 0
      %707 = vmatpush1.bf16.msra.mxu0 0
      %708 = vmatprep.subr.bf16.mxu0 0
      %709 = vmatpush1.bf16.msra.mxu0 0
      %710 = vmatprep.subr.bf16.mxu0 0
      %711 = vmatpush1.bf16.msra.mxu0 0
      %712 = vmatprep.subr.bf16.mxu0 0
      %713 = vmatpush1.bf16.msra.mxu0 0
      %714 = vmatprep.subr.bf16.mxu0 0
      %715 = vmatpush1.bf16.msra.mxu0 %v704
      %716 = vmatprep.subr.bf16.mxu0 0
      %717 = vmatpush1.bf16.msra.mxu0 %v692
      %718 = vmatprep.subr.bf16.mxu0 0
      %719 = vmatpush1.bf16.msra.mxu0 %v691
      %720 = vmatprep.subr.bf16.mxu0 0
      %721 = vmatpush1.bf16.msra.mxu0 %v690
      %722 = vmatprep.subr.bf16.mxu0 0
      %723 = vmatpush2.bf16.msra.mxu0 0
      %724 = vmatprep.subr.bf16.mxu0 0
      %725 = vmatpush2.bf16.msra.mxu0 0
      %726 = vmatprep.subr.bf16.mxu0 0
      %727 = vmatpush2.bf16.msra.mxu0 0
      %728 = vmatprep.subr.bf16.mxu0 0
      %729 = vmatpush2.bf16.msra.mxu0 0
      %730 = vmatprep.subr.bf16.mxu0 0
      %731 = vmatpush2.bf16.msra.mxu0 0
      %732 = vmatprep.subr.bf16.mxu0 0
      %733 = vmatpush2.bf16.msra.mxu0 0
      %734 = vmatprep.subr.bf16.mxu0 0
      %735 = vmatpush2.bf16.msra.mxu0 0
      %736 = vmatprep.subr.bf16.mxu0 0
      %737 = vmatpush2.bf16.msra.mxu0 0
      %738 = vmatprep.mubr.bf16.mxu0 0
      %739 = vmatmul.mubr.bf16.gmra.mxu0 %v698
      %v740 = vpop.f32.mrf.mxu0
      %v741 = vadd.f32 0.0, %v740
      %v742 = vpop.f32.mrf.mxu0
      %v743 = vpop.f32.mrf.mxu0
      %v744 = vadd.f32 0.0, %v743
      %v745 = vpop.f32.mrf.mxu0
      %746 = vmatprep.mubr.bf16.mxu0 0
      %747 = vmatmul.mubr.bf16.gmra.mxu0 %v701
      %v748 = vpop.f32.mrf.mxu0
      %v749 = vadd.f32 0.0, %v748
      %v750 = vpop.f32.mrf.mxu0
      %v751 = vpop.f32.mrf.mxu0
      %v752 = vpop.f32.mrf.mxu0
      %753 = vdwg.mxu0
      %v754 = vadd.f32 %v640, %v741
      %v755 = vadd.f32 %v643, %v744
      %v756 = vadd.f32 %v648, %v749
      %s757 = scalar_lea.vmem %s1, 96
      %v758 = vld [vmem:[%s757] sm:$0xf]
      %v759 = vld [vmem:[%s757 + $0x4] sm:$0xf]
      %v760 = vld [vmem:[%s757 + $0x8] sm:$0xf]
      %v761 = vld [vmem:[%s757 + $0xc] sm:$0xf]
      %v762 = vld [vmem:[%s757 + $0x10] sm:$0xf]
      %v763 = vld [vmem:[%s757 + $0x14] sm:$0xf]
      %v764 = vld [vmem:[%s757 + $0x18] sm:$0xf]
      %v765 = vld [vmem:[%s757 + $0x1c] sm:$0x3]
      %vm766 = vsmask.f32 6400
      %v768 = vshrl.u32 %v668, 16
      %v770 = vrot.slane %v768, 1
      %v771 = vshll.u32 %v668, 16
      %v773 = vrot.slane %v771, 2
      %v774 = vor.u32 %v770, %v773
      %v776 = vshrl.u32 %v669, 16
      %v778 = vrot.slane %v776, 1
      %v779 = vshll.u32 %v669, 16
      %v781 = vrot.slane %v779, 2
      %v782 = vor.u32 %v778, %v781
      %v783 = vsel %vm766, %v774, %v782
      %v792 = vunpack.c.l.b16 %v758
      %v793 = vunpack.c.l.b16 %v759
      %v794 = vunpack.c.l.b16 %v760
      %v795 = vunpack.c.l.b16 %v761
      %v796 = vunpack.c.l.b16 %v762
      %v797 = vunpack.c.l.b16 %v763
      %v798 = vunpack.c.l.b16 %v764
      %v799 = vunpack.c.l.b16 %v765
      %v800 = vpack.c.b16 %v793, %v792
      %v801 = vpack.c.b16 %v795, %v794
      %v802 = vpack.c.b16 %v797, %v796
      %v803 = vpack.c.b16 %v799, %v798
      %v808 = vsel %vm516, %v783, 0
      %v811 = vsel %vm516, %v778, 0
      %v814 = vsel %vm523, %v803, 0
      %816 = vmatprep.subr.bf16.mxu0 0
      %817 = vmatpush1.bf16.msra.mxu0 0
      %818 = vmatprep.subr.bf16.mxu0 0
      %819 = vmatpush1.bf16.msra.mxu0 0
      %820 = vmatprep.subr.bf16.mxu0 0
      %821 = vmatpush1.bf16.msra.mxu0 0
      %822 = vmatprep.subr.bf16.mxu0 0
      %823 = vmatpush1.bf16.msra.mxu0 0
      %824 = vmatprep.subr.bf16.mxu0 0
      %825 = vmatpush1.bf16.msra.mxu0 %v814
      %826 = vmatprep.subr.bf16.mxu0 0
      %827 = vmatpush1.bf16.msra.mxu0 %v802
      %828 = vmatprep.subr.bf16.mxu0 0
      %829 = vmatpush1.bf16.msra.mxu0 %v801
      %830 = vmatprep.subr.bf16.mxu0 0
      %831 = vmatpush1.bf16.msra.mxu0 %v800
      %832 = vmatprep.subr.bf16.mxu0 0
      %833 = vmatpush2.bf16.msra.mxu0 0
      %834 = vmatprep.subr.bf16.mxu0 0
      %835 = vmatpush2.bf16.msra.mxu0 0
      %836 = vmatprep.subr.bf16.mxu0 0
      %837 = vmatpush2.bf16.msra.mxu0 0
      %838 = vmatprep.subr.bf16.mxu0 0
      %839 = vmatpush2.bf16.msra.mxu0 0
      %840 = vmatprep.subr.bf16.mxu0 0
      %841 = vmatpush2.bf16.msra.mxu0 0
      %842 = vmatprep.subr.bf16.mxu0 0
      %843 = vmatpush2.bf16.msra.mxu0 0
      %844 = vmatprep.subr.bf16.mxu0 0
      %845 = vmatpush2.bf16.msra.mxu0 0
      %846 = vmatprep.subr.bf16.mxu0 0
      %847 = vmatpush2.bf16.msra.mxu0 0
      %848 = vmatprep.mubr.bf16.mxu0 0
      %849 = vmatmul.mubr.bf16.gmra.mxu0 %v808
      %v850 = vpop.f32.mrf.mxu0
      %v851 = vadd.f32 0.0, %v850
      %v852 = vpop.f32.mrf.mxu0
      %v853 = vpop.f32.mrf.mxu0
      %v854 = vadd.f32 0.0, %v853
      %v855 = vpop.f32.mrf.mxu0
      %856 = vmatprep.mubr.bf16.mxu0 0
      %857 = vmatmul.mubr.bf16.gmra.mxu0 %v811
      %v858 = vpop.f32.mrf.mxu0
      %v859 = vadd.f32 0.0, %v858
      %v860 = vpop.f32.mrf.mxu0
      %v861 = vpop.f32.mrf.mxu0
      %v862 = vpop.f32.mrf.mxu0
      %863 = vdwg.mxu0
      %v864 = vadd.f32 %v754, %v851
      %v865 = vadd.f32 %v755, %v854
      %v866 = vadd.f32 %v756, %v859
      %v867 = vlaneseq
      %v868 = vshrl.u32 %v867, 7
      %v869 = vadd.s32 %v868, 8
      %v870 = vlaneseq
      %v871 = vand.u32 %v870, 127
      %v872 = vmul.u32 %v868, 2
      %v873 = vmul.u32 %v869, 2
      %vm874 = vcmp.eq.s32.totalorder %v871, %v872
      %vm875 = vcmp.eq.s32.totalorder %v871, %v873
      %v876 = vsel %vm874, 1.0, 0.0
      %v877 = vsel %vm875, 1.0, 0.0
      %v878 = vld [vmem:[%s2] sm:$0x1]
      %v880 = vlaneseq
      %v881 = vshrl.u32 %v880, 7
      %v882 = vsub.s32 0, %v881
      %v883 = vrot.slane %v878, %v882
      %vm885 = vcmask 138240
      %v887 = vsel %vm885, %v876, 0
      %v890 = vsel %vm885, %v877, 0
      %vm892 = vcmask 1040384
      %v894 = vsel %vm892, %v866, 0
      %896 = vmatprep.subr.mxu0 0.0
      %897 = vmatpush1.msra.mxu0 0.0
      %898 = vmatprep.subr.mxu0 0.0
      %899 = vmatpush1.msra.mxu0 0.0
      %900 = vmatprep.subr.mxu0 0.0
      %901 = vmatpush1.msra.mxu0 0.0
      %902 = vmatprep.subr.mxu0 0.0
      %903 = vmatpush1.msra.mxu0 0.0
      %904 = vmatprep.subr.mxu0 0.0
      %905 = vmatpush1.msra.mxu0 0.0
      %906 = vmatprep.subr.mxu0 0.0
      %907 = vmatpush1.msra.mxu0 0.0
      %908 = vmatprep.subr.mxu0 0.0
      %909 = vmatpush1.msra.mxu0 0.0
      %910 = vmatprep.subr.mxu0 0.0
      %911 = vmatpush1.msra.mxu0 0.0
      %912 = vmatprep.subr.mxu0 0.0
      %913 = vmatpush1.msra.mxu0 0.0
      %914 = vmatprep.subr.mxu0 0.0
      %915 = vmatpush1.msra.mxu0 0.0
      %916 = vmatprep.subr.mxu0 0.0
      %917 = vmatpush1.msra.mxu0 0.0
      %918 = vmatprep.subr.mxu0 0.0
      %919 = vmatpush1.msra.mxu0 0.0
      %920 = vmatprep.subr.mxu0 0.0
      %921 = vmatpush1.msra.mxu0 0.0
      %922 = vmatprep.subr.mxu0 0.0
      %923 = vmatpush1.msra.mxu0 %v894
      %924 = vmatprep.subr.mxu0 0.0
      %925 = vmatpush1.msra.mxu0 %v865
      %926 = vmatprep.subr.mxu0 0.0
      %927 = vmatpush1.msra.mxu0 %v864
      %928 = vmatprep.subr.mxu0 0.0
      %929 = vmatpush2.msra.mxu0 0.0
      %930 = vmatprep.subr.mxu0 0.0
      %931 = vmatpush2.msra.mxu0 0.0
      %932 = vmatprep.subr.mxu0 0.0
      %933 = vmatpush2.msra.mxu0 0.0
      %934 = vmatprep.subr.mxu0 0.0
      %935 = vmatpush2.msra.mxu0 0.0
      %936 = vmatprep.subr.mxu0 0.0
      %937 = vmatpush2.msra.mxu0 0.0
      %938 = vmatprep.subr.mxu0 0.0
      %939 = vmatpush2.msra.mxu0 0.0
      %940 = vmatprep.subr.mxu0 0.0
      %941 = vmatpush2.msra.mxu0 0.0
      %942 = vmatprep.subr.mxu0 0.0
      %943 = vmatpush2.msra.mxu0 0.0
      %944 = vmatprep.subr.mxu0 0.0
      %945 = vmatpush2.msra.mxu0 0.0
      %946 = vmatprep.subr.mxu0 0.0
      %947 = vmatpush2.msra.mxu0 0.0
      %948 = vmatprep.subr.mxu0 0.0
      %949 = vmatpush2.msra.mxu0 0.0
      %950 = vmatprep.subr.mxu0 0.0
      %951 = vmatpush2.msra.mxu0 0.0
      %952 = vmatprep.subr.mxu0 0.0
      %953 = vmatpush2.msra.mxu0 0.0
      %954 = vmatprep.subr.mxu0 0.0
      %955 = vmatpush2.msra.mxu0 0.0
      %956 = vmatprep.subr.mxu0 0.0
      %957 = vmatpush2.msra.mxu0 0.0
      %958 = vmatprep.subr.mxu0 0.0
      %959 = vmatpush2.msra.mxu0 0.0
      %960 = vmatprep.mubr.f32.mxu0 0.0
      %961 = vmatmul.mubr.f32.gmra.mxu0 %v887
      %v962 = vpop.f32.mrf.mxu0
      %v963 = vadd.f32 %v883, %v962
      %v964 = vpop.f32.mrf.mxu0
      %965 = vmatprep.mubr.f32.mxu0 0.0
      %966 = vmatmul.mubr.f32.gmra.mxu0 %v890
      %v967 = vpop.f32.mrf.mxu0
      %v968 = vadd.f32 %v883, %v967
      %v969 = vpop.f32.mrf.mxu0
      %970 = vdwg.mxu0
      %vm971 = vcmp.ge.f32.partialorder %v963, 0.0
      %vm972 = vcmp.ge.f32.partialorder %v968, 0.0
      %v973 = vmul.f32 %v963, 0.2
      %v974 = vmul.f32 %v968, 0.2
      %v975 = vsel %vm971, %v963, %v973
      %v976 = vsel %vm972, %v968, %v974
      %v977 = vpack.c.bf16 %v976, %v975
      %v979 = vunpack.c.l.b16 %v977
      %v980 = vunpack.c.h.b16 %v977
      %v981 = vpack.c.b16 %v979, %v979
      %v982 = vpack.c.b16 %v980, %v980
      %v983 = vrot.slane %v981, 7
      %v984 = vrot.slane %v983, 4
      %v985 = vrot.slane %v982, 7
      %v986 = vsel %vm430, %v984, %v985
      %987 = vrot.lane.b32.xlu0 %v983, 16
      %v988 = vpop.permute.xlu0 %987
      %989 = vrot.lane.b32.xlu0 %v986, 16
      %v990 = vpop.permute.xlu0 %989
      %vm993 = vcmask 715905
      %994 = vst.msk [vmem:[#allocation3] sm:$0xe] %vm993, %v988
      %vm995 = vcmask 713856
      %vm996 = vsmask.f32 1280
      %vm997 = vmand %vm995, %vm996
      %v998 = vld [vmem:[#allocation3 + $0x4] sm:$0x3]
      %v999 = vsel %vm997, %v990, %v998
      %1000 = vst [vmem:[#allocation3 + $0x4] sm:$0x3] %v999
      %v1001 = vld [vmem:[#allocation3] sm:$0xf]
      %v1002 = vld [vmem:[#allocation3 + $0x4] sm:$0x1]
      %v1003 = vld [vmem:[%s3] sm:$0xf]
      %v1004 = vld [vmem:[%s3 + $0x4] sm:$0xf]
      %v1005 = vld [vmem:[%s3 + $0x8] sm:$0xf]
      %v1006 = vld [vmem:[%s3 + $0xc] sm:$0xf]
      %v1007 = vld [vmem:[%s3 + $0x10] sm:$0xf]
      %v1008 = vld [vmem:[%s3 + $0x14] sm:$0xf]
      %v1009 = vld [vmem:[%s3 + $0x18] sm:$0xf]
      %v1010 = vld [vmem:[%s3 + $0x1c] sm:$0xf]
      %v1011 = vld [vmem:[%s3 + $0x20] sm:$0xf]
      %v1012 = vld [vmem:[%s3 + $0x24] sm:$0xf]
      %v1013 = vld [vmem:[%s3 + $0x28] sm:$0xf]
      %v1014 = vld [vmem:[%s3 + $0x2c] sm:$0xf]
      %v1015 = vld [vmem:[%s3 + $0x30] sm:$0xf]
      %v1016 = vld [vmem:[#allocation3 + $0x4] sm:$0x3]
      %s1017 = scalar_lea.vmem %s3, 52
      %v1018 = vld [vmem:[%s1017] sm:$0xf]
      %v1019 = vld [vmem:[%s1017 + $0x4] sm:$0xf]
      %v1020 = vld [vmem:[%s1017 + $0x8] sm:$0xf]
      %v1021 = vld [vmem:[%s1017 + $0xc] sm:$0xf]
      %v1022 = vld [vmem:[%s1017 + $0x10] sm:$0xf]
      %v1023 = vld [vmem:[%s1017 + $0x14] sm:$0xf]
      %v1024 = vld [vmem:[%s1017 + $0x18] sm:$0xf]
      %v1025 = vld [vmem:[%s1017 + $0x1c] sm:$0xf]
      %v1026 = vld [vmem:[%s1017 + $0x20] sm:$0xf]
      %v1027 = vld [vmem:[%s1017 + $0x24] sm:$0xf]
      %v1028 = vld [vmem:[%s1017 + $0x28] sm:$0xf]
      %v1029 = vld [vmem:[%s1017 + $0x2c] sm:$0xf]
      %v1030 = vld [vmem:[%s1017 + $0x30] sm:$0xf]
      %v1033 = vunpack.c.l.b16 %v1001
      %v1034 = vunpack.c.l.b16 %v1016
      %v1035 = vpack.c.b16 %v1034, %v1033
      %v1037 = vshrl.u32 %v1035, 16
      %v1039 = vshll.u32 %v1035, 16
      %v1041 = vrot.slane %v1039, 1
      %v1042 = vor.u32 %v1037, %v1041
      %v1056 = vunpack.c.l.b16 %v1018
      %v1057 = vunpack.c.l.b16 %v1019
      %v1058 = vunpack.c.l.b16 %v1020
      %v1059 = vunpack.c.l.b16 %v1021
      %v1060 = vunpack.c.l.b16 %v1022
      %v1061 = vunpack.c.l.b16 %v1023
      %v1062 = vunpack.c.l.b16 %v1024
      %v1063 = vunpack.c.l.b16 %v1025
      %v1064 = vunpack.c.l.b16 %v1026
      %v1065 = vunpack.c.l.b16 %v1027
      %v1066 = vunpack.c.l.b16 %v1028
      %v1067 = vunpack.c.l.b16 %v1029
      %v1068 = vunpack.c.l.b16 %v1030
      %v1069 = vpack.c.b16 %v1057, %v1056
      %v1070 = vpack.c.b16 %v1059, %v1058
      %v1071 = vpack.c.b16 %v1061, %v1060
      %v1072 = vpack.c.b16 %v1063, %v1062
      %v1073 = vpack.c.b16 %v1065, %v1064
      %v1074 = vpack.c.b16 %v1067, %v1066
      %v1075 = vpack.c.b16 %v1068, %v1068
      %vm1082 = vcmask 850944
      %v1084 = vsel %vm1082, %v1042, 0
      %v1087 = vsel %vm399, %v1075, 0
      %1089 = vmatprep.subr.bf16.mxu0 0
      %1090 = vmatpush1.bf16.msra.mxu0 0
      %1091 = vmatprep.subr.bf16.mxu0 0
      %1092 = vmatpush1.bf16.msra.mxu0 %v1087
      %1093 = vmatprep.subr.bf16.mxu0 0
      %1094 = vmatpush1.bf16.msra.mxu0 %v1074
      %1095 = vmatprep.subr.bf16.mxu0 0
      %1096 = vmatpush1.bf16.msra.mxu0 %v1073
      %1097 = vmatprep.subr.bf16.mxu0 0
      %1098 = vmatpush1.bf16.msra.mxu0 %v1072
      %1099 = vmatprep.subr.bf16.mxu0 0
      %1100 = vmatpush1.bf16.msra.mxu0 %v1071
      %1101 = vmatprep.subr.bf16.mxu0 0
      %1102 = vmatpush1.bf16.msra.mxu0 %v1070
      %1103 = vmatprep.subr.bf16.mxu0 0
      %1104 = vmatpush1.bf16.msra.mxu0 %v1069
      %1105 = vmatprep.subr.bf16.mxu0 0
      %1106 = vmatpush2.bf16.msra.mxu0 0
      %1107 = vmatprep.subr.bf16.mxu0 0
      %1108 = vmatpush2.bf16.msra.mxu0 0
      %1109 = vmatprep.subr.bf16.mxu0 0
      %1110 = vmatpush2.bf16.msra.mxu0 0
      %1111 = vmatprep.subr.bf16.mxu0 0
      %1112 = vmatpush2.bf16.msra.mxu0 0
      %1113 = vmatprep.subr.bf16.mxu0 0
      %1114 = vmatpush2.bf16.msra.mxu0 0
      %1115 = vmatprep.subr.bf16.mxu0 0
      %1116 = vmatpush2.bf16.msra.mxu0 0
      %1117 = vmatprep.subr.bf16.mxu0 0
      %1118 = vmatpush2.bf16.msra.mxu0 0
      %1119 = vmatprep.subr.bf16.mxu0 0
      %1120 = vmatpush2.bf16.msra.mxu0 0
      %1121 = vmatprep.mubr.bf16.mxu0 0
      %1122 = vmatmul.mubr.bf16.gmra.mxu0 %v1084
      %v1123 = vpop.f32.mrf.mxu0
      %v1124 = vadd.f32 0.0, %v1123
      %v1125 = vpop.f32.mrf.mxu0
      %v1126 = vpop.f32.mrf.mxu0
      %v1127 = vadd.f32 0.0, %v1126
      %v1128 = vpop.f32.mrf.mxu0
      %1129 = vdwg.mxu0
      %v1131 = vunpack.c.l.b16 %v1002
      %v1132 = vpack.c.b16 %v1131, %v1033
      %v1146 = vunpack.c.l.b16 %v1003
      %v1147 = vunpack.c.l.b16 %v1004
      %v1148 = vunpack.c.l.b16 %v1005
      %v1149 = vunpack.c.l.b16 %v1006
      %v1150 = vunpack.c.l.b16 %v1007
      %v1151 = vunpack.c.l.b16 %v1008
      %v1152 = vunpack.c.l.b16 %v1009
      %v1153 = vunpack.c.l.b16 %v1010
      %v1154 = vunpack.c.l.b16 %v1011
      %v1155 = vunpack.c.l.b16 %v1012
      %v1156 = vunpack.c.l.b16 %v1013
      %v1157 = vunpack.c.l.b16 %v1014
      %v1158 = vunpack.c.l.b16 %v1015
      %v1159 = vpack.c.b16 %v1147, %v1146
      %v1160 = vpack.c.b16 %v1149, %v1148
      %v1161 = vpack.c.b16 %v1151, %v1150
      %v1162 = vpack.c.b16 %v1153, %v1152
      %v1163 = vpack.c.b16 %v1155, %v1154
      %v1164 = vpack.c.b16 %v1157, %v1156
      %v1165 = vpack.c.b16 %v1158, %v1158
      %v1173 = vsel %vm1082, %v1132, 0
      %v1176 = vsel %vm399, %v1165, 0
      %1178 = vmatprep.subr.bf16.mxu0 0
      %1179 = vmatpush1.bf16.msra.mxu0 0
      %1180 = vmatprep.subr.bf16.mxu0 0
      %1181 = vmatpush1.bf16.msra.mxu0 %v1176
      %1182 = vmatprep.subr.bf16.mxu0 0
      %1183 = vmatpush1.bf16.msra.mxu0 %v1164
      %1184 = vmatprep.subr.bf16.mxu0 0
      %1185 = vmatpush1.bf16.msra.mxu0 %v1163
      %1186 = vmatprep.subr.bf16.mxu0 0
      %1187 = vmatpush1.bf16.msra.mxu0 %v1162
      %1188 = vmatprep.subr.bf16.mxu0 0
      %1189 = vmatpush1.bf16.msra.mxu0 %v1161
      %1190 = vmatprep.subr.bf16.mxu0 0
      %1191 = vmatpush1.bf16.msra.mxu0 %v1160
      %1192 = vmatprep.subr.bf16.mxu0 0
      %1193 = vmatpush1.bf16.msra.mxu0 %v1159
      %1194 = vmatprep.subr.bf16.mxu0 0
      %1195 = vmatpush2.bf16.msra.mxu0 0
      %1196 = vmatprep.subr.bf16.mxu0 0
      %1197 = vmatpush2.bf16.msra.mxu0 0
      %1198 = vmatprep.subr.bf16.mxu0 0
      %1199 = vmatpush2.bf16.msra.mxu0 0
      %1200 = vmatprep.subr.bf16.mxu0 0
      %1201 = vmatpush2.bf16.msra.mxu0 0
      %1202 = vmatprep.subr.bf16.mxu0 0
      %1203 = vmatpush2.bf16.msra.mxu0 0
      %1204 = vmatprep.subr.bf16.mxu0 0
      %1205 = vmatpush2.bf16.msra.mxu0 0
      %1206 = vmatprep.subr.bf16.mxu0 0
      %1207 = vmatpush2.bf16.msra.mxu0 0
      %1208 = vmatprep.subr.bf16.mxu0 0
      %1209 = vmatpush2.bf16.msra.mxu0 0
      %1210 = vmatprep.mubr.bf16.mxu0 0
      %1211 = vmatmul.mubr.bf16.gmra.mxu0 %v1173
      %v1212 = vpop.f32.mrf.mxu0
      %v1213 = vadd.f32 %v1124, %v1212
      %v1214 = vpop.f32.mrf.mxu0
      %v1215 = vpop.f32.mrf.mxu0
      %v1216 = vadd.f32 %v1127, %v1215
      %v1217 = vpop.f32.mrf.mxu0
      %1218 = vdwg.mxu0
      %v1219 = vld [vmem:[#allocation3] sm:$0xe]
      %s1220 = scalar_lea.vmem %s3, 104
      %v1221 = vld [vmem:[%s1220] sm:$0xf]
      %v1222 = vld [vmem:[%s1220 + $0x4] sm:$0xf]
      %v1223 = vld [vmem:[%s1220 + $0x8] sm:$0xf]
      %v1224 = vld [vmem:[%s1220 + $0xc] sm:$0xf]
      %v1225 = vld [vmem:[%s1220 + $0x10] sm:$0xf]
      %v1226 = vld [vmem:[%s1220 + $0x14] sm:$0xf]
      %v1227 = vld [vmem:[%s1220 + $0x18] sm:$0xf]
      %v1228 = vld [vmem:[%s1220 + $0x1c] sm:$0xf]
      %v1229 = vld [vmem:[%s1220 + $0x20] sm:$0xf]
      %v1230 = vld [vmem:[%s1220 + $0x24] sm:$0xf]
      %v1231 = vld [vmem:[%s1220 + $0x28] sm:$0xf]
      %v1232 = vld [vmem:[%s1220 + $0x2c] sm:$0xf]
      %v1233 = vld [vmem:[%s1220 + $0x30] sm:$0xf]
      %v1235 = vunpack.c.l.b16 %v1219
      %v1236 = vpack.c.b16 %v1034, %v1235
      %v1237 = vrot.slane %v1236, 1
      %v1251 = vunpack.c.l.b16 %v1221
      %v1252 = vunpack.c.l.b16 %v1222
      %v1253 = vunpack.c.l.b16 %v1223
      %v1254 = vunpack.c.l.b16 %v1224
      %v1255 = vunpack.c.l.b16 %v1225
      %v1256 = vunpack.c.l.b16 %v1226
      %v1257 = vunpack.c.l.b16 %v1227
      %v1258 = vunpack.c.l.b16 %v1228
      %v1259 = vunpack.c.l.b16 %v1229
      %v1260 = vunpack.c.l.b16 %v1230
      %v1261 = vunpack.c.l.b16 %v1231
      %v1262 = vunpack.c.l.b16 %v1232
      %v1263 = vunpack.c.l.b16 %v1233
      %v1264 = vpack.c.b16 %v1252, %v1251
      %v1265 = vpack.c.b16 %v1254, %v1253
      %v1266 = vpack.c.b16 %v1256, %v1255
      %v1267 = vpack.c.b16 %v1258, %v1257
      %v1268 = vpack.c.b16 %v1260, %v1259
      %v1269 = vpack.c.b16 %v1262, %v1261
      %v1270 = vpack.c.b16 %v1263, %v1263
      %v1278 = vsel %vm1082, %v1237, 0
      %v1281 = vsel %vm399, %v1270, 0
      %1283 = vmatprep.subr.bf16.mxu0 0
      %1284 = vmatpush1.bf16.msra.mxu0 0
      %1285 = vmatprep.subr.bf16.mxu0 0
      %1286 = vmatpush1.bf16.msra.mxu0 %v1281
      %1287 = vmatprep.subr.bf16.mxu0 0
      %1288 = vmatpush1.bf16.msra.mxu0 %v1269
      %1289 = vmatprep.subr.bf16.mxu0 0
      %1290 = vmatpush1.bf16.msra.mxu0 %v1268
      %1291 = vmatprep.subr.bf16.mxu0 0
      %1292 = vmatpush1.bf16.msra.mxu0 %v1267
      %1293 = vmatprep.subr.bf16.mxu0 0
      %1294 = vmatpush1.bf16.msra.mxu0 %v1266
      %1295 = vmatprep.subr.bf16.mxu0 0
      %1296 = vmatpush1.bf16.msra.mxu0 %v1265
      %1297 = vmatprep.subr.bf16.mxu0 0
      %1298 = vmatpush1.bf16.msra.mxu0 %v1264
      %1299 = vmatprep.subr.bf16.mxu0 0
      %1300 = vmatpush2.bf16.msra.mxu0 0
      %1301 = vmatprep.subr.bf16.mxu0 0
      %1302 = vmatpush2.bf16.msra.mxu0 0
      %1303 = vmatprep.subr.bf16.mxu0 0
      %1304 = vmatpush2.bf16.msra.mxu0 0
      %1305 = vmatprep.subr.bf16.mxu0 0
      %1306 = vmatpush2.bf16.msra.mxu0 0
      %1307 = vmatprep.subr.bf16.mxu0 0
      %1308 = vmatpush2.bf16.msra.mxu0 0
      %1309 = vmatprep.subr.bf16.mxu0 0
      %1310 = vmatpush2.bf16.msra.mxu0 0
      %1311 = vmatprep.subr.bf16.mxu0 0
      %1312 = vmatpush2.bf16.msra.mxu0 0
      %1313 = vmatprep.subr.bf16.mxu0 0
      %1314 = vmatpush2.bf16.msra.mxu0 0
      %1315 = vmatprep.mubr.bf16.mxu0 0
      %1316 = vmatmul.mubr.bf16.gmra.mxu0 %v1278
      %v1317 = vpop.f32.mrf.mxu0
      %v1318 = vadd.f32 0.0, %v1317
      %v1319 = vpop.f32.mrf.mxu0
      %v1320 = vpop.f32.mrf.mxu0
      %v1321 = vadd.f32 0.0, %v1320
      %v1322 = vpop.f32.mrf.mxu0
      %1323 = vdwg.mxu0
      %v1324 = vadd.f32 %v1213, %v1318
      %v1325 = vadd.f32 %v1216, %v1321
      %v1326 = vld [vmem:[#allocation3 + $0x4] sm:$0x7]
      %s1327 = scalar_lea.vmem %s3, 156
      %v1328 = vld [vmem:[%s1327] sm:$0xf]
      %v1329 = vld [vmem:[%s1327 + $0x4] sm:$0xf]
      %v1330 = vld [vmem:[%s1327 + $0x8] sm:$0xf]
      %v1331 = vld [vmem:[%s1327 + $0xc] sm:$0xf]
      %v1332 = vld [vmem:[%s1327 + $0x10] sm:$0xf]
      %v1333 = vld [vmem:[%s1327 + $0x14] sm:$0xf]
      %v1334 = vld [vmem:[%s1327 + $0x18] sm:$0xf]
      %v1335 = vld [vmem:[%s1327 + $0x1c] sm:$0xf]
      %v1336 = vld [vmem:[%s1327 + $0x20] sm:$0xf]
      %v1337 = vld [vmem:[%s1327 + $0x24] sm:$0xf]
      %v1338 = vld [vmem:[%s1327 + $0x28] sm:$0xf]
      %v1339 = vld [vmem:[%s1327 + $0x2c] sm:$0xf]
      %v1340 = vld [vmem:[%s1327 + $0x30] sm:$0xf]
      %v1342 = vunpack.c.l.b16 %v1326
      %v1343 = vpack.c.b16 %v1342, %v1235
      %v1345 = vshrl.u32 %v1343, 16
      %v1347 = vrot.slane %v1345, 1
      %v1348 = vshll.u32 %v1343, 16
      %v1350 = vrot.slane %v1348, 2
      %v1351 = vor.u32 %v1347, %v1350
      %v1365 = vunpack.c.l.b16 %v1328
      %v1366 = vunpack.c.l.b16 %v1329
      %v1367 = vunpack.c.l.b16 %v1330
      %v1368 = vunpack.c.l.b16 %v1331
      %v1369 = vunpack.c.l.b16 %v1332
      %v1370 = vunpack.c.l.b16 %v1333
      %v1371 = vunpack.c.l.b16 %v1334
      %v1372 = vunpack.c.l.b16 %v1335
      %v1373 = vunpack.c.l.b16 %v1336
      %v1374 = vunpack.c.l.b16 %v1337
      %v1375 = vunpack.c.l.b16 %v1338
      %v1376 = vunpack.c.l.b16 %v1339
      %v1377 = vunpack.c.l.b16 %v1340
      %v1378 = vpack.c.b16 %v1366, %v1365
      %v1379 = vpack.c.b16 %v1368, %v1367
      %v1380 = vpack.c.b16 %v1370, %v1369
      %v1381 = vpack.c.b16 %v1372, %v1371
      %v1382 = vpack.c.b16 %v1374, %v1373
      %v1383 = vpack.c.b16 %v1376, %v1375
      %v1384 = vpack.c.b16 %v1377, %v1377
      %v1392 = vsel %vm1082, %v1351, 0
      %v1395 = vsel %vm399, %v1384, 0
      %1397 = vmatprep.subr.bf16.mxu0 0
      %1398 = vmatpush1.bf16.msra.mxu0 0
      %1399 = vmatprep.subr.bf16.mxu0 0
      %1400 = vmatpush1.bf16.msra.mxu0 %v1395
      %1401 = vmatprep.subr.bf16.mxu0 0
      %1402 = vmatpush1.bf16.msra.mxu0 %v1383
      %1403 = vmatprep.subr.bf16.mxu0 0
      %1404 = vmatpush1.bf16.msra.mxu0 %v1382
      %1405 = vmatprep.subr.bf16.mxu0 0
      %1406 = vmatpush1.bf16.msra.mxu0 %v1381
      %1407 = vmatprep.subr.bf16.mxu0 0
      %1408 = vmatpush1.bf16.msra.mxu0 %v1380
      %1409 = vmatprep.subr.bf16.mxu0 0
      %1410 = vmatpush1.bf16.msra.mxu0 %v1379
      %1411 = vmatprep.subr.bf16.mxu0 0
      %1412 = vmatpush1.bf16.msra.mxu0 %v1378
      %1413 = vmatprep.subr.bf16.mxu0 0
      %1414 = vmatpush2.bf16.msra.mxu0 0
      %1415 = vmatprep.subr.bf16.mxu0 0
      %1416 = vmatpush2.bf16.msra.mxu0 0
      %1417 = vmatprep.subr.bf16.mxu0 0
      %1418 = vmatpush2.bf16.msra.mxu0 0
      %1419 = vmatprep.subr.bf16.mxu0 0
      %1420 = vmatpush2.bf16.msra.mxu0 0
      %1421 = vmatprep.subr.bf16.mxu0 0
      %1422 = vmatpush2.bf16.msra.mxu0 0
      %1423 = vmatprep.subr.bf16.mxu0 0
      %1424 = vmatpush2.bf16.msra.mxu0 0
      %1425 = vmatprep.subr.bf16.mxu0 0
      %1426 = vmatpush2.bf16.msra.mxu0 0
      %1427 = vmatprep.subr.bf16.mxu0 0
      %1428 = vmatpush2.bf16.msra.mxu0 0
      %1429 = vmatprep.mubr.bf16.mxu0 0
      %1430 = vmatmul.mubr.bf16.gmra.mxu0 %v1392
      %v1431 = vpop.f32.mrf.mxu0
      %v1432 = vadd.f32 0.0, %v1431
      %v1433 = vpop.f32.mrf.mxu0
      %v1434 = vpop.f32.mrf.mxu0
      %v1435 = vadd.f32 0.0, %v1434
      %v1436 = vpop.f32.mrf.mxu0
      %1437 = vdwg.mxu0
      %v1438 = vadd.f32 %v1324, %v1432
      %v1439 = vadd.f32 %v1325, %v1435
      %v1440 = vld [vmem:[%s4] sm:$0x1]
      %v1442 = vlaneseq
      %v1443 = vshrl.u32 %v1442, 7
      %v1444 = vsub.s32 0, %v1443
      %v1445 = vrot.slane %v1440, %v1444
      %vm1447 = vcmask 80896
      %v1448 = vsel %vm1447, %v876, 0
      %vm1450 = vcmask 1041408
      %v1452 = vsel %vm1450, %v1439, 0
      %1454 = vmatprep.subr.mxu0 0.0
      %1455 = vmatpush1.msra.mxu0 0.0
      %1456 = vmatprep.subr.mxu0 0.0
      %1457 = vmatpush1.msra.mxu0 0.0
      %1458 = vmatprep.subr.mxu0 0.0
      %1459 = vmatpush1.msra.mxu0 0.0
      %1460 = vmatprep.subr.mxu0 0.0
      %1461 = vmatpush1.msra.mxu0 0.0
      %1462 = vmatprep.subr.mxu0 0.0
      %1463 = vmatpush1.msra.mxu0 0.0
      %1464 = vmatprep.subr.mxu0 0.0
      %1465 = vmatpush1.msra.mxu0 0.0
      %1466 = vmatprep.subr.mxu0 0.0
      %1467 = vmatpush1.msra.mxu0 0.0
      %1468 = vmatprep.subr.mxu0 0.0
      %1469 = vmatpush1.msra.mxu0 0.0
      %1470 = vmatprep.subr.mxu0 0.0
      %1471 = vmatpush1.msra.mxu0 0.0
      %1472 = vmatprep.subr.mxu0 0.0
      %1473 = vmatpush1.msra.mxu0 0.0
      %1474 = vmatprep.subr.mxu0 0.0
      %1475 = vmatpush1.msra.mxu0 0.0
      %1476 = vmatprep.subr.mxu0 0.0
      %1477 = vmatpush1.msra.mxu0 0.0
      %1478 = vmatprep.subr.mxu0 0.0
      %1479 = vmatpush1.msra.mxu0 0.0
      %1480 = vmatprep.subr.mxu0 0.0
      %1481 = vmatpush1.msra.mxu0 0.0
      %1482 = vmatprep.subr.mxu0 0.0
      %1483 = vmatpush1.msra.mxu0 %v1452
      %1484 = vmatprep.subr.mxu0 0.0
      %1485 = vmatpush1.msra.mxu0 %v1438
      %1486 = vmatprep.subr.mxu0 0.0
      %1487 = vmatpush2.msra.mxu0 0.0
      %1488 = vmatprep.subr.mxu0 0.0
      %1489 = vmatpush2.msra.mxu0 0.0
      %1490 = vmatprep.subr.mxu0 0.0
      %1491 = vmatpush2.msra.mxu0 0.0
      %1492 = vmatprep.subr.mxu0 0.0
      %1493 = vmatpush2.msra.mxu0 0.0
      %1494 = vmatprep.subr.mxu0 0.0
      %1495 = vmatpush2.msra.mxu0 0.0
      %1496 = vmatprep.subr.mxu0 0.0
      %1497 = vmatpush2.msra.mxu0 0.0
      %1498 = vmatprep.subr.mxu0 0.0
      %1499 = vmatpush2.msra.mxu0 0.0
      %1500 = vmatprep.subr.mxu0 0.0
      %1501 = vmatpush2.msra.mxu0 0.0
      %1502 = vmatprep.subr.mxu0 0.0
      %1503 = vmatpush2.msra.mxu0 0.0
      %1504 = vmatprep.subr.mxu0 0.0
      %1505 = vmatpush2.msra.mxu0 0.0
      %1506 = vmatprep.subr.mxu0 0.0
      %1507 = vmatpush2.msra.mxu0 0.0
      %1508 = vmatprep.subr.mxu0 0.0
      %1509 = vmatpush2.msra.mxu0 0.0
      %1510 = vmatprep.subr.mxu0 0.0
      %1511 = vmatpush2.msra.mxu0 0.0
      %1512 = vmatprep.subr.mxu0 0.0
      %1513 = vmatpush2.msra.mxu0 0.0
      %1514 = vmatprep.subr.mxu0 0.0
      %1515 = vmatpush2.msra.mxu0 0.0
      %1516 = vmatprep.subr.mxu0 0.0
      %1517 = vmatpush2.msra.mxu0 0.0
      %1518 = vmatprep.mubr.f32.mxu0 0.0
      %1519 = vmatmul.mubr.f32.gmra.mxu0 %v1448
      %v1520 = vpop.f32.mrf.mxu0
      %v1521 = vadd.f32 %v1445, %v1520
      %v1522 = vpop.f32.mrf.mxu0
      %1523 = vdwg.mxu0
      %vm1524 = vcmp.ge.f32.partialorder %v1521, 0.0
      %v1525 = vmul.f32 %v1521, 0.2
      %v1526 = vsel %vm1524, %v1521, %v1525
      %v1527 = vpack.c.bf16 %v1526, %v1526
      %v1529 = vunpack.c.l.b16 %v1527
      %v1530 = vpack.c.b16 %v1529, %v1529
      %v1531 = vrot.slane %v1530, 7
      %1532 = vrot.lane.b32.xlu0 %v1531, 32
      %v1533 = vpop.permute.xlu0 %1532
      %vm1535 = vcmask 912641
      %vm1536 = vmand %vm1535, %vm414
      %v1537 = vld [vmem:[#allocation4] sm:$0xe]
      %v1538 = vsel %vm1536, %v1533, %v1537
      %1539 = vst [vmem:[#allocation4] sm:$0xe] %v1538
      %v1540 = vld [vmem:[#allocation4] sm:$0x77]
      %v1541 = vld [vmem:[%s5] sm:$0xf]
      %v1542 = vld [vmem:[%s5 + $0x4] sm:$0xf]
      %v1543 = vld [vmem:[%s5 + $0x8] sm:$0xf]
      %v1544 = vld [vmem:[%s5 + $0xc] sm:$0xf]
      %v1545 = vld [vmem:[%s5 + $0x10] sm:$0xf]
      %v1546 = vld [vmem:[%s5 + $0x14] sm:$0xf]
      %v1547 = vld [vmem:[%s5 + $0x18] sm:$0xf]
      %v1548 = vld [vmem:[%s5 + $0x1c] sm:$0xf]
      %v1549 = vld [vmem:[%s5 + $0x20] sm:$0xf]
      %v1550 = vld [vmem:[%s5 + $0x24] sm:$0xf]
      %v1551 = vld [vmem:[%s5 + $0x28] sm:$0xf]
      %v1552 = vld [vmem:[%s5 + $0x2c] sm:$0xf]
      %v1553 = vld [vmem:[%s5 + $0x30] sm:$0xf]
      %v1554 = vld [vmem:[%s5 + $0x34] sm:$0xf]
      %v1555 = vld [vmem:[%s5 + $0x38] sm:$0xf]
      %v1556 = vld [vmem:[%s5 + $0x3c] sm:$0xf]
      %v1557 = vld [vmem:[%s5 + $0x40] sm:$0xf]
      %v1558 = vld [vmem:[%s5 + $0x44] sm:$0xf]
      %v1559 = vld [vmem:[#allocation4] sm:$0xff]
      %s1560 = scalar_lea.vmem %s5, 72
      %v1561 = vld [vmem:[%s1560] sm:$0xf]
      %v1562 = vld [vmem:[%s1560 + $0x4] sm:$0xf]
      %v1563 = vld [vmem:[%s1560 + $0x8] sm:$0xf]
      %v1564 = vld [vmem:[%s1560 + $0xc] sm:$0xf]
      %v1565 = vld [vmem:[%s1560 + $0x10] sm:$0xf]
      %v1566 = vld [vmem:[%s1560 + $0x14] sm:$0xf]
      %v1567 = vld [vmem:[%s1560 + $0x18] sm:$0xf]
      %v1568 = vld [vmem:[%s1560 + $0x1c] sm:$0xf]
      %v1569 = vld [vmem:[%s1560 + $0x20] sm:$0xf]
      %v1570 = vld [vmem:[%s1560 + $0x24] sm:$0xf]
      %v1571 = vld [vmem:[%s1560 + $0x28] sm:$0xf]
      %v1572 = vld [vmem:[%s1560 + $0x2c] sm:$0xf]
      %v1573 = vld [vmem:[%s1560 + $0x30] sm:$0xf]
      %v1574 = vld [vmem:[%s1560 + $0x34] sm:$0xf]
      %v1575 = vld [vmem:[%s1560 + $0x38] sm:$0xf]
      %v1576 = vld [vmem:[%s1560 + $0x3c] sm:$0xf]
      %v1577 = vld [vmem:[%s1560 + $0x40] sm:$0xf]
      %v1578 = vld [vmem:[%s1560 + $0x44] sm:$0xf]
      %v1580 = vunpack.c.l.b16 %v1559
      %v1581 = vunpack.c.h.b16 %v1559
      %v1582 = vpack.c.b16 %v1580, %v1580
      %v1583 = vpack.c.b16 %v1581, %v1581
      %v1585 = vshrl.u32 %v1582, 16
      %v1587 = vshll.u32 %v1582, 16
      %v1589 = vrot.slane %v1587, 1
      %v1590 = vor.u32 %v1585, %v1589
      %v1592 = vshrl.u32 %v1583, 16
      %v1594 = vshll.u32 %v1583, 16
      %v1596 = vrot.slane %v1594, 1
      %v1597 = vor.u32 %v1592, %v1596
      %v1617 = vunpack.c.l.b16 %v1561
      %v1618 = vunpack.c.l.b16 %v1562
      %v1619 = vunpack.c.l.b16 %v1563
      %v1620 = vunpack.c.l.b16 %v1564
      %v1621 = vunpack.c.l.b16 %v1565
      %v1622 = vunpack.c.l.b16 %v1566
      %v1623 = vunpack.c.l.b16 %v1567
      %v1624 = vunpack.c.l.b16 %v1568
      %v1625 = vunpack.c.l.b16 %v1569
      %v1626 = vunpack.c.l.b16 %v1570
      %v1627 = vunpack.c.l.b16 %v1571
      %v1628 = vunpack.c.l.b16 %v1572
      %v1629 = vunpack.c.l.b16 %v1573
      %v1630 = vunpack.c.l.b16 %v1574
      %v1631 = vunpack.c.l.b16 %v1575
      %v1632 = vunpack.c.l.b16 %v1576
      %v1633 = vunpack.c.l.b16 %v1577
      %v1634 = vunpack.c.l.b16 %v1578
      %v1635 = vpack.c.b16 %v1618, %v1617
      %v1636 = vpack.c.b16 %v1620, %v1619
      %v1637 = vpack.c.b16 %v1622, %v1621
      %v1638 = vpack.c.b16 %v1624, %v1623
      %v1639 = vpack.c.b16 %v1626, %v1625
      %v1640 = vpack.c.b16 %v1628, %v1627
      %v1641 = vpack.c.b16 %v1630, %v1629
      %v1642 = vpack.c.b16 %v1632, %v1631
      %v1643 = vpack.c.b16 %v1634, %v1633
      %vm1653 = vcmask 130048
      %v1655 = vsel %vm1653, %v1597, 0
      %1657 = vmatprep.subr.bf16.mxu0 0
      %1658 = vmatpush1.bf16.msra.mxu0 %v1642
      %1659 = vmatprep.subr.bf16.mxu0 0
      %1660 = vmatpush1.bf16.msra.mxu0 %v1641
      %1661 = vmatprep.subr.bf16.mxu0 0
      %1662 = vmatpush1.bf16.msra.mxu0 %v1640
      %1663 = vmatprep.subr.bf16.mxu0 0
      %1664 = vmatpush1.bf16.msra.mxu0 %v1639
      %1665 = vmatprep.subr.bf16.mxu0 0
      %1666 = vmatpush1.bf16.msra.mxu0 %v1638
      %1667 = vmatprep.subr.bf16.mxu0 0
      %1668 = vmatpush1.bf16.msra.mxu0 %v1637
      %1669 = vmatprep.subr.bf16.mxu0 0
      %1670 = vmatpush1.bf16.msra.mxu0 %v1636
      %1671 = vmatprep.subr.bf16.mxu0 0
      %1672 = vmatpush1.bf16.msra.mxu0 %v1635
      %1673 = vmatprep.subr.bf16.mxu0 0
      %1674 = vmatpush2.bf16.msra.mxu0 0
      %1675 = vmatprep.subr.bf16.mxu0 0
      %1676 = vmatpush2.bf16.msra.mxu0 0
      %1677 = vmatprep.subr.bf16.mxu0 0
      %1678 = vmatpush2.bf16.msra.mxu0 0
      %1679 = vmatprep.subr.bf16.mxu0 0
      %1680 = vmatpush2.bf16.msra.mxu0 0
      %1681 = vmatprep.subr.bf16.mxu0 0
      %1682 = vmatpush2.bf16.msra.mxu0 0
      %1683 = vmatprep.subr.bf16.mxu0 0
      %1684 = vmatpush2.bf16.msra.mxu0 0
      %1685 = vmatprep.subr.bf16.mxu0 0
      %1686 = vmatpush2.bf16.msra.mxu0 0
      %1687 = vmatprep.subr.bf16.mxu0 0
      %1688 = vmatpush2.bf16.msra.mxu0 %v1643
      %1689 = vmatprep.mubr.bf16.mxu0 %v1655
      %1690 = vmatmul.mubr.bf16.gmra.mxu0 %v1590
      %v1691 = vpop.f32.mrf.mxu0
      %v1692 = vadd.f32 0.0, %v1691
      %v1693 = vpop.f32.mrf.mxu0
      %v1694 = vpop.f32.mrf.mxu0
      %v1695 = vpop.f32.mrf.mxu0
      %1696 = vdwg.mxu0
      %v1698 = vunpack.c.l.b16 %v1540
      %v1699 = vunpack.c.h.b16 %v1540
      %v1700 = vpack.c.b16 %v1698, %v1698
      %v1701 = vpack.c.b16 %v1699, %v1699
      %v1721 = vunpack.c.l.b16 %v1541
      %v1722 = vunpack.c.l.b16 %v1542
      %v1723 = vunpack.c.l.b16 %v1543
      %v1724 = vunpack.c.l.b16 %v1544
      %v1725 = vunpack.c.l.b16 %v1545
      %v1726 = vunpack.c.l.b16 %v1546
      %v1727 = vunpack.c.l.b16 %v1547
      %v1728 = vunpack.c.l.b16 %v1548
      %v1729 = vunpack.c.l.b16 %v1549
      %v1730 = vunpack.c.l.b16 %v1550
      %v1731 = vunpack.c.l.b16 %v1551
      %v1732 = vunpack.c.l.b16 %v1552
      %v1733 = vunpack.c.l.b16 %v1553
      %v1734 = vunpack.c.l.b16 %v1554
      %v1735 = vunpack.c.l.b16 %v1555
      %v1736 = vunpack.c.l.b16 %v1556
      %v1737 = vunpack.c.l.b16 %v1557
      %v1738 = vunpack.c.l.b16 %v1558
      %v1739 = vpack.c.b16 %v1722, %v1721
      %v1740 = vpack.c.b16 %v1724, %v1723
      %v1741 = vpack.c.b16 %v1726, %v1725
      %v1742 = vpack.c.b16 %v1728, %v1727
      %v1743 = vpack.c.b16 %v1730, %v1729
      %v1744 = vpack.c.b16 %v1732, %v1731
      %v1745 = vpack.c.b16 %v1734, %v1733
      %v1746 = vpack.c.b16 %v1736, %v1735
      %v1747 = vpack.c.b16 %v1738, %v1737
      %v1758 = vsel %vm1653, %v1701, 0
      %1760 = vmatprep.subr.bf16.mxu0 0
      %1761 = vmatpush1.bf16.msra.mxu0 %v1746
      %1762 = vmatprep.subr.bf16.mxu0 0
      %1763 = vmatpush1.bf16.msra.mxu0 %v1745
      %1764 = vmatprep.subr.bf16.mxu0 0
      %1765 = vmatpush1.bf16.msra.mxu0 %v1744
      %1766 = vmatprep.subr.bf16.mxu0 0
      %1767 = vmatpush1.bf16.msra.mxu0 %v1743
      %1768 = vmatprep.subr.bf16.mxu0 0
      %1769 = vmatpush1.bf16.msra.mxu0 %v1742
      %1770 = vmatprep.subr.bf16.mxu0 0
      %1771 = vmatpush1.bf16.msra.mxu0 %v1741
      %1772 = vmatprep.subr.bf16.mxu0 0
      %1773 = vmatpush1.bf16.msra.mxu0 %v1740
      %1774 = vmatprep.subr.bf16.mxu0 0
      %1775 = vmatpush1.bf16.msra.mxu0 %v1739
      %1776 = vmatprep.subr.bf16.mxu0 0
      %1777 = vmatpush2.bf16.msra.mxu0 0
      %1778 = vmatprep.subr.bf16.mxu0 0
      %1779 = vmatpush2.bf16.msra.mxu0 0
      %1780 = vmatprep.subr.bf16.mxu0 0
      %1781 = vmatpush2.bf16.msra.mxu0 0
      %1782 = vmatprep.subr.bf16.mxu0 0
      %1783 = vmatpush2.bf16.msra.mxu0 0
      %1784 = vmatprep.subr.bf16.mxu0 0
      %1785 = vmatpush2.bf16.msra.mxu0 0
      %1786 = vmatprep.subr.bf16.mxu0 0
      %1787 = vmatpush2.bf16.msra.mxu0 0
      %1788 = vmatprep.subr.bf16.mxu0 0
      %1789 = vmatpush2.bf16.msra.mxu0 0
      %1790 = vmatprep.subr.bf16.mxu0 0
      %1791 = vmatpush2.bf16.msra.mxu0 %v1747
      %1792 = vmatprep.mubr.bf16.mxu0 %v1758
      %1793 = vmatmul.mubr.bf16.gmra.mxu0 %v1700
      %v1794 = vpop.f32.mrf.mxu0
      %v1795 = vadd.f32 %v1692, %v1794
      %v1796 = vpop.f32.mrf.mxu0
      %v1797 = vpop.f32.mrf.mxu0
      %v1798 = vpop.f32.mrf.mxu0
      %1799 = vdwg.mxu0
      %v1800 = vld [vmem:[#allocation4] sm:$0xee]
      %s1801 = scalar_lea.vmem %s5, 144
      %v1802 = vld [vmem:[%s1801] sm:$0xf]
      %v1803 = vld [vmem:[%s1801 + $0x4] sm:$0xf]
      %v1804 = vld [vmem:[%s1801 + $0x8] sm:$0xf]
      %v1805 = vld [vmem:[%s1801 + $0xc] sm:$0xf]
      %v1806 = vld [vmem:[%s1801 + $0x10] sm:$0xf]
      %v1807 = vld [vmem:[%s1801 + $0x14] sm:$0xf]
      %v1808 = vld [vmem:[%s1801 + $0x18] sm:$0xf]
      %v1809 = vld [vmem:[%s1801 + $0x1c] sm:$0xf]
      %v1810 = vld [vmem:[%s1801 + $0x20] sm:$0xf]
      %v1811 = vld [vmem:[%s1801 + $0x24] sm:$0xf]
      %v1812 = vld [vmem:[%s1801 + $0x28] sm:$0xf]
      %v1813 = vld [vmem:[%s1801 + $0x2c] sm:$0xf]
      %v1814 = vld [vmem:[%s1801 + $0x30] sm:$0xf]
      %v1815 = vld [vmem:[%s1801 + $0x34] sm:$0xf]
      %v1816 = vld [vmem:[%s1801 + $0x38] sm:$0xf]
      %v1817 = vld [vmem:[%s1801 + $0x3c] sm:$0xf]
      %v1818 = vld [vmem:[%s1801 + $0x40] sm:$0xf]
      %v1819 = vld [vmem:[%s1801 + $0x44] sm:$0xf]
      %v1821 = vunpack.c.l.b16 %v1800
      %v1822 = vunpack.c.h.b16 %v1800
      %v1823 = vpack.c.b16 %v1821, %v1821
      %v1824 = vpack.c.b16 %v1822, %v1822
      %v1825 = vrot.slane %v1823, 1
      %v1826 = vrot.slane %v1824, 1
      %v1846 = vunpack.c.l.b16 %v1802
      %v1847 = vunpack.c.l.b16 %v1803
      %v1848 = vunpack.c.l.b16 %v1804
      %v1849 = vunpack.c.l.b16 %v1805
      %v1850 = vunpack.c.l.b16 %v1806
      %v1851 = vunpack.c.l.b16 %v1807
      %v1852 = vunpack.c.l.b16 %v1808
      %v1853 = vunpack.c.l.b16 %v1809
      %v1854 = vunpack.c.l.b16 %v1810
      %v1855 = vunpack.c.l.b16 %v1811
      %v1856 = vunpack.c.l.b16 %v1812
      %v1857 = vunpack.c.l.b16 %v1813
      %v1858 = vunpack.c.l.b16 %v1814
      %v1859 = vunpack.c.l.b16 %v1815
      %v1860 = vunpack.c.l.b16 %v1816
      %v1861 = vunpack.c.l.b16 %v1817
      %v1862 = vunpack.c.l.b16 %v1818
      %v1863 = vunpack.c.l.b16 %v1819
      %v1864 = vpack.c.b16 %v1847, %v1846
      %v1865 = vpack.c.b16 %v1849, %v1848
      %v1866 = vpack.c.b16 %v1851, %v1850
      %v1867 = vpack.c.b16 %v1853, %v1852
      %v1868 = vpack.c.b16 %v1855, %v1854
      %v1869 = vpack.c.b16 %v1857, %v1856
      %v1870 = vpack.c.b16 %v1859, %v1858
      %v1871 = vpack.c.b16 %v1861, %v1860
      %v1872 = vpack.c.b16 %v1863, %v1862
      %v1883 = vsel %vm1653, %v1826, 0
      %1885 = vmatprep.subr.bf16.mxu0 0
      %1886 = vmatpush1.bf16.msra.mxu0 %v1871
      %1887 = vmatprep.subr.bf16.mxu0 0
      %1888 = vmatpush1.bf16.msra.mxu0 %v1870
      %1889 = vmatprep.subr.bf16.mxu0 0
      %1890 = vmatpush1.bf16.msra.mxu0 %v1869
      %1891 = vmatprep.subr.bf16.mxu0 0
      %1892 = vmatpush1.bf16.msra.mxu0 %v1868
      %1893 = vmatprep.subr.bf16.mxu0 0
      %1894 = vmatpush1.bf16.msra.mxu0 %v1867
      %1895 = vmatprep.subr.bf16.mxu0 0
      %1896 = vmatpush1.bf16.msra.mxu0 %v1866
      %1897 = vmatprep.subr.bf16.mxu0 0
      %1898 = vmatpush1.bf16.msra.mxu0 %v1865
      %1899 = vmatprep.subr.bf16.mxu0 0
      %1900 = vmatpush1.bf16.msra.mxu0 %v1864
      %1901 = vmatprep.subr.bf16.mxu0 0
      %1902 = vmatpush2.bf16.msra.mxu0 0
      %1903 = vmatprep.subr.bf16.mxu0 0
      %1904 = vmatpush2.bf16.msra.mxu0 0
      %1905 = vmatprep.subr.bf16.mxu0 0
      %1906 = vmatpush2.bf16.msra.mxu0 0
      %1907 = vmatprep.subr.bf16.mxu0 0
      %1908 = vmatpush2.bf16.msra.mxu0 0
      %1909 = vmatprep.subr.bf16.mxu0 0
      %1910 = vmatpush2.bf16.msra.mxu0 0
      %1911 = vmatprep.subr.bf16.mxu0 0
      %1912 = vmatpush2.bf16.msra.mxu0 0
      %1913 = vmatprep.subr.bf16.mxu0 0
      %1914 = vmatpush2.bf16.msra.mxu0 0
      %1915 = vmatprep.subr.bf16.mxu0 0
      %1916 = vmatpush2.bf16.msra.mxu0 %v1872
      %1917 = vmatprep.mubr.bf16.mxu0 %v1883
      %1918 = vmatmul.mubr.bf16.gmra.mxu0 %v1825
      %v1919 = vpop.f32.mrf.mxu0
      %v1920 = vadd.f32 0.0, %v1919
      %v1921 = vpop.f32.mrf.mxu0
      %v1922 = vpop.f32.mrf.mxu0
      %v1923 = vpop.f32.mrf.mxu0
      %1924 = vdwg.mxu0
      %v1925 = vadd.f32 %v1795, %v1920
      %v1926 = vld [vmem:[#allocation4] sm:$0xee]
      %v1927 = vld [vmem:[#allocation4 + $0x8] sm:$0x11]
      %s1928 = scalar_lea.vmem %s5, 216
      %v1929 = vld [vmem:[%s1928] sm:$0xf]
      %v1930 = vld [vmem:[%s1928 + $0x4] sm:$0xf]
      %v1931 = vld [vmem:[%s1928 + $0x8] sm:$0xf]
      %v1932 = vld [vmem:[%s1928 + $0xc] sm:$0xf]
      %v1933 = vld [vmem:[%s1928 + $0x10] sm:$0xf]
      %v1934 = vld [vmem:[%s1928 + $0x14] sm:$0xf]
      %v1935 = vld [vmem:[%s1928 + $0x18] sm:$0xf]
      %v1936 = vld [vmem:[%s1928 + $0x1c] sm:$0xf]
      %v1937 = vld [vmem:[%s1928 + $0x20] sm:$0xf]
      %v1938 = vld [vmem:[%s1928 + $0x24] sm:$0xf]
      %v1939 = vld [vmem:[%s1928 + $0x28] sm:$0xf]
      %v1940 = vld [vmem:[%s1928 + $0x2c] sm:$0xf]
      %v1941 = vld [vmem:[%s1928 + $0x30] sm:$0xf]
      %v1942 = vld [vmem:[%s1928 + $0x34] sm:$0xf]
      %v1943 = vld [vmem:[%s1928 + $0x38] sm:$0xf]
      %v1944 = vld [vmem:[%s1928 + $0x3c] sm:$0xf]
      %v1945 = vld [vmem:[%s1928 + $0x40] sm:$0xf]
      %v1946 = vld [vmem:[%s1928 + $0x44] sm:$0xf]
      %v1949 = vunpack.c.l.b16 %v1926
      %v1950 = vunpack.c.h.b16 %v1926
      %v1951 = vunpack.c.l.b16 %v1927
      %v1952 = vunpack.c.h.b16 %v1927
      %v1953 = vpack.c.b16 %v1951, %v1949
      %v1954 = vpack.c.b16 %v1952, %v1950
      %v1956 = vshrl.u32 %v1953, 16
      %v1958 = vrot.slane %v1956, 1
      %v1959 = vshll.u32 %v1953, 16
      %v1961 = vrot.slane %v1959, 2
      %v1962 = vor.u32 %v1958, %v1961
      %v1964 = vshrl.u32 %v1954, 16
      %v1966 = vrot.slane %v1964, 1
      %v1967 = vshll.u32 %v1954, 16
      %v1969 = vrot.slane %v1967, 2
      %v1970 = vor.u32 %v1966, %v1969
      %v1990 = vunpack.c.l.b16 %v1929
      %v1991 = vunpack.c.l.b16 %v1930
      %v1992 = vunpack.c.l.b16 %v1931
      %v1993 = vunpack.c.l.b16 %v1932
      %v1994 = vunpack.c.l.b16 %v1933
      %v1995 = vunpack.c.l.b16 %v1934
      %v1996 = vunpack.c.l.b16 %v1935
      %v1997 = vunpack.c.l.b16 %v1936
      %v1998 = vunpack.c.l.b16 %v1937
      %v1999 = vunpack.c.l.b16 %v1938
      %v2000 = vunpack.c.l.b16 %v1939
      %v2001 = vunpack.c.l.b16 %v1940
      %v2002 = vunpack.c.l.b16 %v1941
      %v2003 = vunpack.c.l.b16 %v1942
      %v2004 = vunpack.c.l.b16 %v1943
      %v2005 = vunpack.c.l.b16 %v1944
      %v2006 = vunpack.c.l.b16 %v1945
      %v2007 = vunpack.c.l.b16 %v1946
      %v2008 = vpack.c.b16 %v1991, %v1990
      %v2009 = vpack.c.b16 %v1993, %v1992
      %v2010 = vpack.c.b16 %v1995, %v1994
      %v2011 = vpack.c.b16 %v1997, %v1996
      %v2012 = vpack.c.b16 %v1999, %v1998
      %v2013 = vpack.c.b16 %v2001, %v2000
      %v2014 = vpack.c.b16 %v2003, %v2002
      %v2015 = vpack.c.b16 %v2005, %v2004
      %v2016 = vpack.c.b16 %v2007, %v2006
      %v2027 = vsel %vm1653, %v1970, 0
      %2029 = vmatprep.subr.bf16.mxu0 0
      %2030 = vmatpush1.bf16.msra.mxu0 %v2015
      %2031 = vmatprep.subr.bf16.mxu0 0
      %2032 = vmatpush1.bf16.msra.mxu0 %v2014
      %2033 = vmatprep.subr.bf16.mxu0 0
      %2034 = vmatpush1.bf16.msra.mxu0 %v2013
      %2035 = vmatprep.subr.bf16.mxu0 0
      %2036 = vmatpush1.bf16.msra.mxu0 %v2012
      %2037 = vmatprep.subr.bf16.mxu0 0
      %2038 = vmatpush1.bf16.msra.mxu0 %v2011
      %2039 = vmatprep.subr.bf16.mxu0 0
      %2040 = vmatpush1.bf16.msra.mxu0 %v2010
      %2041 = vmatprep.subr.bf16.mxu0 0
      %2042 = vmatpush1.bf16.msra.mxu0 %v2009
      %2043 = vmatprep.subr.bf16.mxu0 0
      %2044 = vmatpush1.bf16.msra.mxu0 %v2008
      %2045 = vmatprep.subr.bf16.mxu0 0
      %2046 = vmatpush2.bf16.msra.mxu0 0
      %2047 = vmatprep.subr.bf16.mxu0 0
      %2048 = vmatpush2.bf16.msra.mxu0 0
      %2049 = vmatprep.subr.bf16.mxu0 0
      %2050 = vmatpush2.bf16.msra.mxu0 0
      %2051 = vmatprep.subr.bf16.mxu0 0
      %2052 = vmatpush2.bf16.msra.mxu0 0
      %2053 = vmatprep.subr.bf16.mxu0 0
      %2054 = vmatpush2.bf16.msra.mxu0 0
      %2055 = vmatprep.subr.bf16.mxu0 0
      %2056 = vmatpush2.bf16.msra.mxu0 0
      %2057 = vmatprep.subr.bf16.mxu0 0
      %2058 = vmatpush2.bf16.msra.mxu0 0
      %2059 = vmatprep.subr.bf16.mxu0 0
      %2060 = vmatpush2.bf16.msra.mxu0 %v2016
      %2061 = vmatprep.mubr.bf16.mxu0 %v2027
      %2062 = vmatmul.mubr.bf16.gmra.mxu0 %v1962
      %v2063 = vpop.f32.mrf.mxu0
      %v2064 = vadd.f32 0.0, %v2063
      %v2065 = vpop.f32.mrf.mxu0
      %v2066 = vpop.f32.mrf.mxu0
      %v2067 = vpop.f32.mrf.mxu0
      %2068 = vdwg.mxu0
      %v2069 = vadd.f32 %v1925, %v2064
      %v2070 = vld [vmem:[%s6] sm:$0x1]
      %v2072 = vlaneseq
      %v2073 = vshrl.u32 %v2072, 7
      %v2074 = vsub.s32 0, %v2073
      %v2075 = vrot.slane %v2070, %v2074
      %vm2077 = vcmask 48128
      %v2078 = vsel %vm2077, %v876, 0
      %v2081 = vsel %vm523, %v2069, 0
      %2083 = vmatprep.subr.mxu0 0.0
      %2084 = vmatpush1.msra.mxu0 0.0
      %2085 = vmatprep.subr.mxu0 0.0
      %2086 = vmatpush1.msra.mxu0 0.0
      %2087 = vmatprep.subr.mxu0 0.0
      %2088 = vmatpush1.msra.mxu0 0.0
      %2089 = vmatprep.subr.mxu0 0.0
      %2090 = vmatpush1.msra.mxu0 0.0
      %2091 = vmatprep.subr.mxu0 0.0
      %2092 = vmatpush1.msra.mxu0 0.0
      %2093 = vmatprep.subr.mxu0 0.0
      %2094 = vmatpush1.msra.mxu0 0.0
      %2095 = vmatprep.subr.mxu0 0.0
      %2096 = vmatpush1.msra.mxu0 0.0
      %2097 = vmatprep.subr.mxu0 0.0
      %2098 = vmatpush1.msra.mxu0 0.0
      %2099 = vmatprep.subr.mxu0 0.0
      %2100 = vmatpush1.msra.mxu0 0.0
      %2101 = vmatprep.subr.mxu0 0.0
      %2102 = vmatpush1.msra.mxu0 0.0
      %2103 = vmatprep.subr.mxu0 0.0
      %2104 = vmatpush1.msra.mxu0 0.0
      %2105 = vmatprep.subr.mxu0 0.0
      %2106 = vmatpush1.msra.mxu0 0.0
      %2107 = vmatprep.subr.mxu0 0.0
      %2108 = vmatpush1.msra.mxu0 0.0
      %2109 = vmatprep.subr.mxu0 0.0
      %2110 = vmatpush1.msra.mxu0 0.0
      %2111 = vmatprep.subr.mxu0 0.0
      %2112 = vmatpush1.msra.mxu0 0.0
      %2113 = vmatprep.subr.mxu0 0.0
      %2114 = vmatpush1.msra.mxu0 %v2081
      %2115 = vmatprep.subr.mxu0 0.0
      %2116 = vmatpush2.msra.mxu0 0.0
      %2117 = vmatprep.subr.mxu0 0.0
      %2118 = vmatpush2.msra.mxu0 0.0
      %2119 = vmatprep.subr.mxu0 0.0
      %2120 = vmatpush2.msra.mxu0 0.0
      %2121 = vmatprep.subr.mxu0 0.0
      %2122 = vmatpush2.msra.mxu0 0.0
      %2123 = vmatprep.subr.mxu0 0.0
      %2124 = vmatpush2.msra.mxu0 0.0
      %2125 = vmatprep.subr.mxu0 0.0
      %2126 = vmatpush2.msra.mxu0 0.0
      %2127 = vmatprep.subr.mxu0 0.0
      %2128 = vmatpush2.msra.mxu0 0.0
      %2129 = vmatprep.subr.mxu0 0.0
      %2130 = vmatpush2.msra.mxu0 0.0
      %2131 = vmatprep.subr.mxu0 0.0
      %2132 = vmatpush2.msra.mxu0 0.0
      %2133 = vmatprep.subr.mxu0 0.0
      %2134 = vmatpush2.msra.mxu0 0.0
      %2135 = vmatprep.subr.mxu0 0.0
      %2136 = vmatpush2.msra.mxu0 0.0
      %2137 = vmatprep.subr.mxu0 0.0
      %2138 = vmatpush2.msra.mxu0 0.0
      %2139 = vmatprep.subr.mxu0 0.0
      %2140 = vmatpush2.msra.mxu0 0.0
      %2141 = vmatprep.subr.mxu0 0.0
      %2142 = vmatpush2.msra.mxu0 0.0
      %2143 = vmatprep.subr.mxu0 0.0
      %2144 = vmatpush2.msra.mxu0 0.0
      %2145 = vmatprep.subr.mxu0 0.0
      %2146 = vmatpush2.msra.mxu0 0.0
      %2147 = vmatprep.mubr.f32.mxu0 0.0
      %2148 = vmatmul.mubr.f32.gmra.mxu0 %v2078
      %v2149 = vpop.f32.mrf.mxu0
      %v2150 = vadd.f32 %v2075, %v2149
      %v2151 = vpop.f32.mrf.mxu0
      %2152 = vdwg.mxu0
      %vm2153 = vcmp.ge.f32.partialorder %v2150, 0.0
      %v2154 = vmul.f32 %v2150, 0.2
      %v2155 = vsel %vm2153, %v2150, %v2154
      %v2156 = vpack.c.bf16 %v2155, %v2155
      %v2158 = vunpack.c.l.b16 %v2156
      %v2159 = vpack.c.b16 %v2158, %v2158
      %v2160 = vrot.slane %v2159, 7
      %2161 = vrot.lane.b32.xlu0 %v2160, 64
      %v2162 = vpop.permute.xlu0 %2161
      %v2163 = vrot.slane %v2162, 4
      %vm2164 = vcmask 523264
      %v2165 = vsel %vm2164, %v2163, %v2162
      %vm2167 = vcmask 1042945
      %vm2168 = vmand %vm2167, %vm394
      %vm2169 = vcmask 260101
      %vm2170 = vmand %vm2169, %vm766
      %vm2171 = vmor %vm2170, %vm2168
      %v2172 = vld [vmem:[#allocation5] sm:$0x66]
      %v2173 = vsel %vm2171, %v2165, %v2172
      %2174 = vst [vmem:[#allocation5] sm:$0x66] %v2173
      %v2175 = vld [vmem:[#allocation5] sm:$0x33]
      %v2176 = vld [vmem:[%s7] sm:$0xff]
      %v2177 = vld [vmem:[%s7 + $0x8] sm:$0xff]
      %v2178 = vld [vmem:[%s7 + $0x10] sm:$0xff]
      %v2179 = vld [vmem:[%s7 + $0x18] sm:$0xff]
      %v2180 = vld [vmem:[%s7 + $0x20] sm:$0xff]
      %v2181 = vld [vmem:[%s7 + $0x28] sm:$0xff]
      %v2182 = vld [vmem:[%s7 + $0x30] sm:$0xff]
      %v2183 = vld [vmem:[%s7 + $0x38] sm:$0xff]
      %v2184 = vld [vmem:[%s7 + $0x40] sm:$0xff]
      %v2185 = vld [vmem:[%s7 + $0x48] sm:$0xff]
      %v2186 = vld [vmem:[%s7 + $0x50] sm:$0xff]
      %v2187 = vld [vmem:[%s7 + $0x58] sm:$0xff]
      %v2188 = vld [vmem:[%s7 + $0x60] sm:$0xff]
      %v2189 = vld [vmem:[%s7 + $0x68] sm:$0xff]
      %v2190 = vld [vmem:[%s7 + $0x70] sm:$0xff]
      %v2191 = vld [vmem:[%s7 + $0x78] sm:$0xff]
      %v2192 = vld [vmem:[%s7 + $0x80] sm:$0xff]
      %v2193 = vld [vmem:[%s7 + $0x88] sm:$0xff]
      %v2194 = vld [vmem:[%s7 + $0x90] sm:$0xff]
      %v2195 = vld [vmem:[%s7 + $0x98] sm:$0xff]
      %v2196 = vld [vmem:[%s7 + $0xa0] sm:$0xff]
      %v2197 = vld [vmem:[%s7 + $0xa8] sm:$0xff]
      %v2198 = vld [vmem:[%s7 + $0xb0] sm:$0xff]
      %v2199 = vld [vmem:[%s7 + $0xb8] sm:$0xff]
      %v2200 = vld [vmem:[%s7 + $0xc0] sm:$0xff]
      %v2201 = vld [vmem:[%s7 + $0xc8] sm:$0xff]
      %v2202 = vld [vmem:[%s7 + $0xd0] sm:$0xff]
      %v2203 = vld [vmem:[%s7 + $0xd8] sm:$0xff]
      %v2204 = vld [vmem:[#allocation5] sm:$0x77]
      %s2205 = scalar_lea.vmem %s7, 224
      %v2206 = vld [vmem:[%s2205] sm:$0xff]
      %v2207 = vld [vmem:[%s2205 + $0x8] sm:$0xff]
      %v2208 = vld [vmem:[%s2205 + $0x10] sm:$0xff]
      %v2209 = vld [vmem:[%s2205 + $0x18] sm:$0xff]
      %v2210 = vld [vmem:[%s2205 + $0x20] sm:$0xff]
      %v2211 = vld [vmem:[%s2205 + $0x28] sm:$0xff]
      %v2212 = vld [vmem:[%s2205 + $0x30] sm:$0xff]
      %v2213 = vld [vmem:[%s2205 + $0x38] sm:$0xff]
      %v2214 = vld [vmem:[%s2205 + $0x40] sm:$0xff]
      %v2215 = vld [vmem:[%s2205 + $0x48] sm:$0xff]
      %v2216 = vld [vmem:[%s2205 + $0x50] sm:$0xff]
      %v2217 = vld [vmem:[%s2205 + $0x58] sm:$0xff]
      %v2218 = vld [vmem:[%s2205 + $0x60] sm:$0xff]
      %v2219 = vld [vmem:[%s2205 + $0x68] sm:$0xff]
      %v2220 = vld [vmem:[%s2205 + $0x70] sm:$0xff]
      %v2221 = vld [vmem:[%s2205 + $0x78] sm:$0xff]
      %v2222 = vld [vmem:[%s2205 + $0x80] sm:$0xff]
      %v2223 = vld [vmem:[%s2205 + $0x88] sm:$0xff]
      %v2224 = vld [vmem:[%s2205 + $0x90] sm:$0xff]
      %v2225 = vld [vmem:[%s2205 + $0x98] sm:$0xff]
      %v2226 = vld [vmem:[%s2205 + $0xa0] sm:$0xff]
      %v2227 = vld [vmem:[%s2205 + $0xa8] sm:$0xff]
      %v2228 = vld [vmem:[%s2205 + $0xb0] sm:$0xff]
      %v2229 = vld [vmem:[%s2205 + $0xb8] sm:$0xff]
      %v2230 = vld [vmem:[%s2205 + $0xc0] sm:$0xff]
      %v2231 = vld [vmem:[%s2205 + $0xc8] sm:$0xff]
      %v2232 = vld [vmem:[%s2205 + $0xd0] sm:$0xff]
      %v2233 = vld [vmem:[%s2205 + $0xd8] sm:$0xff]
      %v2235 = vunpack.c.l.b16 %v2204
      %v2236 = vunpack.c.h.b16 %v2204
      %v2237 = vpack.c.b16 %v2235, %v2235
      %v2238 = vpack.c.b16 %v2236, %v2236
      %v2240 = vshrl.u32 %v2237, 16
      %v2242 = vshll.u32 %v2237, 16
      %v2244 = vrot.slane %v2242, 1
      %v2245 = vor.u32 %v2240, %v2244
      %v2247 = vshrl.u32 %v2238, 16
      %v2249 = vshll.u32 %v2238, 16
      %v2251 = vrot.slane %v2249, 1
      %v2252 = vor.u32 %v2247, %v2251
      %v2282 = vunpack.c.l.b16 %v2206
      %v2283 = vunpack.c.h.b16 %v2206
      %v2284 = vunpack.c.l.b16 %v2207
      %v2285 = vunpack.c.h.b16 %v2207
      %v2286 = vunpack.c.l.b16 %v2208
      %v2287 = vunpack.c.h.b16 %v2208
      %v2288 = vunpack.c.l.b16 %v2209
      %v2289 = vunpack.c.h.b16 %v2209
      %v2290 = vunpack.c.l.b16 %v2210
      %v2291 = vunpack.c.h.b16 %v2210
      %v2292 = vunpack.c.l.b16 %v2211
      %v2293 = vunpack.c.h.b16 %v2211
      %v2294 = vunpack.c.l.b16 %v2212
      %v2295 = vunpack.c.h.b16 %v2212
      %v2296 = vunpack.c.l.b16 %v2213
      %v2297 = vunpack.c.h.b16 %v2213
      %v2298 = vunpack.c.l.b16 %v2214
      %v2299 = vunpack.c.h.b16 %v2214
      %v2300 = vunpack.c.l.b16 %v2215
      %v2301 = vunpack.c.h.b16 %v2215
      %v2302 = vunpack.c.l.b16 %v2216
      %v2303 = vunpack.c.h.b16 %v2216
      %v2304 = vunpack.c.l.b16 %v2217
      %v2305 = vunpack.c.h.b16 %v2217
      %v2306 = vunpack.c.l.b16 %v2218
      %v2307 = vunpack.c.h.b16 %v2218
      %v2308 = vunpack.c.l.b16 %v2219
      %v2309 = vunpack.c.h.b16 %v2219
      %v2310 = vunpack.c.l.b16 %v2220
      %v2311 = vunpack.c.h.b16 %v2220
      %v2312 = vunpack.c.l.b16 %v2221
      %v2313 = vunpack.c.h.b16 %v2221
      %v2314 = vunpack.c.l.b16 %v2222
      %v2315 = vunpack.c.h.b16 %v2222
      %v2316 = vunpack.c.l.b16 %v2223
      %v2317 = vunpack.c.h.b16 %v2223
      %v2318 = vunpack.c.l.b16 %v2224
      %v2319 = vunpack.c.h.b16 %v2224
      %v2320 = vunpack.c.l.b16 %v2225
      %v2321 = vunpack.c.h.b16 %v2225
      %v2322 = vunpack.c.l.b16 %v2226
      %v2323 = vunpack.c.h.b16 %v2226
      %v2324 = vunpack.c.l.b16 %v2227
      %v2325 = vunpack.c.h.b16 %v2227
      %v2326 = vunpack.c.l.b16 %v2228
      %v2327 = vunpack.c.h.b16 %v2228
      %v2328 = vunpack.c.l.b16 %v2229
      %v2329 = vunpack.c.h.b16 %v2229
      %v2330 = vunpack.c.l.b16 %v2230
      %v2331 = vunpack.c.h.b16 %v2230
      %v2332 = vunpack.c.l.b16 %v2231
      %v2333 = vunpack.c.h.b16 %v2231
      %v2334 = vunpack.c.l.b16 %v2232
      %v2335 = vunpack.c.h.b16 %v2232
      %v2336 = vunpack.c.l.b16 %v2233
      %v2337 = vunpack.c.h.b16 %v2233
      %v2338 = vpack.c.b16 %v2284, %v2282
      %v2339 = vpack.c.b16 %v2285, %v2283
      %v2340 = vpack.c.b16 %v2288, %v2286
      %v2341 = vpack.c.b16 %v2289, %v2287
      %v2342 = vpack.c.b16 %v2292, %v2290
      %v2343 = vpack.c.b16 %v2293, %v2291
      %v2344 = vpack.c.b16 %v2296, %v2294
      %v2345 = vpack.c.b16 %v2297, %v2295
      %v2346 = vpack.c.b16 %v2300, %v2298
      %v2347 = vpack.c.b16 %v2301, %v2299
      %v2348 = vpack.c.b16 %v2304, %v2302
      %v2349 = vpack.c.b16 %v2305, %v2303
      %v2350 = vpack.c.b16 %v2308, %v2306
      %v2351 = vpack.c.b16 %v2309, %v2307
      %v2352 = vpack.c.b16 %v2312, %v2310
      %v2353 = vpack.c.b16 %v2313, %v2311
      %v2354 = vpack.c.b16 %v2316, %v2314
      %v2355 = vpack.c.b16 %v2317, %v2315
      %v2356 = vpack.c.b16 %v2320, %v2318
      %v2357 = vpack.c.b16 %v2321, %v2319
      %v2358 = vpack.c.b16 %v2324, %v2322
      %v2359 = vpack.c.b16 %v2325, %v2323
      %v2360 = vpack.c.b16 %v2328, %v2326
      %v2361 = vpack.c.b16 %v2329, %v2327
      %v2362 = vpack.c.b16 %v2332, %v2330
      %v2363 = vpack.c.b16 %v2333, %v2331
      %v2364 = vpack.c.b16 %v2336, %v2334
      %v2365 = vpack.c.b16 %v2337, %v2335
      %vm2394 = vcmask 785408
      %v2396 = vsel %vm2394, %v2252, 0
      %2398 = vmatprep.subr.bf16.mxu0 %v2353
      %2399 = vmatpush1.bf16.msra.mxu0 %v2352
      %2400 = vmatprep.subr.bf16.mxu0 %v2351
      %2401 = vmatpush1.bf16.msra.mxu0 %v2350
      %2402 = vmatprep.subr.bf16.mxu0 %v2349
      %2403 = vmatpush1.bf16.msra.mxu0 %v2348
      %2404 = vmatprep.subr.bf16.mxu0 %v2347
      %2405 = vmatpush1.bf16.msra.mxu0 %v2346
      %2406 = vmatprep.subr.bf16.mxu0 %v2345
      %2407 = vmatpush1.bf16.msra.mxu0 %v2344
      %2408 = vmatprep.subr.bf16.mxu0 %v2343
      %2409 = vmatpush1.bf16.msra.mxu0 %v2342
      %2410 = vmatprep.subr.bf16.mxu0 %v2341
      %2411 = vmatpush1.bf16.msra.mxu0 %v2340
      %2412 = vmatprep.subr.bf16.mxu0 %v2339
      %2413 = vmatpush1.bf16.msra.mxu0 %v2338
      %2414 = vmatprep.subr.bf16.mxu0 0
      %2415 = vmatpush2.bf16.msra.mxu0 0
      %2416 = vmatprep.subr.bf16.mxu0 0
      %2417 = vmatpush2.bf16.msra.mxu0 0
      %2418 = vmatprep.subr.bf16.mxu0 %v2365
      %2419 = vmatpush2.bf16.msra.mxu0 %v2364
      %2420 = vmatprep.subr.bf16.mxu0 %v2363
      %2421 = vmatpush2.bf16.msra.mxu0 %v2362
      %2422 = vmatprep.subr.bf16.mxu0 %v2361
      %2423 = vmatpush2.bf16.msra.mxu0 %v2360
      %2424 = vmatprep.subr.bf16.mxu0 %v2359
      %2425 = vmatpush2.bf16.msra.mxu0 %v2358
      %2426 = vmatprep.subr.bf16.mxu0 %v2357
      %2427 = vmatpush2.bf16.msra.mxu0 %v2356
      %2428 = vmatprep.subr.bf16.mxu0 %v2355
      %2429 = vmatpush2.bf16.msra.mxu0 %v2354
      %2430 = vmatprep.mubr.bf16.mxu0 %v2396
      %2431 = vmatmul.mubr.bf16.gmra.mxu0 %v2245
      %v2432 = vpop.f32.mrf.mxu0
      %v2433 = vadd.f32 0.0, %v2432
      %v2434 = vpop.f32.mrf.mxu0
      %v2435 = vadd.f32 0.0, %v2434
      %v2436 = vpop.f32.mrf.mxu0
      %v2437 = vpop.f32.mrf.mxu0
      %2438 = vdwg.mxu0
      %v2440 = vunpack.c.l.b16 %v2175
      %v2441 = vunpack.c.h.b16 %v2175
      %v2442 = vpack.c.b16 %v2440, %v2440
      %v2443 = vpack.c.b16 %v2441, %v2441
      %v2473 = vunpack.c.l.b16 %v2176
      %v2474 = vunpack.c.h.b16 %v2176
      %v2475 = vunpack.c.l.b16 %v2177
      %v2476 = vunpack.c.h.b16 %v2177
      %v2477 = vunpack.c.l.b16 %v2178
      %v2478 = vunpack.c.h.b16 %v2178
      %v2479 = vunpack.c.l.b16 %v2179
      %v2480 = vunpack.c.h.b16 %v2179
      %v2481 = vunpack.c.l.b16 %v2180
      %v2482 = vunpack.c.h.b16 %v2180
      %v2483 = vunpack.c.l.b16 %v2181
      %v2484 = vunpack.c.h.b16 %v2181
      %v2485 = vunpack.c.l.b16 %v2182
      %v2486 = vunpack.c.h.b16 %v2182
      %v2487 = vunpack.c.l.b16 %v2183
      %v2488 = vunpack.c.h.b16 %v2183
      %v2489 = vunpack.c.l.b16 %v2184
      %v2490 = vunpack.c.h.b16 %v2184
      %v2491 = vunpack.c.l.b16 %v2185
      %v2492 = vunpack.c.h.b16 %v2185
      %v2493 = vunpack.c.l.b16 %v2186
      %v2494 = vunpack.c.h.b16 %v2186
      %v2495 = vunpack.c.l.b16 %v2187
      %v2496 = vunpack.c.h.b16 %v2187
      %v2497 = vunpack.c.l.b16 %v2188
      %v2498 = vunpack.c.h.b16 %v2188
      %v2499 = vunpack.c.l.b16 %v2189
      %v2500 = vunpack.c.h.b16 %v2189
      %v2501 = vunpack.c.l.b16 %v2190
      %v2502 = vunpack.c.h.b16 %v2190
      %v2503 = vunpack.c.l.b16 %v2191
      %v2504 = vunpack.c.h.b16 %v2191
      %v2505 = vunpack.c.l.b16 %v2192
      %v2506 = vunpack.c.h.b16 %v2192
      %v2507 = vunpack.c.l.b16 %v2193
      %v2508 = vunpack.c.h.b16 %v2193
      %v2509 = vunpack.c.l.b16 %v2194
      %v2510 = vunpack.c.h.b16 %v2194
      %v2511 = vunpack.c.l.b16 %v2195
      %v2512 = vunpack.c.h.b16 %v2195
      %v2513 = vunpack.c.l.b16 %v2196
      %v2514 = vunpack.c.h.b16 %v2196
      %v2515 = vunpack.c.l.b16 %v2197
      %v2516 = vunpack.c.h.b16 %v2197
      %v2517 = vunpack.c.l.b16 %v2198
      %v2518 = vunpack.c.h.b16 %v2198
      %v2519 = vunpack.c.l.b16 %v2199
      %v2520 = vunpack.c.h.b16 %v2199
      %v2521 = vunpack.c.l.b16 %v2200
      %v2522 = vunpack.c.h.b16 %v2200
      %v2523 = vunpack.c.l.b16 %v2201
      %v2524 = vunpack.c.h.b16 %v2201
      %v2525 = vunpack.c.l.b16 %v2202
      %v2526 = vunpack.c.h.b16 %v2202
      %v2527 = vunpack.c.l.b16 %v2203
      %v2528 = vunpack.c.h.b16 %v2203
      %v2529 = vpack.c.b16 %v2475, %v2473
      %v2530 = vpack.c.b16 %v2476, %v2474
      %v2531 = vpack.c.b16 %v2479, %v2477
      %v2532 = vpack.c.b16 %v2480, %v2478
      %v2533 = vpack.c.b16 %v2483, %v2481
      %v2534 = vpack.c.b16 %v2484, %v2482
      %v2535 = vpack.c.b16 %v2487, %v2485
      %v2536 = vpack.c.b16 %v2488, %v2486
      %v2537 = vpack.c.b16 %v2491, %v2489
      %v2538 = vpack.c.b16 %v2492, %v2490
      %v2539 = vpack.c.b16 %v2495, %v2493
      %v2540 = vpack.c.b16 %v2496, %v2494
      %v2541 = vpack.c.b16 %v2499, %v2497
      %v2542 = vpack.c.b16 %v2500, %v2498
      %v2543 = vpack.c.b16 %v2503, %v2501
      %v2544 = vpack.c.b16 %v2504, %v2502
      %v2545 = vpack.c.b16 %v2507, %v2505
      %v2546 = vpack.c.b16 %v2508, %v2506
      %v2547 = vpack.c.b16 %v2511, %v2509
      %v2548 = vpack.c.b16 %v2512, %v2510
      %v2549 = vpack.c.b16 %v2515, %v2513
      %v2550 = vpack.c.b16 %v2516, %v2514
      %v2551 = vpack.c.b16 %v2519, %v2517
      %v2552 = vpack.c.b16 %v2520, %v2518
      %v2553 = vpack.c.b16 %v2523, %v2521
      %v2554 = vpack.c.b16 %v2524, %v2522
      %v2555 = vpack.c.b16 %v2527, %v2525
      %v2556 = vpack.c.b16 %v2528, %v2526
      %v2586 = vsel %vm2394, %v2443, 0
      %2588 = vmatprep.subr.bf16.mxu0 %v2544
      %2589 = vmatpush1.bf16.msra.mxu0 %v2543
      %2590 = vmatprep.subr.bf16.mxu0 %v2542
      %2591 = vmatpush1.bf16.msra.mxu0 %v2541
      %2592 = vmatprep.subr.bf16.mxu0 %v2540
      %2593 = vmatpush1.bf16.msra.mxu0 %v2539
      %2594 = vmatprep.subr.bf16.mxu0 %v2538
      %2595 = vmatpush1.bf16.msra.mxu0 %v2537
      %2596 = vmatprep.subr.bf16.mxu0 %v2536
      %2597 = vmatpush1.bf16.msra.mxu0 %v2535
      %2598 = vmatprep.subr.bf16.mxu0 %v2534
      %2599 = vmatpush1.bf16.msra.mxu0 %v2533
      %2600 = vmatprep.subr.bf16.mxu0 %v2532
      %2601 = vmatpush1.bf16.msra.mxu0 %v2531
      %2602 = vmatprep.subr.bf16.mxu0 %v2530
      %2603 = vmatpush1.bf16.msra.mxu0 %v2529
      %2604 = vmatprep.subr.bf16.mxu0 0
      %2605 = vmatpush2.bf16.msra.mxu0 0
      %2606 = vmatprep.subr.bf16.mxu0 0
      %2607 = vmatpush2.bf16.msra.mxu0 0
      %2608 = vmatprep.subr.bf16.mxu0 %v2556
      %2609 = vmatpush2.bf16.msra.mxu0 %v2555
      %2610 = vmatprep.subr.bf16.mxu0 %v2554
      %2611 = vmatpush2.bf16.msra.mxu0 %v2553
      %2612 = vmatprep.subr.bf16.mxu0 %v2552
      %2613 = vmatpush2.bf16.msra.mxu0 %v2551
      %2614 = vmatprep.subr.bf16.mxu0 %v2550
      %2615 = vmatpush2.bf16.msra.mxu0 %v2549
      %2616 = vmatprep.subr.bf16.mxu0 %v2548
      %2617 = vmatpush2.bf16.msra.mxu0 %v2547
      %2618 = vmatprep.subr.bf16.mxu0 %v2546
      %2619 = vmatpush2.bf16.msra.mxu0 %v2545
      %2620 = vmatprep.mubr.bf16.mxu0 %v2586
      %2621 = vmatmul.mubr.bf16.gmra.mxu0 %v2442
      %v2622 = vpop.f32.mrf.mxu0
      %v2623 = vadd.f32 %v2433, %v2622
      %v2624 = vpop.f32.mrf.mxu0
      %v2625 = vadd.f32 %v2435, %v2624
      %v2626 = vpop.f32.mrf.mxu0
      %v2627 = vpop.f32.mrf.mxu0
      %2628 = vdwg.mxu0
      %v2629 = vld [vmem:[#allocation5] sm:$0x66]
      %s2630 = scalar_lea.vmem %s7, 448
      %v2631 = vld [vmem:[%s2630] sm:$0xff]
      %v2632 = vld [vmem:[%s2630 + $0x8] sm:$0xff]
      %v2633 = vld [vmem:[%s2630 + $0x10] sm:$0xff]
      %v2634 = vld [vmem:[%s2630 + $0x18] sm:$0xff]
      %v2635 = vld [vmem:[%s2630 + $0x20] sm:$0xff]
      %v2636 = vld [vmem:[%s2630 + $0x28] sm:$0xff]
      %v2637 = vld [vmem:[%s2630 + $0x30] sm:$0xff]
      %v2638 = vld [vmem:[%s2630 + $0x38] sm:$0xff]
      %v2639 = vld [vmem:[%s2630 + $0x40] sm:$0xff]
      %v2640 = vld [vmem:[%s2630 + $0x48] sm:$0xff]
      %v2641 = vld [vmem:[%s2630 + $0x50] sm:$0xff]
      %v2642 = vld [vmem:[%s2630 + $0x58] sm:$0xff]
      %v2643 = vld [vmem:[%s2630 + $0x60] sm:$0xff]
      %v2644 = vld [vmem:[%s2630 + $0x68] sm:$0xff]
      %v2645 = vld [vmem:[%s2630 + $0x70] sm:$0xff]
      %v2646 = vld [vmem:[%s2630 + $0x78] sm:$0xff]
      %v2647 = vld [vmem:[%s2630 + $0x80] sm:$0xff]
      %v2648 = vld [vmem:[%s2630 + $0x88] sm:$0xff]
      %v2649 = vld [vmem:[%s2630 + $0x90] sm:$0xff]
      %v2650 = vld [vmem:[%s2630 + $0x98] sm:$0xff]
      %v2651 = vld [vmem:[%s2630 + $0xa0] sm:$0xff]
      %v2652 = vld [vmem:[%s2630 + $0xa8] sm:$0xff]
      %v2653 = vld [vmem:[%s2630 + $0xb0] sm:$0xff]
      %v2654 = vld [vmem:[%s2630 + $0xb8] sm:$0xff]
      %v2655 = vld [vmem:[%s2630 + $0xc0] sm:$0xff]
      %v2656 = vld [vmem:[%s2630 + $0xc8] sm:$0xff]
      %v2657 = vld [vmem:[%s2630 + $0xd0] sm:$0xff]
      %v2658 = vld [vmem:[%s2630 + $0xd8] sm:$0xff]
      %v2660 = vunpack.c.l.b16 %v2629
      %v2661 = vunpack.c.h.b16 %v2629
      %v2662 = vpack.c.b16 %v2660, %v2660
      %v2663 = vpack.c.b16 %v2661, %v2661
      %v2664 = vrot.slane %v2662, 1
      %v2665 = vrot.slane %v2663, 1
      %v2695 = vunpack.c.l.b16 %v2631
      %v2696 = vunpack.c.h.b16 %v2631
      %v2697 = vunpack.c.l.b16 %v2632
      %v2698 = vunpack.c.h.b16 %v2632
      %v2699 = vunpack.c.l.b16 %v2633
      %v2700 = vunpack.c.h.b16 %v2633
      %v2701 = vunpack.c.l.b16 %v2634
      %v2702 = vunpack.c.h.b16 %v2634
      %v2703 = vunpack.c.l.b16 %v2635
      %v2704 = vunpack.c.h.b16 %v2635
      %v2705 = vunpack.c.l.b16 %v2636
      %v2706 = vunpack.c.h.b16 %v2636
      %v2707 = vunpack.c.l.b16 %v2637
      %v2708 = vunpack.c.h.b16 %v2637
      %v2709 = vunpack.c.l.b16 %v2638
      %v2710 = vunpack.c.h.b16 %v2638
      %v2711 = vunpack.c.l.b16 %v2639
      %v2712 = vunpack.c.h.b16 %v2639
      %v2713 = vunpack.c.l.b16 %v2640
      %v2714 = vunpack.c.h.b16 %v2640
      %v2715 = vunpack.c.l.b16 %v2641
      %v2716 = vunpack.c.h.b16 %v2641
      %v2717 = vunpack.c.l.b16 %v2642
      %v2718 = vunpack.c.h.b16 %v2642
      %v2719 = vunpack.c.l.b16 %v2643
      %v2720 = vunpack.c.h.b16 %v2643
      %v2721 = vunpack.c.l.b16 %v2644
      %v2722 = vunpack.c.h.b16 %v2644
      %v2723 = vunpack.c.l.b16 %v2645
      %v2724 = vunpack.c.h.b16 %v2645
      %v2725 = vunpack.c.l.b16 %v2646
      %v2726 = vunpack.c.h.b16 %v2646
      %v2727 = vunpack.c.l.b16 %v2647
      %v2728 = vunpack.c.h.b16 %v2647
      %v2729 = vunpack.c.l.b16 %v2648
      %v2730 = vunpack.c.h.b16 %v2648
      %v2731 = vunpack.c.l.b16 %v2649
      %v2732 = vunpack.c.h.b16 %v2649
      %v2733 = vunpack.c.l.b16 %v2650
      %v2734 = vunpack.c.h.b16 %v2650
      %v2735 = vunpack.c.l.b16 %v2651
      %v2736 = vunpack.c.h.b16 %v2651
      %v2737 = vunpack.c.l.b16 %v2652
      %v2738 = vunpack.c.h.b16 %v2652
      %v2739 = vunpack.c.l.b16 %v2653
      %v2740 = vunpack.c.h.b16 %v2653
      %v2741 = vunpack.c.l.b16 %v2654
      %v2742 = vunpack.c.h.b16 %v2654
      %v2743 = vunpack.c.l.b16 %v2655
      %v2744 = vunpack.c.h.b16 %v2655
      %v2745 = vunpack.c.l.b16 %v2656
      %v2746 = vunpack.c.h.b16 %v2656
      %v2747 = vunpack.c.l.b16 %v2657
      %v2748 = vunpack.c.h.b16 %v2657
      %v2749 = vunpack.c.l.b16 %v2658
      %v2750 = vunpack.c.h.b16 %v2658
      %v2751 = vpack.c.b16 %v2697, %v2695
      %v2752 = vpack.c.b16 %v2698, %v2696
      %v2753 = vpack.c.b16 %v2701, %v2699
      %v2754 = vpack.c.b16 %v2702, %v2700
      %v2755 = vpack.c.b16 %v2705, %v2703
      %v2756 = vpack.c.b16 %v2706, %v2704
      %v2757 = vpack.c.b16 %v2709, %v2707
      %v2758 = vpack.c.b16 %v2710, %v2708
      %v2759 = vpack.c.b16 %v2713, %v2711
      %v2760 = vpack.c.b16 %v2714, %v2712
      %v2761 = vpack.c.b16 %v2717, %v2715
      %v2762 = vpack.c.b16 %v2718, %v2716
      %v2763 = vpack.c.b16 %v2721, %v2719
      %v2764 = vpack.c.b16 %v2722, %v2720
      %v2765 = vpack.c.b16 %v2725, %v2723
      %v2766 = vpack.c.b16 %v2726, %v2724
      %v2767 = vpack.c.b16 %v2729, %v2727
      %v2768 = vpack.c.b16 %v2730, %v2728
      %v2769 = vpack.c.b16 %v2733, %v2731
      %v2770 = vpack.c.b16 %v2734, %v2732
      %v2771 = vpack.c.b16 %v2737, %v2735
      %v2772 = vpack.c.b16 %v2738, %v2736
      %v2773 = vpack.c.b16 %v2741, %v2739
      %v2774 = vpack.c.b16 %v2742, %v2740
      %v2775 = vpack.c.b16 %v2745, %v2743
      %v2776 = vpack.c.b16 %v2746, %v2744
      %v2777 = vpack.c.b16 %v2749, %v2747
      %v2778 = vpack.c.b16 %v2750, %v2748
      %v2808 = vsel %vm2394, %v2665, 0
      %2810 = vmatprep.subr.bf16.mxu0 %v2766
      %2811 = vmatpush1.bf16.msra.mxu0 %v2765
      %2812 = vmatprep.subr.bf16.mxu0 %v2764
      %2813 = vmatpush1.bf16.msra.mxu0 %v2763
      %2814 = vmatprep.subr.bf16.mxu0 %v2762
      %2815 = vmatpush1.bf16.msra.mxu0 %v2761
      %2816 = vmatprep.subr.bf16.mxu0 %v2760
      %2817 = vmatpush1.bf16.msra.mxu0 %v2759
      %2818 = vmatprep.subr.bf16.mxu0 %v2758
      %2819 = vmatpush1.bf16.msra.mxu0 %v2757
      %2820 = vmatprep.subr.bf16.mxu0 %v2756
      %2821 = vmatpush1.bf16.msra.mxu0 %v2755
      %2822 = vmatprep.subr.bf16.mxu0 %v2754
      %2823 = vmatpush1.bf16.msra.mxu0 %v2753
      %2824 = vmatprep.subr.bf16.mxu0 %v2752
      %2825 = vmatpush1.bf16.msra.mxu0 %v2751
      %2826 = vmatprep.subr.bf16.mxu0 0
      %2827 = vmatpush2.bf16.msra.mxu0 0
      %2828 = vmatprep.subr.bf16.mxu0 0
      %2829 = vmatpush2.bf16.msra.mxu0 0
      %2830 = vmatprep.subr.bf16.mxu0 %v2778
      %2831 = vmatpush2.bf16.msra.mxu0 %v2777
      %2832 = vmatprep.subr.bf16.mxu0 %v2776
      %2833 = vmatpush2.bf16.msra.mxu0 %v2775
      %2834 = vmatprep.subr.bf16.mxu0 %v2774
      %2835 = vmatpush2.bf16.msra.mxu0 %v2773
      %2836 = vmatprep.subr.bf16.mxu0 %v2772
      %2837 = vmatpush2.bf16.msra.mxu0 %v2771
      %2838 = vmatprep.subr.bf16.mxu0 %v2770
      %2839 = vmatpush2.bf16.msra.mxu0 %v2769
      %2840 = vmatprep.subr.bf16.mxu0 %v2768
      %2841 = vmatpush2.bf16.msra.mxu0 %v2767
      %2842 = vmatprep.mubr.bf16.mxu0 %v2808
      %2843 = vmatmul.mubr.bf16.gmra.mxu0 %v2664
      %v2844 = vpop.f32.mrf.mxu0
      %v2845 = vadd.f32 0.0, %v2844
      %v2846 = vpop.f32.mrf.mxu0
      %v2847 = vadd.f32 0.0, %v2846
      %v2848 = vpop.f32.mrf.mxu0
      %v2849 = vpop.f32.mrf.mxu0
      %2850 = vdwg.mxu0
      %v2851 = vadd.f32 %v2623, %v2845
      %v2852 = vadd.f32 %v2625, %v2847
      %v2853 = vld [vmem:[#allocation5] sm:$0xee]
      %s2854 = scalar_lea.vmem %s7, 672
      %v2855 = vld [vmem:[%s2854] sm:$0xff]
      %v2856 = vld [vmem:[%s2854 + $0x8] sm:$0xff]
      %v2857 = vld [vmem:[%s2854 + $0x10] sm:$0xff]
      %v2858 = vld [vmem:[%s2854 + $0x18] sm:$0xff]
      %v2859 = vld [vmem:[%s2854 + $0x20] sm:$0xff]
      %v2860 = vld [vmem:[%s2854 + $0x28] sm:$0xff]
      %v2861 = vld [vmem:[%s2854 + $0x30] sm:$0xff]
      %v2862 = vld [vmem:[%s2854 + $0x38] sm:$0xff]
      %v2863 = vld [vmem:[%s2854 + $0x40] sm:$0xff]
      %v2864 = vld [vmem:[%s2854 + $0x48] sm:$0xff]
      %v2865 = vld [vmem:[%s2854 + $0x50] sm:$0xff]
      %v2866 = vld [vmem:[%s2854 + $0x58] sm:$0xff]
      %v2867 = vld [vmem:[%s2854 + $0x60] sm:$0xff]
      %v2868 = vld [vmem:[%s2854 + $0x68] sm:$0xff]
      %v2869 = vld [vmem:[%s2854 + $0x70] sm:$0xff]
      %v2870 = vld [vmem:[%s2854 + $0x78] sm:$0xff]
      %v2871 = vld [vmem:[%s2854 + $0x80] sm:$0xff]
      %v2872 = vld [vmem:[%s2854 + $0x88] sm:$0xff]
      %v2873 = vld [vmem:[%s2854 + $0x90] sm:$0xff]
      %v2874 = vld [vmem:[%s2854 + $0x98] sm:$0xff]
      %v2875 = vld [vmem:[%s2854 + $0xa0] sm:$0xff]
      %v2876 = vld [vmem:[%s2854 + $0xa8] sm:$0xff]
      %v2877 = vld [vmem:[%s2854 + $0xb0] sm:$0xff]
      %v2878 = vld [vmem:[%s2854 + $0xb8] sm:$0xff]
      %v2879 = vld [vmem:[%s2854 + $0xc0] sm:$0xff]
      %v2880 = vld [vmem:[%s2854 + $0xc8] sm:$0xff]
      %v2881 = vld [vmem:[%s2854 + $0xd0] sm:$0xff]
      %v2882 = vld [vmem:[%s2854 + $0xd8] sm:$0xff]
      %v2884 = vunpack.c.l.b16 %v2853
      %v2885 = vunpack.c.h.b16 %v2853
      %v2886 = vpack.c.b16 %v2884, %v2884
      %v2887 = vpack.c.b16 %v2885, %v2885
      %v2889 = vshrl.u32 %v2886, 16
      %v2891 = vrot.slane %v2889, 1
      %v2892 = vshll.u32 %v2886, 16
      %v2894 = vrot.slane %v2892, 2
      %v2895 = vor.u32 %v2891, %v2894
      %v2897 = vshrl.u32 %v2887, 16
      %v2899 = vrot.slane %v2897, 1
      %v2900 = vshll.u32 %v2887, 16
      %v2902 = vrot.slane %v2900, 2
      %v2903 = vor.u32 %v2899, %v2902
      %v2933 = vunpack.c.l.b16 %v2855
      %v2934 = vunpack.c.h.b16 %v2855
      %v2935 = vunpack.c.l.b16 %v2856
      %v2936 = vunpack.c.h.b16 %v2856
      %v2937 = vunpack.c.l.b16 %v2857
      %v2938 = vunpack.c.h.b16 %v2857
      %v2939 = vunpack.c.l.b16 %v2858
      %v2940 = vunpack.c.h.b16 %v2858
      %v2941 = vunpack.c.l.b16 %v2859
      %v2942 = vunpack.c.h.b16 %v2859
      %v2943 = vunpack.c.l.b16 %v2860
      %v2944 = vunpack.c.h.b16 %v2860
      %v2945 = vunpack.c.l.b16 %v2861
      %v2946 = vunpack.c.h.b16 %v2861
      %v2947 = vunpack.c.l.b16 %v2862
      %v2948 = vunpack.c.h.b16 %v2862
      %v2949 = vunpack.c.l.b16 %v2863
      %v2950 = vunpack.c.h.b16 %v2863
      %v2951 = vunpack.c.l.b16 %v2864
      %v2952 = vunpack.c.h.b16 %v2864
      %v2953 = vunpack.c.l.b16 %v2865
      %v2954 = vunpack.c.h.b16 %v2865
      %v2955 = vunpack.c.l.b16 %v2866
      %v2956 = vunpack.c.h.b16 %v2866
      %v2957 = vunpack.c.l.b16 %v2867
      %v2958 = vunpack.c.h.b16 %v2867
      %v2959 = vunpack.c.l.b16 %v2868
      %v2960 = vunpack.c.h.b16 %v2868
      %v2961 = vunpack.c.l.b16 %v2869
      %v2962 = vunpack.c.h.b16 %v2869
      %v2963 = vunpack.c.l.b16 %v2870
      %v2964 = vunpack.c.h.b16 %v2870
      %v2965 = vunpack.c.l.b16 %v2871
      %v2966 = vunpack.c.h.b16 %v2871
      %v2967 = vunpack.c.l.b16 %v2872
      %v2968 = vunpack.c.h.b16 %v2872
      %v2969 = vunpack.c.l.b16 %v2873
      %v2970 = vunpack.c.h.b16 %v2873
      %v2971 = vunpack.c.l.b16 %v2874
      %v2972 = vunpack.c.h.b16 %v2874
      %v2973 = vunpack.c.l.b16 %v2875
      %v2974 = vunpack.c.h.b16 %v2875
      %v2975 = vunpack.c.l.b16 %v2876
      %v2976 = vunpack.c.h.b16 %v2876
      %v2977 = vunpack.c.l.b16 %v2877
      %v2978 = vunpack.c.h.b16 %v2877
      %v2979 = vunpack.c.l.b16 %v2878
      %v2980 = vunpack.c.h.b16 %v2878
      %v2981 = vunpack.c.l.b16 %v2879
      %v2982 = vunpack.c.h.b16 %v2879
      %v2983 = vunpack.c.l.b16 %v2880
      %v2984 = vunpack.c.h.b16 %v2880
      %v2985 = vunpack.c.l.b16 %v2881
      %v2986 = vunpack.c.h.b16 %v2881
      %v2987 = vunpack.c.l.b16 %v2882
      %v2988 = vunpack.c.h.b16 %v2882
      %v2989 = vpack.c.b16 %v2935, %v2933
      %v2990 = vpack.c.b16 %v2936, %v2934
      %v2991 = vpack.c.b16 %v2939, %v2937
      %v2992 = vpack.c.b16 %v2940, %v2938
      %v2993 = vpack.c.b16 %v2943, %v2941
      %v2994 = vpack.c.b16 %v2944, %v2942
      %v2995 = vpack.c.b16 %v2947, %v2945
      %v2996 = vpack.c.b16 %v2948, %v2946
      %v2997 = vpack.c.b16 %v2951, %v2949
      %v2998 = vpack.c.b16 %v2952, %v2950
      %v2999 = vpack.c.b16 %v2955, %v2953
      %v3000 = vpack.c.b16 %v2956, %v2954
      %v3001 = vpack.c.b16 %v2959, %v2957
      %v3002 = vpack.c.b16 %v2960, %v2958
      %v3003 = vpack.c.b16 %v2963, %v2961
      %v3004 = vpack.c.b16 %v2964, %v2962
      %v3005 = vpack.c.b16 %v2967, %v2965
      %v3006 = vpack.c.b16 %v2968, %v2966
      %v3007 = vpack.c.b16 %v2971, %v2969
      %v3008 = vpack.c.b16 %v2972, %v2970
      %v3009 = vpack.c.b16 %v2975, %v2973
      %v3010 = vpack.c.b16 %v2976, %v2974
      %v3011 = vpack.c.b16 %v2979, %v2977
      %v3012 = vpack.c.b16 %v2980, %v2978
      %v3013 = vpack.c.b16 %v2983, %v2981
      %v3014 = vpack.c.b16 %v2984, %v2982
      %v3015 = vpack.c.b16 %v2987, %v2985
      %v3016 = vpack.c.b16 %v2988, %v2986
      %v3046 = vsel %vm2394, %v2903, 0
      %3048 = vmatprep.subr.bf16.mxu0 %v3004
      %3049 = vmatpush1.bf16.msra.mxu0 %v3003
      %3050 = vmatprep.subr.bf16.mxu0 %v3002
      %3051 = vmatpush1.bf16.msra.mxu0 %v3001
      %3052 = vmatprep.subr.bf16.mxu0 %v3000
      %3053 = vmatpush1.bf16.msra.mxu0 %v2999
      %3054 = vmatprep.subr.bf16.mxu0 %v2998
      %3055 = vmatpush1.bf16.msra.mxu0 %v2997
      %3056 = vmatprep.subr.bf16.mxu0 %v2996
      %3057 = vmatpush1.bf16.msra.mxu0 %v2995
      %3058 = vmatprep.subr.bf16.mxu0 %v2994
      %3059 = vmatpush1.bf16.msra.mxu0 %v2993
      %3060 = vmatprep.subr.bf16.mxu0 %v2992
      %3061 = vmatpush1.bf16.msra.mxu0 %v2991
      %3062 = vmatprep.subr.bf16.mxu0 %v2990
      %3063 = vmatpush1.bf16.msra.mxu0 %v2989
      %3064 = vmatprep.subr.bf16.mxu0 0
      %3065 = vmatpush2.bf16.msra.mxu0 0
      %3066 = vmatprep.subr.bf16.mxu0 0
      %3067 = vmatpush2.bf16.msra.mxu0 0
      %3068 = vmatprep.subr.bf16.mxu0 %v3016
      %3069 = vmatpush2.bf16.msra.mxu0 %v3015
      %3070 = vmatprep.subr.bf16.mxu0 %v3014
      %3071 = vmatpush2.bf16.msra.mxu0 %v3013
      %3072 = vmatprep.subr.bf16.mxu0 %v3012
      %3073 = vmatpush2.bf16.msra.mxu0 %v3011
      %3074 = vmatprep.subr.bf16.mxu0 %v3010
      %3075 = vmatpush2.bf16.msra.mxu0 %v3009
      %3076 = vmatprep.subr.bf16.mxu0 %v3008
      %3077 = vmatpush2.bf16.msra.mxu0 %v3007
      %3078 = vmatprep.subr.bf16.mxu0 %v3006
      %3079 = vmatpush2.bf16.msra.mxu0 %v3005
      %3080 = vmatprep.mubr.bf16.mxu0 %v3046
      %3081 = vmatmul.mubr.bf16.gmra.mxu0 %v2895
      %v3082 = vpop.f32.mrf.mxu0
      %v3083 = vadd.f32 0.0, %v3082
      %v3084 = vpop.f32.mrf.mxu0
      %v3085 = vadd.f32 0.0, %v3084
      %v3086 = vpop.f32.mrf.mxu0
      %v3087 = vpop.f32.mrf.mxu0
      %3088 = vdwg.mxu0
      %v3089 = vadd.f32 %v2851, %v3083
      %v3090 = vadd.f32 %v2852, %v3085
      %v3091 = vld [vmem:[%s8] sm:$0x3]
      %v3093 = vlaneseq
      %v3094 = vshrl.u32 %v3093, 7
      %v3095 = vsub.s32 0, %v3094
      %v3096 = vrot.slane %v3091, %v3095
      %v3097 = vlaneseq
      %v3098 = vshrl.u32 %v3097, 7
      %v3099 = vsub.s32 1, %v3098
      %v3100 = vrot.slane %v3091, %v3099
      %v3103 = vadd.f32 %v3089, %v3096
      %v3104 = vadd.f32 %v3090, %v3100
      %vm3105 = vcmp.ge.f32.partialorder %v3103, 0.0
      %vm3106 = vcmp.ge.f32.partialorder %v3104, 0.0
      %v3107 = vmul.f32 %v3103, 0.2
      %v3108 = vmul.f32 %v3104, 0.2
      %v3109 = vsel %vm3105, %v3103, %v3107
      %v3110 = vsel %vm3106, %v3104, %v3108
      %v3111 = vpack.c.bf16 %v3109, %v3109
      %v3112 = vpack.c.bf16 %v3110, %v3110
      %v3115 = vunpack.c.l.b16 %v3111
      %v3116 = vunpack.c.l.b16 %v3112
      %v3117 = vpack.c.b16 %v3116, %v3115
      %v3118 = vrot.slane %v3117, 7
      %3120 = vst [vmem:[#allocation6 + $0x4] sm:$0x66] %v3118
      %v3121 = vld [vmem:[#allocation6] sm:$0x77]
      %v3122 = vld [vmem:[#allocation6 + $0x8] sm:$0x77]
      %v3123 = vld [vmem:[%s9] sm:$0xf]
      %v3124 = vld [vmem:[%s9 + $0x4] sm:$0xf]
      %v3125 = vld [vmem:[%s9 + $0x8] sm:$0xf]
      %v3126 = vld [vmem:[%s9 + $0xc] sm:$0xf]
      %v3127 = vld [vmem:[%s9 + $0x10] sm:$0xf]
      %v3128 = vld [vmem:[%s9 + $0x14] sm:$0xf]
      %v3129 = vld [vmem:[%s9 + $0x18] sm:$0xf]
      %v3130 = vld [vmem:[%s9 + $0x1c] sm:$0xf]
      %v3131 = vld [vmem:[%s9 + $0x20] sm:$0xf]
      %v3132 = vld [vmem:[%s9 + $0x24] sm:$0xf]
      %v3133 = vld [vmem:[%s9 + $0x28] sm:$0xf]
      %v3134 = vld [vmem:[%s9 + $0x2c] sm:$0xf]
      %v3135 = vld [vmem:[%s9 + $0x30] sm:$0xf]
      %v3136 = vld [vmem:[%s9 + $0x34] sm:$0xf]
      %v3137 = vld [vmem:[%s9 + $0x38] sm:$0xf]
      %v3138 = vld [vmem:[%s9 + $0x3c] sm:$0xf]
      %v3139 = vld [vmem:[%s9 + $0x40] sm:$0xf]
      %v3140 = vld [vmem:[%s9 + $0x44] sm:$0xf]
      %v3141 = vld [vmem:[%s9 + $0x48] sm:$0xf]
      %v3142 = vld [vmem:[%s9 + $0x4c] sm:$0xf]
      %v3143 = vld [vmem:[%s9 + $0x50] sm:$0xf]
      %v3144 = vld [vmem:[%s9 + $0x54] sm:$0xf]
      %v3145 = vld [vmem:[%s9 + $0x58] sm:$0xf]
      %v3146 = vld [vmem:[%s9 + $0x5c] sm:$0xf]
      %v3147 = vld [vmem:[%s9 + $0x60] sm:$0xf]
      %v3148 = vld [vmem:[%s9 + $0x64] sm:$0xf]
      %v3149 = vld [vmem:[%s9 + $0x68] sm:$0xf]
      %v3150 = vld [vmem:[%s9 + $0x6c] sm:$0xf]
      %v3151 = vld [vmem:[%s9 + $0x70] sm:$0xf]
      %v3152 = vld [vmem:[%s9 + $0x74] sm:$0xf]
      %v3153 = vld [vmem:[%s9 + $0x78] sm:$0xf]
      %v3154 = vld [vmem:[%s9 + $0x7c] sm:$0xf]
      %v3155 = vld [vmem:[%s9 + $0x80] sm:$0xf]
      %v3156 = vld [vmem:[%s9 + $0x84] sm:$0xf]
      %v3157 = vld [vmem:[%s9 + $0x88] sm:$0xf]
      %v3158 = vld [vmem:[%s9 + $0x8c] sm:$0xf]
      %v3159 = vld [vmem:[%s9 + $0x90] sm:$0xf]
      %v3160 = vld [vmem:[%s9 + $0x94] sm:$0xf]
      %v3161 = vld [vmem:[%s9 + $0x98] sm:$0xf]
      %v3162 = vld [vmem:[%s9 + $0x9c] sm:$0xf]
      %v3163 = vld [vmem:[%s9 + $0xa0] sm:$0xf]
      %v3164 = vld [vmem:[%s9 + $0xa4] sm:$0xf]
      %v3165 = vld [vmem:[%s9 + $0xa8] sm:$0xf]
      %v3166 = vld [vmem:[%s9 + $0xac] sm:$0xf]
      %v3167 = vld [vmem:[%s9 + $0xb0] sm:$0xf]
      %v3168 = vld [vmem:[%s9 + $0xb4] sm:$0xf]
      %v3169 = vld [vmem:[%s9 + $0xb8] sm:$0xf]
      %v3170 = vld [vmem:[%s9 + $0xbc] sm:$0xf]
      %v3171 = vld [vmem:[%s9 + $0xc0] sm:$0xf]
      %v3172 = vld [vmem:[%s9 + $0xc4] sm:$0xf]
      %v3173 = vld [vmem:[%s9 + $0xc8] sm:$0xf]
      %v3174 = vld [vmem:[%s9 + $0xcc] sm:$0xf]
      %v3175 = vld [vmem:[%s9 + $0xd0] sm:$0xf]
      %v3176 = vld [vmem:[%s9 + $0xd4] sm:$0xf]
      %v3177 = vld [vmem:[%s9 + $0xd8] sm:$0xf]
      %v3178 = vld [vmem:[%s9 + $0xdc] sm:$0xf]
      %v3179 = vld [vmem:[%s9 + $0xe0] sm:$0xf]
      %v3180 = vld [vmem:[%s9 + $0xe4] sm:$0xf]
      %v3181 = vld [vmem:[%s9 + $0xe8] sm:$0xf]
      %v3182 = vld [vmem:[%s9 + $0xec] sm:$0xf]
      %v3183 = vld [vmem:[%s9 + $0xf0] sm:$0xf]
      %v3184 = vld [vmem:[%s9 + $0xf4] sm:$0xf]
      %v3185 = vld [vmem:[%s9 + $0xf8] sm:$0xf]
      %v3186 = vld [vmem:[%s9 + $0xfc] sm:$0xf]
      %s3187 = scalar_lea.vmem %s9, 256
      %v3188 = vld [vmem:[%s3187] sm:$0xf]
      %v3189 = vld [vmem:[%s3187 + $0x4] sm:$0xf]
      %v3190 = vld [vmem:[%s3187 + $0x8] sm:$0xf]
      %v3191 = vld [vmem:[%s3187 + $0xc] sm:$0xf]
      %v3192 = vld [vmem:[%s3187 + $0x10] sm:$0xf]
      %v3193 = vld [vmem:[%s3187 + $0x14] sm:$0xf]
      %v3194 = vld [vmem:[%s3187 + $0x18] sm:$0xf]
      %v3195 = vld [vmem:[%s3187 + $0x1c] sm:$0xf]
      %v3196 = vld [vmem:[%s3187 + $0x20] sm:$0xf]
      %v3197 = vld [vmem:[%s3187 + $0x24] sm:$0xf]
      %v3198 = vld [vmem:[%s3187 + $0x28] sm:$0xf]
      %v3199 = vld [vmem:[%s3187 + $0x2c] sm:$0xf]
      %v3200 = vld [vmem:[%s3187 + $0x30] sm:$0xf]
      %v3201 = vld [vmem:[%s3187 + $0x34] sm:$0xf]
      %v3202 = vld [vmem:[%s3187 + $0x38] sm:$0xf]
      %v3203 = vld [vmem:[%s3187 + $0x3c] sm:$0xf]
      %v3204 = vld [vmem:[%s3187 + $0x40] sm:$0xf]
      %v3205 = vld [vmem:[%s3187 + $0x44] sm:$0xf]
      %v3206 = vld [vmem:[%s3187 + $0x48] sm:$0xf]
      %v3207 = vld [vmem:[%s3187 + $0x4c] sm:$0xf]
      %v3208 = vld [vmem:[%s3187 + $0x50] sm:$0xf]
      %v3209 = vld [vmem:[%s3187 + $0x54] sm:$0xf]
      %v3210 = vld [vmem:[%s3187 + $0x58] sm:$0xf]
      %v3211 = vld [vmem:[%s3187 + $0x5c] sm:$0xf]
      %v3212 = vld [vmem:[%s3187 + $0x60] sm:$0xf]
      %v3213 = vld [vmem:[%s3187 + $0x64] sm:$0xf]
      %v3214 = vld [vmem:[%s3187 + $0x68] sm:$0xf]
      %v3215 = vld [vmem:[%s3187 + $0x6c] sm:$0xf]
      %v3216 = vld [vmem:[%s3187 + $0x70] sm:$0xf]
      %v3217 = vld [vmem:[%s3187 + $0x74] sm:$0xf]
      %v3218 = vld [vmem:[%s3187 + $0x78] sm:$0xf]
      %v3219 = vld [vmem:[%s3187 + $0x7c] sm:$0xf]
      %v3220 = vld [vmem:[%s3187 + $0x80] sm:$0xf]
      %v3221 = vld [vmem:[%s3187 + $0x84] sm:$0xf]
      %v3222 = vld [vmem:[%s3187 + $0x88] sm:$0xf]
      %v3223 = vld [vmem:[%s3187 + $0x8c] sm:$0xf]
      %v3224 = vld [vmem:[%s3187 + $0x90] sm:$0xf]
      %v3225 = vld [vmem:[%s3187 + $0x94] sm:$0xf]
      %v3226 = vld [vmem:[%s3187 + $0x98] sm:$0xf]
      %v3227 = vld [vmem:[%s3187 + $0x9c] sm:$0xf]
      %v3228 = vld [vmem:[%s3187 + $0xa0] sm:$0xf]
      %v3229 = vld [vmem:[%s3187 + $0xa4] sm:$0xf]
      %v3230 = vld [vmem:[%s3187 + $0xa8] sm:$0xf]
      %v3231 = vld [vmem:[%s3187 + $0xac] sm:$0xf]
      %v3232 = vld [vmem:[%s3187 + $0xb0] sm:$0xf]
      %v3233 = vld [vmem:[%s3187 + $0xb4] sm:$0xf]
      %v3234 = vld [vmem:[%s3187 + $0xb8] sm:$0xf]
      %v3235 = vld [vmem:[%s3187 + $0xbc] sm:$0xf]
      %v3236 = vld [vmem:[%s3187 + $0xc0] sm:$0xf]
      %v3237 = vld [vmem:[%s3187 + $0xc4] sm:$0xf]
      %v3238 = vld [vmem:[%s3187 + $0xc8] sm:$0xf]
      %v3239 = vld [vmem:[%s3187 + $0xcc] sm:$0xf]
      %v3240 = vld [vmem:[%s3187 + $0xd0] sm:$0xf]
      %v3241 = vld [vmem:[%s3187 + $0xd4] sm:$0xf]
      %v3242 = vld [vmem:[%s3187 + $0xd8] sm:$0xf]
      %v3243 = vld [vmem:[%s3187 + $0xdc] sm:$0xf]
      %v3244 = vld [vmem:[%s3187 + $0xe0] sm:$0xf]
      %v3245 = vld [vmem:[%s3187 + $0xe4] sm:$0xf]
      %v3246 = vld [vmem:[%s3187 + $0xe8] sm:$0xf]
      %v3247 = vld [vmem:[%s3187 + $0xec] sm:$0xf]
      %v3248 = vld [vmem:[%s3187 + $0xf0] sm:$0xf]
      %v3249 = vld [vmem:[%s3187 + $0xf4] sm:$0xf]
      %v3250 = vld [vmem:[%s3187 + $0xf8] sm:$0xf]
      %v3251 = vld [vmem:[%s3187 + $0xfc] sm:$0xf]
      %v3254 = vunpack.c.l.b16 %v3121
      %v3255 = vunpack.c.h.b16 %v3121
      %v3256 = vunpack.c.l.b16 %v3122
      %v3257 = vunpack.c.h.b16 %v3122
      %v3258 = vpack.c.b16 %v3254, %v3254
      %v3259 = vpack.c.b16 %v3255, %v3255
      %v3260 = vpack.c.b16 %v3256, %v3256
      %v3261 = vpack.c.b16 %v3257, %v3257
      %v3263 = vshrl.u32 %v3258, 16
      %v3265 = vshll.u32 %v3258, 16
      %v3267 = vrot.slane %v3265, 1
      %v3268 = vor.u32 %v3263, %v3267
      %v3270 = vshrl.u32 %v3259, 16
      %v3272 = vshll.u32 %v3259, 16
      %v3274 = vrot.slane %v3272, 1
      %v3275 = vor.u32 %v3270, %v3274
      %v3277 = vshrl.u32 %v3260, 16
      %v3279 = vshll.u32 %v3260, 16
      %v3281 = vrot.slane %v3279, 1
      %v3282 = vor.u32 %v3277, %v3281
      %v3284 = vshrl.u32 %v3261, 16
      %v3286 = vshll.u32 %v3261, 16
      %v3288 = vrot.slane %v3286, 1
      %v3289 = vor.u32 %v3284, %v3288
      %v3358 = vunpack.c.l.b16 %v3188
      %v3359 = vunpack.c.l.b16 %v3189
      %v3360 = vunpack.c.l.b16 %v3190
      %v3361 = vunpack.c.l.b16 %v3191
      %v3362 = vunpack.c.l.b16 %v3192
      %v3363 = vunpack.c.l.b16 %v3193
      %v3364 = vunpack.c.l.b16 %v3194
      %v3365 = vunpack.c.l.b16 %v3195
      %v3366 = vunpack.c.l.b16 %v3196
      %v3367 = vunpack.c.l.b16 %v3197
      %v3368 = vunpack.c.l.b16 %v3198
      %v3369 = vunpack.c.l.b16 %v3199
      %v3370 = vunpack.c.l.b16 %v3200
      %v3371 = vunpack.c.l.b16 %v3201
      %v3372 = vunpack.c.l.b16 %v3202
      %v3373 = vunpack.c.l.b16 %v3203
      %v3374 = vunpack.c.l.b16 %v3204
      %v3375 = vunpack.c.l.b16 %v3205
      %v3376 = vunpack.c.l.b16 %v3206
      %v3377 = vunpack.c.l.b16 %v3207
      %v3378 = vunpack.c.l.b16 %v3208
      %v3379 = vunpack.c.l.b16 %v3209
      %v3380 = vunpack.c.l.b16 %v3210
      %v3381 = vunpack.c.l.b16 %v3211
      %v3382 = vunpack.c.l.b16 %v3212
      %v3383 = vunpack.c.l.b16 %v3213
      %v3384 = vunpack.c.l.b16 %v3214
      %v3385 = vunpack.c.l.b16 %v3215
      %v3386 = vunpack.c.l.b16 %v3216
      %v3387 = vunpack.c.l.b16 %v3217
      %v3388 = vunpack.c.l.b16 %v3218
      %v3389 = vunpack.c.l.b16 %v3219
      %v3390 = vunpack.c.l.b16 %v3220
      %v3391 = vunpack.c.l.b16 %v3221
      %v3392 = vunpack.c.l.b16 %v3222
      %v3393 = vunpack.c.l.b16 %v3223
      %v3394 = vunpack.c.l.b16 %v3224
      %v3395 = vunpack.c.l.b16 %v3225
      %v3396 = vunpack.c.l.b16 %v3226
      %v3397 = vunpack.c.l.b16 %v3227
      %v3398 = vunpack.c.l.b16 %v3228
      %v3399 = vunpack.c.l.b16 %v3229
      %v3400 = vunpack.c.l.b16 %v3230
      %v3401 = vunpack.c.l.b16 %v3231
      %v3402 = vunpack.c.l.b16 %v3232
      %v3403 = vunpack.c.l.b16 %v3233
      %v3404 = vunpack.c.l.b16 %v3234
      %v3405 = vunpack.c.l.b16 %v3235
      %v3406 = vunpack.c.l.b16 %v3236
      %v3407 = vunpack.c.l.b16 %v3237
      %v3408 = vunpack.c.l.b16 %v3238
      %v3409 = vunpack.c.l.b16 %v3239
      %v3410 = vunpack.c.l.b16 %v3240
      %v3411 = vunpack.c.l.b16 %v3241
      %v3412 = vunpack.c.l.b16 %v3242
      %v3413 = vunpack.c.l.b16 %v3243
      %v3414 = vunpack.c.l.b16 %v3244
      %v3415 = vunpack.c.l.b16 %v3245
      %v3416 = vunpack.c.l.b16 %v3246
      %v3417 = vunpack.c.l.b16 %v3247
      %v3418 = vunpack.c.l.b16 %v3248
      %v3419 = vunpack.c.l.b16 %v3249
      %v3420 = vunpack.c.l.b16 %v3250
      %v3421 = vunpack.c.l.b16 %v3251
      %v3422 = vpack.c.b16 %v3359, %v3358
      %v3423 = vpack.c.b16 %v3361, %v3360
      %v3424 = vpack.c.b16 %v3363, %v3362
      %v3425 = vpack.c.b16 %v3365, %v3364
      %v3426 = vpack.c.b16 %v3367, %v3366
      %v3427 = vpack.c.b16 %v3369, %v3368
      %v3428 = vpack.c.b16 %v3371, %v3370
      %v3429 = vpack.c.b16 %v3373, %v3372
      %v3430 = vpack.c.b16 %v3375, %v3374
      %v3431 = vpack.c.b16 %v3377, %v3376
      %v3432 = vpack.c.b16 %v3379, %v3378
      %v3433 = vpack.c.b16 %v3381, %v3380
      %v3434 = vpack.c.b16 %v3383, %v3382
      %v3435 = vpack.c.b16 %v3385, %v3384
      %v3436 = vpack.c.b16 %v3387, %v3386
      %v3437 = vpack.c.b16 %v3389, %v3388
      %v3438 = vpack.c.b16 %v3391, %v3390
      %v3439 = vpack.c.b16 %v3393, %v3392
      %v3440 = vpack.c.b16 %v3395, %v3394
      %v3441 = vpack.c.b16 %v3397, %v3396
      %v3442 = vpack.c.b16 %v3399, %v3398
      %v3443 = vpack.c.b16 %v3401, %v3400
      %v3444 = vpack.c.b16 %v3403, %v3402
      %v3445 = vpack.c.b16 %v3405, %v3404
      %v3446 = vpack.c.b16 %v3407, %v3406
      %v3447 = vpack.c.b16 %v3409, %v3408
      %v3448 = vpack.c.b16 %v3411, %v3410
      %v3449 = vpack.c.b16 %v3413, %v3412
      %v3450 = vpack.c.b16 %v3415, %v3414
      %v3451 = vpack.c.b16 %v3417, %v3416
      %v3452 = vpack.c.b16 %v3419, %v3418
      %v3453 = vpack.c.b16 %v3421, %v3420
      %3486 = vmatprep.subr.bf16.mxu0 0
      %3487 = vmatpush1.bf16.msra.mxu0 %v3429
      %3488 = vmatprep.subr.bf16.mxu0 0
      %3489 = vmatpush1.bf16.msra.mxu0 %v3428
      %3490 = vmatprep.subr.bf16.mxu0 0
      %3491 = vmatpush1.bf16.msra.mxu0 %v3427
      %3492 = vmatprep.subr.bf16.mxu0 0
      %3493 = vmatpush1.bf16.msra.mxu0 %v3426
      %3494 = vmatprep.subr.bf16.mxu0 0
      %3495 = vmatpush1.bf16.msra.mxu0 %v3425
      %3496 = vmatprep.subr.bf16.mxu0 0
      %3497 = vmatpush1.bf16.msra.mxu0 %v3424
      %3498 = vmatprep.subr.bf16.mxu0 0
      %3499 = vmatpush1.bf16.msra.mxu0 %v3423
      %3500 = vmatprep.subr.bf16.mxu0 0
      %3501 = vmatpush1.bf16.msra.mxu0 %v3422
      %3502 = vmatprep.subr.bf16.mxu0 0
      %3503 = vmatpush2.bf16.msra.mxu0 %v3437
      %3504 = vmatprep.subr.bf16.mxu0 0
      %3505 = vmatpush2.bf16.msra.mxu0 %v3436
      %3506 = vmatprep.subr.bf16.mxu0 0
      %3507 = vmatpush2.bf16.msra.mxu0 %v3435
      %3508 = vmatprep.subr.bf16.mxu0 0
      %3509 = vmatpush2.bf16.msra.mxu0 %v3434
      %3510 = vmatprep.subr.bf16.mxu0 0
      %3511 = vmatpush2.bf16.msra.mxu0 %v3433
      %3512 = vmatprep.subr.bf16.mxu0 0
      %3513 = vmatpush2.bf16.msra.mxu0 %v3432
      %3514 = vmatprep.subr.bf16.mxu0 0
      %3515 = vmatpush2.bf16.msra.mxu0 %v3431
      %3516 = vmatprep.subr.bf16.mxu0 0
      %3517 = vmatpush2.bf16.msra.mxu0 %v3430
      %3518 = vmatprep.mubr.bf16.mxu0 %v3275
      %3519 = vmatmul.mubr.bf16.gmra.mxu0 %v3268
      %v3520 = vpop.f32.mrf.mxu0
      %v3521 = vadd.f32 0.0, %v3520
      %v3522 = vpop.f32.mrf.mxu0
      %v3523 = vpop.f32.mrf.mxu0
      %v3524 = vpop.f32.mrf.mxu0
      %3525 = vdwg.mxu0
      %3526 = vmatprep.subr.bf16.mxu0 0
      %3527 = vmatpush1.bf16.msra.mxu0 %v3445
      %3528 = vmatprep.subr.bf16.mxu0 0
      %3529 = vmatpush1.bf16.msra.mxu0 %v3444
      %3530 = vmatprep.subr.bf16.mxu0 0
      %3531 = vmatpush1.bf16.msra.mxu0 %v3443
      %3532 = vmatprep.subr.bf16.mxu0 0
      %3533 = vmatpush1.bf16.msra.mxu0 %v3442
      %3534 = vmatprep.subr.bf16.mxu0 0
      %3535 = vmatpush1.bf16.msra.mxu0 %v3441
      %3536 = vmatprep.subr.bf16.mxu0 0
      %3537 = vmatpush1.bf16.msra.mxu0 %v3440
      %3538 = vmatprep.subr.bf16.mxu0 0
      %3539 = vmatpush1.bf16.msra.mxu0 %v3439
      %3540 = vmatprep.subr.bf16.mxu0 0
      %3541 = vmatpush1.bf16.msra.mxu0 %v3438
      %3542 = vmatprep.subr.bf16.mxu0 0
      %3543 = vmatpush2.bf16.msra.mxu0 %v3453
      %3544 = vmatprep.subr.bf16.mxu0 0
      %3545 = vmatpush2.bf16.msra.mxu0 %v3452
      %3546 = vmatprep.subr.bf16.mxu0 0
      %3547 = vmatpush2.bf16.msra.mxu0 %v3451
      %3548 = vmatprep.subr.bf16.mxu0 0
      %3549 = vmatpush2.bf16.msra.mxu0 %v3450
      %3550 = vmatprep.subr.bf16.mxu0 0
      %3551 = vmatpush2.bf16.msra.mxu0 %v3449
      %3552 = vmatprep.subr.bf16.mxu0 0
      %3553 = vmatpush2.bf16.msra.mxu0 %v3448
      %3554 = vmatprep.subr.bf16.mxu0 0
      %3555 = vmatpush2.bf16.msra.mxu0 %v3447
      %3556 = vmatprep.subr.bf16.mxu0 0
      %3557 = vmatpush2.bf16.msra.mxu0 %v3446
      %3558 = vmatprep.mubr.bf16.mxu0 %v3289
      %3559 = vmatmul.mubr.bf16.gmra.mxu0 %v3282
      %v3560 = vpop.f32.mrf.mxu0
      %v3561 = vadd.f32 %v3521, %v3560
      %v3562 = vpop.f32.mrf.mxu0
      %v3563 = vpop.f32.mrf.mxu0
      %v3564 = vpop.f32.mrf.mxu0
      %3565 = vdwg.mxu0
      %v3634 = vunpack.c.l.b16 %v3123
      %v3635 = vunpack.c.l.b16 %v3124
      %v3636 = vunpack.c.l.b16 %v3125
      %v3637 = vunpack.c.l.b16 %v3126
      %v3638 = vunpack.c.l.b16 %v3127
      %v3639 = vunpack.c.l.b16 %v3128
      %v3640 = vunpack.c.l.b16 %v3129
      %v3641 = vunpack.c.l.b16 %v3130
      %v3642 = vunpack.c.l.b16 %v3131
      %v3643 = vunpack.c.l.b16 %v3132
      %v3644 = vunpack.c.l.b16 %v3133
      %v3645 = vunpack.c.l.b16 %v3134
      %v3646 = vunpack.c.l.b16 %v3135
      %v3647 = vunpack.c.l.b16 %v3136
      %v3648 = vunpack.c.l.b16 %v3137
      %v3649 = vunpack.c.l.b16 %v3138
      %v3650 = vunpack.c.l.b16 %v3139
      %v3651 = vunpack.c.l.b16 %v3140
      %v3652 = vunpack.c.l.b16 %v3141
      %v3653 = vunpack.c.l.b16 %v3142
      %v3654 = vunpack.c.l.b16 %v3143
      %v3655 = vunpack.c.l.b16 %v3144
      %v3656 = vunpack.c.l.b16 %v3145
      %v3657 = vunpack.c.l.b16 %v3146
      %v3658 = vunpack.c.l.b16 %v3147
      %v3659 = vunpack.c.l.b16 %v3148
      %v3660 = vunpack.c.l.b16 %v3149
      %v3661 = vunpack.c.l.b16 %v3150
      %v3662 = vunpack.c.l.b16 %v3151
      %v3663 = vunpack.c.l.b16 %v3152
      %v3664 = vunpack.c.l.b16 %v3153
      %v3665 = vunpack.c.l.b16 %v3154
      %v3666 = vunpack.c.l.b16 %v3155
      %v3667 = vunpack.c.l.b16 %v3156
      %v3668 = vunpack.c.l.b16 %v3157
      %v3669 = vunpack.c.l.b16 %v3158
      %v3670 = vunpack.c.l.b16 %v3159
      %v3671 = vunpack.c.l.b16 %v3160
      %v3672 = vunpack.c.l.b16 %v3161
      %v3673 = vunpack.c.l.b16 %v3162
      %v3674 = vunpack.c.l.b16 %v3163
      %v3675 = vunpack.c.l.b16 %v3164
      %v3676 = vunpack.c.l.b16 %v3165
      %v3677 = vunpack.c.l.b16 %v3166
      %v3678 = vunpack.c.l.b16 %v3167
      %v3679 = vunpack.c.l.b16 %v3168
      %v3680 = vunpack.c.l.b16 %v3169
      %v3681 = vunpack.c.l.b16 %v3170
      %v3682 = vunpack.c.l.b16 %v3171
      %v3683 = vunpack.c.l.b16 %v3172
      %v3684 = vunpack.c.l.b16 %v3173
      %v3685 = vunpack.c.l.b16 %v3174
      %v3686 = vunpack.c.l.b16 %v3175
      %v3687 = vunpack.c.l.b16 %v3176
      %v3688 = vunpack.c.l.b16 %v3177
      %v3689 = vunpack.c.l.b16 %v3178
      %v3690 = vunpack.c.l.b16 %v3179
      %v3691 = vunpack.c.l.b16 %v3180
      %v3692 = vunpack.c.l.b16 %v3181
      %v3693 = vunpack.c.l.b16 %v3182
      %v3694 = vunpack.c.l.b16 %v3183
      %v3695 = vunpack.c.l.b16 %v3184
      %v3696 = vunpack.c.l.b16 %v3185
      %v3697 = vunpack.c.l.b16 %v3186
      %v3698 = vpack.c.b16 %v3635, %v3634
      %v3699 = vpack.c.b16 %v3637, %v3636
      %v3700 = vpack.c.b16 %v3639, %v3638
      %v3701 = vpack.c.b16 %v3641, %v3640
      %v3702 = vpack.c.b16 %v3643, %v3642
      %v3703 = vpack.c.b16 %v3645, %v3644
      %v3704 = vpack.c.b16 %v3647, %v3646
      %v3705 = vpack.c.b16 %v3649, %v3648
      %v3706 = vpack.c.b16 %v3651, %v3650
      %v3707 = vpack.c.b16 %v3653, %v3652
      %v3708 = vpack.c.b16 %v3655, %v3654
      %v3709 = vpack.c.b16 %v3657, %v3656
      %v3710 = vpack.c.b16 %v3659, %v3658
      %v3711 = vpack.c.b16 %v3661, %v3660
      %v3712 = vpack.c.b16 %v3663, %v3662
      %v3713 = vpack.c.b16 %v3665, %v3664
      %v3714 = vpack.c.b16 %v3667, %v3666
      %v3715 = vpack.c.b16 %v3669, %v3668
      %v3716 = vpack.c.b16 %v3671, %v3670
      %v3717 = vpack.c.b16 %v3673, %v3672
      %v3718 = vpack.c.b16 %v3675, %v3674
      %v3719 = vpack.c.b16 %v3677, %v3676
      %v3720 = vpack.c.b16 %v3679, %v3678
      %v3721 = vpack.c.b16 %v3681, %v3680
      %v3722 = vpack.c.b16 %v3683, %v3682
      %v3723 = vpack.c.b16 %v3685, %v3684
      %v3724 = vpack.c.b16 %v3687, %v3686
      %v3725 = vpack.c.b16 %v3689, %v3688
      %v3726 = vpack.c.b16 %v3691, %v3690
      %v3727 = vpack.c.b16 %v3693, %v3692
      %v3728 = vpack.c.b16 %v3695, %v3694
      %v3729 = vpack.c.b16 %v3697, %v3696
      %3762 = vmatprep.subr.bf16.mxu0 0
      %3763 = vmatpush1.bf16.msra.mxu0 %v3705
      %3764 = vmatprep.subr.bf16.mxu0 0
      %3765 = vmatpush1.bf16.msra.mxu0 %v3704
      %3766 = vmatprep.subr.bf16.mxu0 0
      %3767 = vmatpush1.bf16.msra.mxu0 %v3703
      %3768 = vmatprep.subr.bf16.mxu0 0
      %3769 = vmatpush1.bf16.msra.mxu0 %v3702
      %3770 = vmatprep.subr.bf16.mxu0 0
      %3771 = vmatpush1.bf16.msra.mxu0 %v3701
      %3772 = vmatprep.subr.bf16.mxu0 0
      %3773 = vmatpush1.bf16.msra.mxu0 %v3700
      %3774 = vmatprep.subr.bf16.mxu0 0
      %3775 = vmatpush1.bf16.msra.mxu0 %v3699
      %3776 = vmatprep.subr.bf16.mxu0 0
      %3777 = vmatpush1.bf16.msra.mxu0 %v3698
      %3778 = vmatprep.subr.bf16.mxu0 0
      %3779 = vmatpush2.bf16.msra.mxu0 %v3713
      %3780 = vmatprep.subr.bf16.mxu0 0
      %3781 = vmatpush2.bf16.msra.mxu0 %v3712
      %3782 = vmatprep.subr.bf16.mxu0 0
      %3783 = vmatpush2.bf16.msra.mxu0 %v3711
      %3784 = vmatprep.subr.bf16.mxu0 0
      %3785 = vmatpush2.bf16.msra.mxu0 %v3710
      %3786 = vmatprep.subr.bf16.mxu0 0
      %3787 = vmatpush2.bf16.msra.mxu0 %v3709
      %3788 = vmatprep.subr.bf16.mxu0 0
      %3789 = vmatpush2.bf16.msra.mxu0 %v3708
      %3790 = vmatprep.subr.bf16.mxu0 0
      %3791 = vmatpush2.bf16.msra.mxu0 %v3707
      %3792 = vmatprep.subr.bf16.mxu0 0
      %3793 = vmatpush2.bf16.msra.mxu0 %v3706
      %3794 = vmatprep.mubr.bf16.mxu0 %v3259
      %3795 = vmatmul.mubr.bf16.gmra.mxu0 %v3258
      %v3796 = vpop.f32.mrf.mxu0
      %v3797 = vadd.f32 %v3561, %v3796
      %v3798 = vpop.f32.mrf.mxu0
      %v3799 = vpop.f32.mrf.mxu0
      %v3800 = vpop.f32.mrf.mxu0
      %3801 = vdwg.mxu0
      %3802 = vmatprep.subr.bf16.mxu0 0
      %3803 = vmatpush1.bf16.msra.mxu0 %v3721
      %3804 = vmatprep.subr.bf16.mxu0 0
      %3805 = vmatpush1.bf16.msra.mxu0 %v3720
      %3806 = vmatprep.subr.bf16.mxu0 0
      %3807 = vmatpush1.bf16.msra.mxu0 %v3719
      %3808 = vmatprep.subr.bf16.mxu0 0
      %3809 = vmatpush1.bf16.msra.mxu0 %v3718
      %3810 = vmatprep.subr.bf16.mxu0 0
      %3811 = vmatpush1.bf16.msra.mxu0 %v3717
      %3812 = vmatprep.subr.bf16.mxu0 0
      %3813 = vmatpush1.bf16.msra.mxu0 %v3716
      %3814 = vmatprep.subr.bf16.mxu0 0
      %3815 = vmatpush1.bf16.msra.mxu0 %v3715
      %3816 = vmatprep.subr.bf16.mxu0 0
      %3817 = vmatpush1.bf16.msra.mxu0 %v3714
      %3818 = vmatprep.subr.bf16.mxu0 0
      %3819 = vmatpush2.bf16.msra.mxu0 %v3729
      %3820 = vmatprep.subr.bf16.mxu0 0
      %3821 = vmatpush2.bf16.msra.mxu0 %v3728
      %3822 = vmatprep.subr.bf16.mxu0 0
      %3823 = vmatpush2.bf16.msra.mxu0 %v3727
      %3824 = vmatprep.subr.bf16.mxu0 0
      %3825 = vmatpush2.bf16.msra.mxu0 %v3726
      %3826 = vmatprep.subr.bf16.mxu0 0
      %3827 = vmatpush2.bf16.msra.mxu0 %v3725
      %3828 = vmatprep.subr.bf16.mxu0 0
      %3829 = vmatpush2.bf16.msra.mxu0 %v3724
      %3830 = vmatprep.subr.bf16.mxu0 0
      %3831 = vmatpush2.bf16.msra.mxu0 %v3723
      %3832 = vmatprep.subr.bf16.mxu0 0
      %3833 = vmatpush2.bf16.msra.mxu0 %v3722
      %3834 = vmatprep.mubr.bf16.mxu0 %v3261
      %3835 = vmatmul.mubr.bf16.gmra.mxu0 %v3260
      %v3836 = vpop.f32.mrf.mxu0
      %v3837 = vadd.f32 %v3797, %v3836
      %v3838 = vpop.f32.mrf.mxu0
      %v3839 = vpop.f32.mrf.mxu0
      %v3840 = vpop.f32.mrf.mxu0
      %3841 = vdwg.mxu0
      %v3842 = vld [vmem:[#allocation6] sm:$0xee]
      %v3843 = vld [vmem:[#allocation6 + $0x8] sm:$0xee]
      %s3844 = scalar_lea.vmem %s9, 512
      %v3845 = vld [vmem:[%s3844] sm:$0xf]
      %v3846 = vld [vmem:[%s3844 + $0x4] sm:$0xf]
      %v3847 = vld [vmem:[%s3844 + $0x8] sm:$0xf]
      %v3848 = vld [vmem:[%s3844 + $0xc] sm:$0xf]
      %v3849 = vld [vmem:[%s3844 + $0x10] sm:$0xf]
      %v3850 = vld [vmem:[%s3844 + $0x14] sm:$0xf]
      %v3851 = vld [vmem:[%s3844 + $0x18] sm:$0xf]
      %v3852 = vld [vmem:[%s3844 + $0x1c] sm:$0xf]
      %v3853 = vld [vmem:[%s3844 + $0x20] sm:$0xf]
      %v3854 = vld [vmem:[%s3844 + $0x24] sm:$0xf]
      %v3855 = vld [vmem:[%s3844 + $0x28] sm:$0xf]
      %v3856 = vld [vmem:[%s3844 + $0x2c] sm:$0xf]
      %v3857 = vld [vmem:[%s3844 + $0x30] sm:$0xf]
      %v3858 = vld [vmem:[%s3844 + $0x34] sm:$0xf]
      %v3859 = vld [vmem:[%s3844 + $0x38] sm:$0xf]
      %v3860 = vld [vmem:[%s3844 + $0x3c] sm:$0xf]
      %v3861 = vld [vmem:[%s3844 + $0x40] sm:$0xf]
      %v3862 = vld [vmem:[%s3844 + $0x44] sm:$0xf]
      %v3863 = vld [vmem:[%s3844 + $0x48] sm:$0xf]
      %v3864 = vld [vmem:[%s3844 + $0x4c] sm:$0xf]
      %v3865 = vld [vmem:[%s3844 + $0x50] sm:$0xf]
      %v3866 = vld [vmem:[%s3844 + $0x54] sm:$0xf]
      %v3867 = vld [vmem:[%s3844 + $0x58] sm:$0xf]
      %v3868 = vld [vmem:[%s3844 + $0x5c] sm:$0xf]
      %v3869 = vld [vmem:[%s3844 + $0x60] sm:$0xf]
      %v3870 = vld [vmem:[%s3844 + $0x64] sm:$0xf]
      %v3871 = vld [vmem:[%s3844 + $0x68] sm:$0xf]
      %v3872 = vld [vmem:[%s3844 + $0x6c] sm:$0xf]
      %v3873 = vld [vmem:[%s3844 + $0x70] sm:$0xf]
      %v3874 = vld [vmem:[%s3844 + $0x74] sm:$0xf]
      %v3875 = vld [vmem:[%s3844 + $0x78] sm:$0xf]
      %v3876 = vld [vmem:[%s3844 + $0x7c] sm:$0xf]
      %v3877 = vld [vmem:[%s3844 + $0x80] sm:$0xf]
      %v3878 = vld [vmem:[%s3844 + $0x84] sm:$0xf]
      %v3879 = vld [vmem:[%s3844 + $0x88] sm:$0xf]
      %v3880 = vld [vmem:[%s3844 + $0x8c] sm:$0xf]
      %v3881 = vld [vmem:[%s3844 + $0x90] sm:$0xf]
      %v3882 = vld [vmem:[%s3844 + $0x94] sm:$0xf]
      %v3883 = vld [vmem:[%s3844 + $0x98] sm:$0xf]
      %v3884 = vld [vmem:[%s3844 + $0x9c] sm:$0xf]
      %v3885 = vld [vmem:[%s3844 + $0xa0] sm:$0xf]
      %v3886 = vld [vmem:[%s3844 + $0xa4] sm:$0xf]
      %v3887 = vld [vmem:[%s3844 + $0xa8] sm:$0xf]
      %v3888 = vld [vmem:[%s3844 + $0xac] sm:$0xf]
      %v3889 = vld [vmem:[%s3844 + $0xb0] sm:$0xf]
      %v3890 = vld [vmem:[%s3844 + $0xb4] sm:$0xf]
      %v3891 = vld [vmem:[%s3844 + $0xb8] sm:$0xf]
      %v3892 = vld [vmem:[%s3844 + $0xbc] sm:$0xf]
      %v3893 = vld [vmem:[%s3844 + $0xc0] sm:$0xf]
      %v3894 = vld [vmem:[%s3844 + $0xc4] sm:$0xf]
      %v3895 = vld [vmem:[%s3844 + $0xc8] sm:$0xf]
      %v3896 = vld [vmem:[%s3844 + $0xcc] sm:$0xf]
      %v3897 = vld [vmem:[%s3844 + $0xd0] sm:$0xf]
      %v3898 = vld [vmem:[%s3844 + $0xd4] sm:$0xf]
      %v3899 = vld [vmem:[%s3844 + $0xd8] sm:$0xf]
      %v3900 = vld [vmem:[%s3844 + $0xdc] sm:$0xf]
      %v3901 = vld [vmem:[%s3844 + $0xe0] sm:$0xf]
      %v3902 = vld [vmem:[%s3844 + $0xe4] sm:$0xf]
      %v3903 = vld [vmem:[%s3844 + $0xe8] sm:$0xf]
      %v3904 = vld [vmem:[%s3844 + $0xec] sm:$0xf]
      %v3905 = vld [vmem:[%s3844 + $0xf0] sm:$0xf]
      %v3906 = vld [vmem:[%s3844 + $0xf4] sm:$0xf]
      %v3907 = vld [vmem:[%s3844 + $0xf8] sm:$0xf]
      %v3908 = vld [vmem:[%s3844 + $0xfc] sm:$0xf]
      %v3911 = vunpack.c.l.b16 %v3842
      %v3912 = vunpack.c.h.b16 %v3842
      %v3913 = vunpack.c.l.b16 %v3843
      %v3914 = vunpack.c.h.b16 %v3843
      %v3915 = vpack.c.b16 %v3911, %v3911
      %v3916 = vpack.c.b16 %v3912, %v3912
      %v3917 = vpack.c.b16 %v3913, %v3913
      %v3918 = vpack.c.b16 %v3914, %v3914
      %v3919 = vrot.slane %v3915, 1
      %v3920 = vrot.slane %v3916, 1
      %v3921 = vrot.slane %v3917, 1
      %v3922 = vrot.slane %v3918, 1
      %v3991 = vunpack.c.l.b16 %v3845
      %v3992 = vunpack.c.l.b16 %v3846
      %v3993 = vunpack.c.l.b16 %v3847
      %v3994 = vunpack.c.l.b16 %v3848
      %v3995 = vunpack.c.l.b16 %v3849
      %v3996 = vunpack.c.l.b16 %v3850
      %v3997 = vunpack.c.l.b16 %v3851
      %v3998 = vunpack.c.l.b16 %v3852
      %v3999 = vunpack.c.l.b16 %v3853
      %v4000 = vunpack.c.l.b16 %v3854
      %v4001 = vunpack.c.l.b16 %v3855
      %v4002 = vunpack.c.l.b16 %v3856
      %v4003 = vunpack.c.l.b16 %v3857
      %v4004 = vunpack.c.l.b16 %v3858
      %v4005 = vunpack.c.l.b16 %v3859
      %v4006 = vunpack.c.l.b16 %v3860
      %v4007 = vunpack.c.l.b16 %v3861
      %v4008 = vunpack.c.l.b16 %v3862
      %v4009 = vunpack.c.l.b16 %v3863
      %v4010 = vunpack.c.l.b16 %v3864
      %v4011 = vunpack.c.l.b16 %v3865
      %v4012 = vunpack.c.l.b16 %v3866
      %v4013 = vunpack.c.l.b16 %v3867
      %v4014 = vunpack.c.l.b16 %v3868
      %v4015 = vunpack.c.l.b16 %v3869
      %v4016 = vunpack.c.l.b16 %v3870
      %v4017 = vunpack.c.l.b16 %v3871
      %v4018 = vunpack.c.l.b16 %v3872
      %v4019 = vunpack.c.l.b16 %v3873
      %v4020 = vunpack.c.l.b16 %v3874
      %v4021 = vunpack.c.l.b16 %v3875
      %v4022 = vunpack.c.l.b16 %v3876
      %v4023 = vunpack.c.l.b16 %v3877
      %v4024 = vunpack.c.l.b16 %v3878
      %v4025 = vunpack.c.l.b16 %v3879
      %v4026 = vunpack.c.l.b16 %v3880
      %v4027 = vunpack.c.l.b16 %v3881
      %v4028 = vunpack.c.l.b16 %v3882
      %v4029 = vunpack.c.l.b16 %v3883
      %v4030 = vunpack.c.l.b16 %v3884
      %v4031 = vunpack.c.l.b16 %v3885
      %v4032 = vunpack.c.l.b16 %v3886
      %v4033 = vunpack.c.l.b16 %v3887
      %v4034 = vunpack.c.l.b16 %v3888
      %v4035 = vunpack.c.l.b16 %v3889
      %v4036 = vunpack.c.l.b16 %v3890
      %v4037 = vunpack.c.l.b16 %v3891
      %v4038 = vunpack.c.l.b16 %v3892
      %v4039 = vunpack.c.l.b16 %v3893
      %v4040 = vunpack.c.l.b16 %v3894
      %v4041 = vunpack.c.l.b16 %v3895
      %v4042 = vunpack.c.l.b16 %v3896
      %v4043 = vunpack.c.l.b16 %v3897
      %v4044 = vunpack.c.l.b16 %v3898
      %v4045 = vunpack.c.l.b16 %v3899
      %v4046 = vunpack.c.l.b16 %v3900
      %v4047 = vunpack.c.l.b16 %v3901
      %v4048 = vunpack.c.l.b16 %v3902
      %v4049 = vunpack.c.l.b16 %v3903
      %v4050 = vunpack.c.l.b16 %v3904
      %v4051 = vunpack.c.l.b16 %v3905
      %v4052 = vunpack.c.l.b16 %v3906
      %v4053 = vunpack.c.l.b16 %v3907
      %v4054 = vunpack.c.l.b16 %v3908
      %v4055 = vpack.c.b16 %v3992, %v3991
      %v4056 = vpack.c.b16 %v3994, %v3993
      %v4057 = vpack.c.b16 %v3996, %v3995
      %v4058 = vpack.c.b16 %v3998, %v3997
      %v4059 = vpack.c.b16 %v4000, %v3999
      %v4060 = vpack.c.b16 %v4002, %v4001
      %v4061 = vpack.c.b16 %v4004, %v4003
      %v4062 = vpack.c.b16 %v4006, %v4005
      %v4063 = vpack.c.b16 %v4008, %v4007
      %v4064 = vpack.c.b16 %v4010, %v4009
      %v4065 = vpack.c.b16 %v4012, %v4011
      %v4066 = vpack.c.b16 %v4014, %v4013
      %v4067 = vpack.c.b16 %v4016, %v4015
      %v4068 = vpack.c.b16 %v4018, %v4017
      %v4069 = vpack.c.b16 %v4020, %v4019
      %v4070 = vpack.c.b16 %v4022, %v4021
      %v4071 = vpack.c.b16 %v4024, %v4023
      %v4072 = vpack.c.b16 %v4026, %v4025
      %v4073 = vpack.c.b16 %v4028, %v4027
      %v4074 = vpack.c.b16 %v4030, %v4029
      %v4075 = vpack.c.b16 %v4032, %v4031
      %v4076 = vpack.c.b16 %v4034, %v4033
      %v4077 = vpack.c.b16 %v4036, %v4035
      %v4078 = vpack.c.b16 %v4038, %v4037
      %v4079 = vpack.c.b16 %v4040, %v4039
      %v4080 = vpack.c.b16 %v4042, %v4041
      %v4081 = vpack.c.b16 %v4044, %v4043
      %v4082 = vpack.c.b16 %v4046, %v4045
      %v4083 = vpack.c.b16 %v4048, %v4047
      %v4084 = vpack.c.b16 %v4050, %v4049
      %v4085 = vpack.c.b16 %v4052, %v4051
      %v4086 = vpack.c.b16 %v4054, %v4053
      %4119 = vmatprep.subr.bf16.mxu0 0
      %4120 = vmatpush1.bf16.msra.mxu0 %v4062
      %4121 = vmatprep.subr.bf16.mxu0 0
      %4122 = vmatpush1.bf16.msra.mxu0 %v4061
      %4123 = vmatprep.subr.bf16.mxu0 0
      %4124 = vmatpush1.bf16.msra.mxu0 %v4060
      %4125 = vmatprep.subr.bf16.mxu0 0
      %4126 = vmatpush1.bf16.msra.mxu0 %v4059
      %4127 = vmatprep.subr.bf16.mxu0 0
      %4128 = vmatpush1.bf16.msra.mxu0 %v4058
      %4129 = vmatprep.subr.bf16.mxu0 0
      %4130 = vmatpush1.bf16.msra.mxu0 %v4057
      %4131 = vmatprep.subr.bf16.mxu0 0
      %4132 = vmatpush1.bf16.msra.mxu0 %v4056
      %4133 = vmatprep.subr.bf16.mxu0 0
      %4134 = vmatpush1.bf16.msra.mxu0 %v4055
      %4135 = vmatprep.subr.bf16.mxu0 0
      %4136 = vmatpush2.bf16.msra.mxu0 %v4070
      %4137 = vmatprep.subr.bf16.mxu0 0
      %4138 = vmatpush2.bf16.msra.mxu0 %v4069
      %4139 = vmatprep.subr.bf16.mxu0 0
      %4140 = vmatpush2.bf16.msra.mxu0 %v4068
      %4141 = vmatprep.subr.bf16.mxu0 0
      %4142 = vmatpush2.bf16.msra.mxu0 %v4067
      %4143 = vmatprep.subr.bf16.mxu0 0
      %4144 = vmatpush2.bf16.msra.mxu0 %v4066
      %4145 = vmatprep.subr.bf16.mxu0 0
      %4146 = vmatpush2.bf16.msra.mxu0 %v4065
      %4147 = vmatprep.subr.bf16.mxu0 0
      %4148 = vmatpush2.bf16.msra.mxu0 %v4064
      %4149 = vmatprep.subr.bf16.mxu0 0
      %4150 = vmatpush2.bf16.msra.mxu0 %v4063
      %4151 = vmatprep.mubr.bf16.mxu0 %v3920
      %4152 = vmatmul.mubr.bf16.gmra.mxu0 %v3919
      %v4153 = vpop.f32.mrf.mxu0
      %v4154 = vadd.f32 0.0, %v4153
      %v4155 = vpop.f32.mrf.mxu0
      %v4156 = vpop.f32.mrf.mxu0
      %v4157 = vpop.f32.mrf.mxu0
      %4158 = vdwg.mxu0
      %4159 = vmatprep.subr.bf16.mxu0 0
      %4160 = vmatpush1.bf16.msra.mxu0 %v4078
      %4161 = vmatprep.subr.bf16.mxu0 0
      %4162 = vmatpush1.bf16.msra.mxu0 %v4077
      %4163 = vmatprep.subr.bf16.mxu0 0
      %4164 = vmatpush1.bf16.msra.mxu0 %v4076
      %4165 = vmatprep.subr.bf16.mxu0 0
      %4166 = vmatpush1.bf16.msra.mxu0 %v4075
      %4167 = vmatprep.subr.bf16.mxu0 0
      %4168 = vmatpush1.bf16.msra.mxu0 %v4074
      %4169 = vmatprep.subr.bf16.mxu0 0
      %4170 = vmatpush1.bf16.msra.mxu0 %v4073
      %4171 = vmatprep.subr.bf16.mxu0 0
      %4172 = vmatpush1.bf16.msra.mxu0 %v4072
      %4173 = vmatprep.subr.bf16.mxu0 0
      %4174 = vmatpush1.bf16.msra.mxu0 %v4071
      %4175 = vmatprep.subr.bf16.mxu0 0
      %4176 = vmatpush2.bf16.msra.mxu0 %v4086
      %4177 = vmatprep.subr.bf16.mxu0 0
      %4178 = vmatpush2.bf16.msra.mxu0 %v4085
      %4179 = vmatprep.subr.bf16.mxu0 0
      %4180 = vmatpush2.bf16.msra.mxu0 %v4084
      %4181 = vmatprep.subr.bf16.mxu0 0
      %4182 = vmatpush2.bf16.msra.mxu0 %v4083
      %4183 = vmatprep.subr.bf16.mxu0 0
      %4184 = vmatpush2.bf16.msra.mxu0 %v4082
      %4185 = vmatprep.subr.bf16.mxu0 0
      %4186 = vmatpush2.bf16.msra.mxu0 %v4081
      %4187 = vmatprep.subr.bf16.mxu0 0
      %4188 = vmatpush2.bf16.msra.mxu0 %v4080
      %4189 = vmatprep.subr.bf16.mxu0 0
      %4190 = vmatpush2.bf16.msra.mxu0 %v4079
      %4191 = vmatprep.mubr.bf16.mxu0 %v3922
      %4192 = vmatmul.mubr.bf16.gmra.mxu0 %v3921
      %v4193 = vpop.f32.mrf.mxu0
      %v4194 = vadd.f32 %v4154, %v4193
      %v4195 = vpop.f32.mrf.mxu0
      %v4196 = vpop.f32.mrf.mxu0
      %v4197 = vpop.f32.mrf.mxu0
      %4198 = vdwg.mxu0
      %v4199 = vadd.f32 %v3837, %v4194
      %s4200 = scalar_lea.vmem %s9, 768
      %v4201 = vld [vmem:[%s4200] sm:$0xf]
      %v4202 = vld [vmem:[%s4200 + $0x4] sm:$0xf]
      %v4203 = vld [vmem:[%s4200 + $0x8] sm:$0xf]
      %v4204 = vld [vmem:[%s4200 + $0xc] sm:$0xf]
      %v4205 = vld [vmem:[%s4200 + $0x10] sm:$0xf]
      %v4206 = vld [vmem:[%s4200 + $0x14] sm:$0xf]
      %v4207 = vld [vmem:[%s4200 + $0x18] sm:$0xf]
      %v4208 = vld [vmem:[%s4200 + $0x1c] sm:$0xf]
      %v4209 = vld [vmem:[%s4200 + $0x20] sm:$0xf]
      %v4210 = vld [vmem:[%s4200 + $0x24] sm:$0xf]
      %v4211 = vld [vmem:[%s4200 + $0x28] sm:$0xf]
      %v4212 = vld [vmem:[%s4200 + $0x2c] sm:$0xf]
      %v4213 = vld [vmem:[%s4200 + $0x30] sm:$0xf]
      %v4214 = vld [vmem:[%s4200 + $0x34] sm:$0xf]
      %v4215 = vld [vmem:[%s4200 + $0x38] sm:$0xf]
      %v4216 = vld [vmem:[%s4200 + $0x3c] sm:$0xf]
      %v4217 = vld [vmem:[%s4200 + $0x40] sm:$0xf]
      %v4218 = vld [vmem:[%s4200 + $0x44] sm:$0xf]
      %v4219 = vld [vmem:[%s4200 + $0x48] sm:$0xf]
      %v4220 = vld [vmem:[%s4200 + $0x4c] sm:$0xf]
      %v4221 = vld [vmem:[%s4200 + $0x50] sm:$0xf]
      %v4222 = vld [vmem:[%s4200 + $0x54] sm:$0xf]
      %v4223 = vld [vmem:[%s4200 + $0x58] sm:$0xf]
      %v4224 = vld [vmem:[%s4200 + $0x5c] sm:$0xf]
      %v4225 = vld [vmem:[%s4200 + $0x60] sm:$0xf]
      %v4226 = vld [vmem:[%s4200 + $0x64] sm:$0xf]
      %v4227 = vld [vmem:[%s4200 + $0x68] sm:$0xf]
      %v4228 = vld [vmem:[%s4200 + $0x6c] sm:$0xf]
      %v4229 = vld [vmem:[%s4200 + $0x70] sm:$0xf]
      %v4230 = vld [vmem:[%s4200 + $0x74] sm:$0xf]
      %v4231 = vld [vmem:[%s4200 + $0x78] sm:$0xf]
      %v4232 = vld [vmem:[%s4200 + $0x7c] sm:$0xf]
      %v4233 = vld [vmem:[%s4200 + $0x80] sm:$0xf]
      %v4234 = vld [vmem:[%s4200 + $0x84] sm:$0xf]
      %v4235 = vld [vmem:[%s4200 + $0x88] sm:$0xf]
      %v4236 = vld [vmem:[%s4200 + $0x8c] sm:$0xf]
      %v4237 = vld [vmem:[%s4200 + $0x90] sm:$0xf]
      %v4238 = vld [vmem:[%s4200 + $0x94] sm:$0xf]
      %v4239 = vld [vmem:[%s4200 + $0x98] sm:$0xf]
      %v4240 = vld [vmem:[%s4200 + $0x9c] sm:$0xf]
      %v4241 = vld [vmem:[%s4200 + $0xa0] sm:$0xf]
      %v4242 = vld [vmem:[%s4200 + $0xa4] sm:$0xf]
      %v4243 = vld [vmem:[%s4200 + $0xa8] sm:$0xf]
      %v4244 = vld [vmem:[%s4200 + $0xac] sm:$0xf]
      %v4245 = vld [vmem:[%s4200 + $0xb0] sm:$0xf]
      %v4246 = vld [vmem:[%s4200 + $0xb4] sm:$0xf]
      %v4247 = vld [vmem:[%s4200 + $0xb8] sm:$0xf]
      %v4248 = vld [vmem:[%s4200 + $0xbc] sm:$0xf]
      %v4249 = vld [vmem:[%s4200 + $0xc0] sm:$0xf]
      %v4250 = vld [vmem:[%s4200 + $0xc4] sm:$0xf]
      %v4251 = vld [vmem:[%s4200 + $0xc8] sm:$0xf]
      %v4252 = vld [vmem:[%s4200 + $0xcc] sm:$0xf]
      %v4253 = vld [vmem:[%s4200 + $0xd0] sm:$0xf]
      %v4254 = vld [vmem:[%s4200 + $0xd4] sm:$0xf]
      %v4255 = vld [vmem:[%s4200 + $0xd8] sm:$0xf]
      %v4256 = vld [vmem:[%s4200 + $0xdc] sm:$0xf]
      %v4257 = vld [vmem:[%s4200 + $0xe0] sm:$0xf]
      %v4258 = vld [vmem:[%s4200 + $0xe4] sm:$0xf]
      %v4259 = vld [vmem:[%s4200 + $0xe8] sm:$0xf]
      %v4260 = vld [vmem:[%s4200 + $0xec] sm:$0xf]
      %v4261 = vld [vmem:[%s4200 + $0xf0] sm:$0xf]
      %v4262 = vld [vmem:[%s4200 + $0xf4] sm:$0xf]
      %v4263 = vld [vmem:[%s4200 + $0xf8] sm:$0xf]
      %v4264 = vld [vmem:[%s4200 + $0xfc] sm:$0xf]
      %v4266 = vshrl.u32 %v3915, 16
      %v4268 = vrot.slane %v4266, 1
      %v4269 = vshll.u32 %v3915, 16
      %v4271 = vrot.slane %v4269, 2
      %v4272 = vor.u32 %v4268, %v4271
      %v4274 = vshrl.u32 %v3916, 16
      %v4276 = vrot.slane %v4274, 1
      %v4277 = vshll.u32 %v3916, 16
      %v4279 = vrot.slane %v4277, 2
      %v4280 = vor.u32 %v4276, %v4279
      %v4282 = vshrl.u32 %v3917, 16
      %v4284 = vrot.slane %v4282, 1
      %v4285 = vshll.u32 %v3917, 16
      %v4287 = vrot.slane %v4285, 2
      %v4288 = vor.u32 %v4284, %v4287
      %v4290 = vshrl.u32 %v3918, 16
      %v4292 = vrot.slane %v4290, 1
      %v4293 = vshll.u32 %v3918, 16
      %v4295 = vrot.slane %v4293, 2
      %v4296 = vor.u32 %v4292, %v4295
      %v4365 = vunpack.c.l.b16 %v4201
      %v4366 = vunpack.c.l.b16 %v4202
      %v4367 = vunpack.c.l.b16 %v4203
      %v4368 = vunpack.c.l.b16 %v4204
      %v4369 = vunpack.c.l.b16 %v4205
      %v4370 = vunpack.c.l.b16 %v4206
      %v4371 = vunpack.c.l.b16 %v4207
      %v4372 = vunpack.c.l.b16 %v4208
      %v4373 = vunpack.c.l.b16 %v4209
      %v4374 = vunpack.c.l.b16 %v4210
      %v4375 = vunpack.c.l.b16 %v4211
      %v4376 = vunpack.c.l.b16 %v4212
      %v4377 = vunpack.c.l.b16 %v4213
      %v4378 = vunpack.c.l.b16 %v4214
      %v4379 = vunpack.c.l.b16 %v4215
      %v4380 = vunpack.c.l.b16 %v4216
      %v4381 = vunpack.c.l.b16 %v4217
      %v4382 = vunpack.c.l.b16 %v4218
      %v4383 = vunpack.c.l.b16 %v4219
      %v4384 = vunpack.c.l.b16 %v4220
      %v4385 = vunpack.c.l.b16 %v4221
      %v4386 = vunpack.c.l.b16 %v4222
      %v4387 = vunpack.c.l.b16 %v4223
      %v4388 = vunpack.c.l.b16 %v4224
      %v4389 = vunpack.c.l.b16 %v4225
      %v4390 = vunpack.c.l.b16 %v4226
      %v4391 = vunpack.c.l.b16 %v4227
      %v4392 = vunpack.c.l.b16 %v4228
      %v4393 = vunpack.c.l.b16 %v4229
      %v4394 = vunpack.c.l.b16 %v4230
      %v4395 = vunpack.c.l.b16 %v4231
      %v4396 = vunpack.c.l.b16 %v4232
      %v4397 = vunpack.c.l.b16 %v4233
      %v4398 = vunpack.c.l.b16 %v4234
      %v4399 = vunpack.c.l.b16 %v4235
      %v4400 = vunpack.c.l.b16 %v4236
      %v4401 = vunpack.c.l.b16 %v4237
      %v4402 = vunpack.c.l.b16 %v4238
      %v4403 = vunpack.c.l.b16 %v4239
      %v4404 = vunpack.c.l.b16 %v4240
      %v4405 = vunpack.c.l.b16 %v4241
      %v4406 = vunpack.c.l.b16 %v4242
      %v4407 = vunpack.c.l.b16 %v4243
      %v4408 = vunpack.c.l.b16 %v4244
      %v4409 = vunpack.c.l.b16 %v4245
      %v4410 = vunpack.c.l.b16 %v4246
      %v4411 = vunpack.c.l.b16 %v4247
      %v4412 = vunpack.c.l.b16 %v4248
      %v4413 = vunpack.c.l.b16 %v4249
      %v4414 = vunpack.c.l.b16 %v4250
      %v4415 = vunpack.c.l.b16 %v4251
      %v4416 = vunpack.c.l.b16 %v4252
      %v4417 = vunpack.c.l.b16 %v4253
      %v4418 = vunpack.c.l.b16 %v4254
      %v4419 = vunpack.c.l.b16 %v4255
      %v4420 = vunpack.c.l.b16 %v4256
      %v4421 = vunpack.c.l.b16 %v4257
      %v4422 = vunpack.c.l.b16 %v4258
      %v4423 = vunpack.c.l.b16 %v4259
      %v4424 = vunpack.c.l.b16 %v4260
      %v4425 = vunpack.c.l.b16 %v4261
      %v4426 = vunpack.c.l.b16 %v4262
      %v4427 = vunpack.c.l.b16 %v4263
      %v4428 = vunpack.c.l.b16 %v4264
      %v4429 = vpack.c.b16 %v4366, %v4365
      %v4430 = vpack.c.b16 %v4368, %v4367
      %v4431 = vpack.c.b16 %v4370, %v4369
      %v4432 = vpack.c.b16 %v4372, %v4371
      %v4433 = vpack.c.b16 %v4374, %v4373
      %v4434 = vpack.c.b16 %v4376, %v4375
      %v4435 = vpack.c.b16 %v4378, %v4377
      %v4436 = vpack.c.b16 %v4380, %v4379
      %v4437 = vpack.c.b16 %v4382, %v4381
      %v4438 = vpack.c.b16 %v4384, %v4383
      %v4439 = vpack.c.b16 %v4386, %v4385
      %v4440 = vpack.c.b16 %v4388, %v4387
      %v4441 = vpack.c.b16 %v4390, %v4389
      %v4442 = vpack.c.b16 %v4392, %v4391
      %v4443 = vpack.c.b16 %v4394, %v4393
      %v4444 = vpack.c.b16 %v4396, %v4395
      %v4445 = vpack.c.b16 %v4398, %v4397
      %v4446 = vpack.c.b16 %v4400, %v4399
      %v4447 = vpack.c.b16 %v4402, %v4401
      %v4448 = vpack.c.b16 %v4404, %v4403
      %v4449 = vpack.c.b16 %v4406, %v4405
      %v4450 = vpack.c.b16 %v4408, %v4407
      %v4451 = vpack.c.b16 %v4410, %v4409
      %v4452 = vpack.c.b16 %v4412, %v4411
      %v4453 = vpack.c.b16 %v4414, %v4413
      %v4454 = vpack.c.b16 %v4416, %v4415
      %v4455 = vpack.c.b16 %v4418, %v4417
      %v4456 = vpack.c.b16 %v4420, %v4419
      %v4457 = vpack.c.b16 %v4422, %v4421
      %v4458 = vpack.c.b16 %v4424, %v4423
      %v4459 = vpack.c.b16 %v4426, %v4425
      %v4460 = vpack.c.b16 %v4428, %v4427
      %4493 = vmatprep.subr.bf16.mxu0 0
      %4494 = vmatpush1.bf16.msra.mxu0 %v4436
      %4495 = vmatprep.subr.bf16.mxu0 0
      %4496 = vmatpush1.bf16.msra.mxu0 %v4435
      %4497 = vmatprep.subr.bf16.mxu0 0
      %4498 = vmatpush1.bf16.msra.mxu0 %v4434
      %4499 = vmatprep.subr.bf16.mxu0 0
      %4500 = vmatpush1.bf16.msra.mxu0 %v4433
      %4501 = vmatprep.subr.bf16.mxu0 0
      %4502 = vmatpush1.bf16.msra.mxu0 %v4432
      %4503 = vmatprep.subr.bf16.mxu0 0
      %4504 = vmatpush1.bf16.msra.mxu0 %v4431
      %4505 = vmatprep.subr.bf16.mxu0 0
      %4506 = vmatpush1.bf16.msra.mxu0 %v4430
      %4507 = vmatprep.subr.bf16.mxu0 0
      %4508 = vmatpush1.bf16.msra.mxu0 %v4429
      %4509 = vmatprep.subr.bf16.mxu0 0
      %4510 = vmatpush2.bf16.msra.mxu0 %v4444
      %4511 = vmatprep.subr.bf16.mxu0 0
      %4512 = vmatpush2.bf16.msra.mxu0 %v4443
      %4513 = vmatprep.subr.bf16.mxu0 0
      %4514 = vmatpush2.bf16.msra.mxu0 %v4442
      %4515 = vmatprep.subr.bf16.mxu0 0
      %4516 = vmatpush2.bf16.msra.mxu0 %v4441
      %4517 = vmatprep.subr.bf16.mxu0 0
      %4518 = vmatpush2.bf16.msra.mxu0 %v4440
      %4519 = vmatprep.subr.bf16.mxu0 0
      %4520 = vmatpush2.bf16.msra.mxu0 %v4439
      %4521 = vmatprep.subr.bf16.mxu0 0
      %4522 = vmatpush2.bf16.msra.mxu0 %v4438
      %4523 = vmatprep.subr.bf16.mxu0 0
      %4524 = vmatpush2.bf16.msra.mxu0 %v4437
      %4525 = vmatprep.mubr.bf16.mxu0 %v4280
      %4526 = vmatmul.mubr.bf16.gmra.mxu0 %v4272
      %v4527 = vpop.f32.mrf.mxu0
      %v4528 = vadd.f32 0.0, %v4527
      %v4529 = vpop.f32.mrf.mxu0
      %v4530 = vpop.f32.mrf.mxu0
      %v4531 = vpop.f32.mrf.mxu0
      %4532 = vdwg.mxu0
      %4533 = vmatprep.subr.bf16.mxu0 0
      %4534 = vmatpush1.bf16.msra.mxu0 %v4452
      %4535 = vmatprep.subr.bf16.mxu0 0
      %4536 = vmatpush1.bf16.msra.mxu0 %v4451
      %4537 = vmatprep.subr.bf16.mxu0 0
      %4538 = vmatpush1.bf16.msra.mxu0 %v4450
      %4539 = vmatprep.subr.bf16.mxu0 0
      %4540 = vmatpush1.bf16.msra.mxu0 %v4449
      %4541 = vmatprep.subr.bf16.mxu0 0
      %4542 = vmatpush1.bf16.msra.mxu0 %v4448
      %4543 = vmatprep.subr.bf16.mxu0 0
      %4544 = vmatpush1.bf16.msra.mxu0 %v4447
      %4545 = vmatprep.subr.bf16.mxu0 0
      %4546 = vmatpush1.bf16.msra.mxu0 %v4446
      %4547 = vmatprep.subr.bf16.mxu0 0
      %4548 = vmatpush1.bf16.msra.mxu0 %v4445
      %4549 = vmatprep.subr.bf16.mxu0 0
      %4550 = vmatpush2.bf16.msra.mxu0 %v4460
      %4551 = vmatprep.subr.bf16.mxu0 0
      %4552 = vmatpush2.bf16.msra.mxu0 %v4459
      %4553 = vmatprep.subr.bf16.mxu0 0
      %4554 = vmatpush2.bf16.msra.mxu0 %v4458
      %4555 = vmatprep.subr.bf16.mxu0 0
      %4556 = vmatpush2.bf16.msra.mxu0 %v4457
      %4557 = vmatprep.subr.bf16.mxu0 0
      %4558 = vmatpush2.bf16.msra.mxu0 %v4456
      %4559 = vmatprep.subr.bf16.mxu0 0
      %4560 = vmatpush2.bf16.msra.mxu0 %v4455
      %4561 = vmatprep.subr.bf16.mxu0 0
      %4562 = vmatpush2.bf16.msra.mxu0 %v4454
      %4563 = vmatprep.subr.bf16.mxu0 0
      %4564 = vmatpush2.bf16.msra.mxu0 %v4453
      %4565 = vmatprep.mubr.bf16.mxu0 %v4296
      %4566 = vmatmul.mubr.bf16.gmra.mxu0 %v4288
      %v4567 = vpop.f32.mrf.mxu0
      %v4568 = vadd.f32 %v4528, %v4567
      %v4569 = vpop.f32.mrf.mxu0
      %v4570 = vpop.f32.mrf.mxu0
      %v4571 = vpop.f32.mrf.mxu0
      %4572 = vdwg.mxu0
      %v4573 = vadd.f32 %v4199, %v4568
      %v4574 = vld [vmem:[%s10] sm:$0x1]
      %v4576 = vlaneseq
      %v4577 = vshrl.u32 %v4576, 7
      %v4578 = vsub.s32 0, %v4577
      %v4579 = vrot.slane %v4574, %v4578
      %v4581 = vadd.f32 %v4573, %v4579
      %vm4582 = vcmask 36864
      %4583 = vst.msk [vmem:[%s384] sm:$0x1f] %vm4582, %v4581
      %p4584 = scmp.lt.s32.totalorder %s22, 1
      %s4585 = scalar_select %p4584, %s22, 1
      %s4586 = smul.addr %s4585, 8
      %s4587 = scalar_lea.vmem %s11, %s4586
      // Predicated region
      $region65: #{_forward.1} parent=63 // pred_check
        %p4588 = pneg %p276
      $region66: #{_forward.1} parent=63 // pred_check_branch
        %4590 = sbr.rel (%p4588) target = $region68
      $region67: #{_forward.1} parent=63 // pred_region
        _
      $region68: #{_forward.1} parent=63 // pred_fallthru
        _
    $region64: #{_forward.1} parent=5 // pred_fallthru
      _
    %p4591 = scmp.le.s32.totalorder 2, %s17
    // Predicated region
    $region69: #{_forward.1} parent=5 // pred_check
      %p4592 = pneg %p4591
    $region70: #{_forward.1} parent=5 // pred_check_branch
      %4594 = sbr.rel (%p4592) target = $region72
    $region71: #{_forward.1} parent=5 // pred_region
      %s4595 = ssub.s32 %s17, 2
      // Predicated region
      $region73: #{_forward.1} parent=71 // pred_check
        %p4596 = pneg %p282
      $region74: #{_forward.1} parent=71 // pred_check_branch
        %4598 = sbr.rel (%p4596) target = $region76
      $region75: #{_forward.1} parent=71 // pred_region
        %p4599 = scmp.lt.s32.totalorder %s23, 1
        %s4600 = scalar_select %p4599, %s23, 1
        %s4601 = smul.addr %s4600, 8
        %s4602 = scalar_lea.vmem %s11, %s4601
      $region76: #{_forward.1} parent=71 // pred_fallthru
        _
    $region72: #{_forward.1} parent=5 // pred_fallthru
      _
  $region6: #{_forward.1} parent=0 // loop_footer
    %s21 = sadd.s32 1, %s17
  $region7: #{_forward.1} parent=0 // loop_footer_branch
    %16 = sbr.rel target = $region3
  $region8: #{_forward.1} parent=0 // loop_exit
    _

</llo_original>
